<compile_context>
chip_gen: v7x
topology: tpu7x:2x2x1
jax: 0.10.0
libtpu: 0.0.40
codegen_flags: <defaults>
</compile_context>

<pallas_src>
import functools

import jax
import jax.numpy as jnp
from jax import lax
from jax.experimental import pallas as pl
from jax.experimental.pallas import tpu as pltpu


def _round_up(x, m):
    return (x + m - 1) // m * m


# Planes (one padded batch element, bf16, channel-padded) at or below this stay
# resident in VMEM (one DMA per batch element); above it the input is streamed
# per row-slab so VMEM stays O(row tile) even at production resolutions.
_RESIDENT_PLANE_LIMIT = 4 * 1024 * 1024


# -----------------------------------------------------------------------------
# Shared kernel pieces
# -----------------------------------------------------------------------------
def _tap_matmuls(patch_fn, w_ref, b_ref, *, K, TH, OW, Cin_p, Cout_p):
    # f32 accumulator initialised with the broadcast bias (saves a VPU pass).
    acc = jnp.broadcast_to(b_ref[...], (TH * OW, Cout_p)).astype(jnp.float32)
    for kh in range(K):
        for kw in range(K):
            patch = patch_fn(kh, kw)                       # (TH, OW, Cin_p) bf16
            acc = acc + jnp.dot(patch.reshape(TH * OW, Cin_p), w_ref[kh, kw],
                                preferred_element_type=jnp.float32)
    return acc


def _store(acc, o_ref, act, TH, OW, Cout_p):
    if act == "relu":
        acc = jnp.maximum(acc, 0.0)
    elif act == "sigmoid":
        acc = 1.0 / (1.0 + jnp.exp(-acc))
    o_ref[...] = acc.reshape(1, TH, OW, Cout_p).astype(o_ref.dtype)


def _conv_kernel_resident(x_ref, w_ref, b_ref, o_ref, *,
                          K, TH, OW, Cin_p, Cout_p, act):
    # x_ref: (1, IH, IW, Cin_p) bf16, resident for the whole batch element.
    r = pl.program_id(1)
    row0 = pl.multiple_of(r * TH, TH)
    x = x_ref[0, pl.ds(row0, TH + K - 1), :, :]            # (TH+K-1, IW, Cin_p)

    def patch(kh, kw):
        return x[kh:kh + TH, kw:kw + OW, :]

    acc = _tap_matmuls(patch, w_ref, b_ref,
                       K=K, TH=TH, OW=OW, Cin_p=Cin_p, Cout_p=Cout_p)
    _store(acc, o_ref, act, TH, OW, Cout_p)


def _conv_kernel_stream(x_hbm, w_ref, b_ref, o_ref, slab_ref, sem_ref, *,
                        K, TH, OW, Cin_p, Cout_p, act):
    # x_hbm: full (N, IH, IW, Cin_p) left in HBM; row-slabs (with halo) are
    # streamed through a double-buffered VMEM scratch.
    n = pl.program_id(0)
    r = pl.program_id(1)
    nrows = pl.num_programs(1)
    span = TH + K - 1

    def fetch(row_tile, slot):
        pltpu.make_async_copy(
            x_hbm.at[n, pl.ds(row_tile * TH, span)],
            slab_ref.at[slot],
            sem_ref.at[slot],
        ).start()

    @pl.when(r == 0)
    def _():
        fetch(0, 0)                                         # prime slot 0

    @pl.when(r + 1 < nrows)
    def _():
        fetch(r + 1, (r + 1) % 2)                           # prefetch next slab

    slot = r % 2
    pltpu.make_async_copy(
        x_hbm.at[n, pl.ds(0, span)], slab_ref.at[slot], sem_ref.at[slot]
    ).wait()

    def patch(kh, kw):                                      # slice taps from the ref
        return slab_ref[slot, kh:kh + TH, kw:kw + OW, :]

    acc = _tap_matmuls(patch, w_ref, b_ref,
                       K=K, TH=TH, OW=OW, Cin_p=Cin_p, Cout_p=Cout_p)
    _store(acc, o_ref, act, TH, OW, Cout_p)


# -----------------------------------------------------------------------------
# Generic Pallas conv wrapper: valid KxK conv (stride 1) on a pre-padded input.
# -----------------------------------------------------------------------------
def pallas_conv_valid(x_pre, w, b, *, activation=None, out_dtype=jnp.bfloat16):
    """Valid KxK stride-1 conv + bias + fused activation.

    x_pre: (N, OH+K-1, OW+K-1, Cx)   (spatially pre-padded)
    w:     (K, K, Cw, Cout) with Cw <= Cx (extra input channels get zero
           weights, so channel-padded activations can be fed straight through).
    b:     (Cout,)
    Returns (N, OH, OW, Cout_p) with Cout_p = round_up(Cout, 8); trailing
    channels equal act(0) (0 for relu/None).
    """
    N, IH, IW, Cx = x_pre.shape
    K = w.shape[0]
    Cw, Cout = w.shape[2], w.shape[3]
    assert Cw <= Cx
    OH, OW = IH - K + 1, IW - K + 1

    Cin_p = _round_up(Cx, 16)          # bf16 sublane packing
    Cout_p = _round_up(Cout, 8)        # small heads stay narrow; 128s stay dense

    x_p = x_pre.astype(jnp.bfloat16)
    if Cin_p != Cx:
        x_p = jnp.pad(x_p, ((0, 0), (0, 0), (0, 0), (0, Cin_p - Cx)))
    w_p = jnp.pad(w.astype(jnp.bfloat16),
                  ((0, 0), (0, 0), (0, Cin_p - Cw), (0, Cout_p - Cout)))
    b_p = jnp.pad(b.astype(jnp.float32), (0, Cout_p - Cout)).reshape(1, Cout_p)

    # Row tile: matmul M-dim ~256, capped to 128 for wide-channel layers so the
    # f32 accumulator / per-tap patch stay within the register file.
    m_target = 256 if max(Cin_p, Cout_p) <= 128 else 128
    TH = max(1, min(OH, m_target // max(OW, 1)))
    while OH % TH:
        TH -= 1
    R = OH // TH
    span = TH + K - 1

    plane_bytes = IH * IW * Cin_p * 2
    w_bytes = 2 * w_p.size * 2
    out_blk_bytes = 2 * TH * OW * Cout_p * jnp.dtype(out_dtype).itemsize
    stream = plane_bytes > _RESIDENT_PLANE_LIMIT

    if stream:
        kernel = functools.partial(_conv_kernel_stream, K=K, TH=TH, OW=OW,
                                   Cin_p=Cin_p, Cout_p=Cout_p, act=activation)
        in_specs = [
            pl.BlockSpec(memory_space=pl.ANY),                       # stays in HBM
            pl.BlockSpec((K, K, Cin_p, Cout_p), lambda n, r: (0, 0, 0, 0)),
            pl.BlockSpec((1, Cout_p), lambda n, r: (0, 0)),
        ]
        scratch = (pltpu.VMEM((2, span, IW, Cin_p), jnp.bfloat16),
                   pltpu.SemaphoreType.DMA((2,)))
        dims = ("parallel", "arbitrary")    # row axis carries the DMA chain
        in_bytes = 2 * span * IW * Cin_p * 2
    else:
        kernel = functools.partial(_conv_kernel_resident, K=K, TH=TH, OW=OW,
                                   Cin_p=Cin_p, Cout_p=Cout_p, act=activation)
        in_specs = [
            pl.BlockSpec((1, IH, IW, Cin_p), lambda n, r: (n, 0, 0, 0)),
            pl.BlockSpec((K, K, Cin_p, Cout_p), lambda n, r: (0, 0, 0, 0)),
            pl.BlockSpec((1, Cout_p), lambda n, r: (0, 0)),
        ]
        scratch = ()
        dims = ("parallel", "parallel")
        in_bytes = 2 * plane_bytes

    vmem_bytes = in_bytes + w_bytes + out_blk_bytes + 2 * b_p.size * 4 + (4 << 20)
    vmem_bytes = int(min(max(vmem_bytes, 16 << 20), 64 << 20))

    return pl.pallas_call(
        kernel,
        out_shape=jax.ShapeDtypeStruct((N, OH, OW, Cout_p), out_dtype),
        grid_spec=pltpu.PrefetchScalarGridSpec(
            num_scalar_prefetch=0,
            grid=(N, R),
            in_specs=in_specs,
            out_specs=pl.BlockSpec((1, TH, OW, Cout_p), lambda n, r: (n, r, 0, 0)),
            scratch_shapes=scratch,
        ),
        compiler_params=pltpu.CompilerParams(
            dimension_semantics=dims, vmem_limit_bytes=vmem_bytes),
    )(x_p, w_p, b_p)


def conv_same(x, w, b, *, activation=None, out_dtype=jnp.bfloat16):
    """'same' KxK stride-1 conv (matches nn.Conv2d(..., padding=(K-1)//2))."""
    K = w.shape[0]
    pad = (K - 1) // 2
    x = x.astype(jnp.bfloat16)
    if pad:
        x = jnp.pad(x, ((0, 0), (pad, pad), (pad, pad), (0, 0)))
    return pallas_conv_valid(x, w, b, activation=activation, out_dtype=out_dtype)


# -----------------------------------------------------------------------------
# Layer-fusion helpers (wrapper-level weight rearrangement; constant-folded).
# -----------------------------------------------------------------------------
def _space_to_depth2(x):
    n, h, w, c = x.shape
    x = x.reshape(n, h // 2, 2, w // 2, 2, c)
    x = jnp.transpose(x, (0, 1, 3, 2, 4, 5))
    return x.reshape(n, h // 2, w // 2, 4 * c)


def _fuse_stride2_block(p_main, p_down):
    """3x3 stride-2 conv + 1x1 stride-2 downsample, as one valid 2x2 conv over
    the space-to-depth input (channel order: (row_parity, col_parity, c))."""
    wm, bm = p_main["w"], p_main["b"]                      # (3,3,Cin,Cout)
    wd = p_down["w"]                                       # (1,1,Cin,Cout), no bias
    cin, cout = wm.shape[2], wm.shape[3]
    w2 = jnp.zeros((2, 2, 4 * cin, cout), jnp.float32)
    for kh in range(3):
        for kw in range(3):
            a, ph, bb, pw = kh // 2, kh % 2, kw // 2, kw % 2
            c0 = (ph * 2 + pw) * cin
            w2 = w2.at[a, bb, c0:c0 + cin, :].set(wm[kh, kw])
    # downsample reads x_pad[2ho+1, 2wo+1] == phase (1,1) at tap (0,0)
    w2 = w2.at[0, 0, 3 * cin:4 * cin, :].add(wd[0, 0])
    return w2, bm


def _basic_block_pallas(x, p_main, p_down):
    xp = jnp.pad(x.astype(jnp.bfloat16), ((0, 0), (1, 1), (1, 1), (0, 0)))
    xs = _space_to_depth2(xp)
    w2, b2 = _fuse_stride2_block(p_main, p_down)
    return pallas_conv_valid(xs, w2, b2, activation="relu")


def _fuse_pnet_stage(p3, p5, p7):
    """Three parallel same-convs (3/5/7 taps) over one input -> one 7x7 conv
    with zero-embedded kernels and concatenated outputs."""
    w3, w5, w7 = p3["w"], p5["w"], p7["w"]
    cin = w3.shape[2]
    c3, c5, c7 = w3.shape[3], w5.shape[3], w7.shape[3]
    wf = jnp.zeros((7, 7, cin, c3 + c5 + c7), jnp.float32)
    wf = wf.at[2:5, 2:5, :, :c3].set(w3)
    wf = wf.at[1:6, 1:6, :, c3:c3 + c5].set(w5)
    wf = wf.at[:, :, :, c3 + c5:].set(w7)
    bf = jnp.concatenate([p3["b"], p5["b"], p7["b"]])
    return wf, bf


def _pnet_pallas(p, x):
    w1, b1 = _fuse_pnet_stage(p["pnet_c1"], p["pnet_c2"], p["pnet_c3"])
    y = conv_same(x, w1, b1, activation="relu")            # (N,H,W,32), 30 real
    w2, b2 = _fuse_pnet_stage(p["pnet_c4"], p["pnet_c5"], p["pnet_c6"])
    return conv_same(y, w2, b2, activation="relu")         # (N,H,W,32), 30 real


def _upsample2(x):   # nn.Upsample(scale_factor=(2,2)), default nearest
    return jnp.repeat(jnp.repeat(x, 2, axis=1), 2, axis=2)


def _scse_pallas(p, name, x):
    pooled = jnp.mean(x.astype(jnp.float32), axis=(1, 2))            # (N, C)
    fc1, fc2 = p[name + "_fc1"], p[name + "_fc2"]
    h = jnp.maximum(pooled @ fc1["w"] + fc1["b"], 0.0)
    chn = jax.nn.sigmoid(h @ fc2["w"] + fc2["b"])                    # (N, C)
    spa = conv_same(x, p[name + "_spa"]["w"], jnp.zeros((1,), jnp.float32),
                    activation="sigmoid", out_dtype=jnp.float32)[..., :1]
    xf = x.astype(jnp.float32)
    return (xf * chn[:, None, None, :] + xf * spa).astype(jnp.bfloat16)


# -----------------------------------------------------------------------------
# Pallas ENet forward (NHWC end-to-end; bf16 activations between layers).
# -----------------------------------------------------------------------------
def enet_forward_pallas(p, source, fake, mask):
    pn = _pnet_pallas(p, source)                                     # 32 ch (30 real)
    inputs = jnp.concatenate([fake.astype(jnp.bfloat16), pn], -1)    # 35 ch (33 real)
    c1 = conv_same(inputs, p["conv1"]["w"], p["conv1"]["b"], activation="relu")
    c2 = _basic_block_pallas(c1, p["conv2_main"], p["conv2_down"])
    c3 = _basic_block_pallas(c2, p["conv3_main"], p["conv3_down"])
    c4 = _basic_block_pallas(c3, p["conv4_main"], p["conv4_down"])
    c5 = _basic_block_pallas(c4, p["conv5_main"], p["conv5_down"])

    def up_merge(x_small, skip, up_name):
        u = conv_same(_upsample2(x_small), p[up_name]["w"], p[up_name]["b"],
                      activation="relu")
        return jnp.concatenate([skip, u], axis=-1)

    c6 = _scse_pallas(p, "scse6", conv_same(up_merge(c5, c4, "up6"),
                                            p["conv6"]["w"], p["conv6"]["b"],
                                            activation="relu"))
    c7 = _scse_pallas(p, "scse7", conv_same(up_merge(c6, c3, "up7"),
                                            p["conv7"]["w"], p["conv7"]["b"],
                                            activation="relu"))
    c8 = _scse_pallas(p, "scse8", conv_same(up_merge(c7, c2, "up8"),
                                            p["conv8"]["w"], p["conv8"]["b"],
                                            activation="relu"))
    u9 = conv_same(_upsample2(c8), p["up9"]["w"], p["up9"]["b"], activation="relu")
    m9 = jnp.concatenate([c1, u9, inputs], axis=-1)                  # 97 real, trailing zeros
    c9 = _scse_pallas(p, "scse9", conv_same(m9, p["conv9"]["w"], p["conv9"]["b"],
                                            activation="relu"))

    res = conv_same(c9, p["residual"]["w"], p["residual"]["b"],
                    activation="sigmoid", out_dtype=jnp.float32)[..., :3]
    m = mask.astype(jnp.float32)
    return res * m + fake.astype(jnp.float32) * (1.0 - m)


# -----------------------------------------------------------------------------
# Pure-XLA reference (bf16 operands / bf16 activations, same rounding points).
# -----------------------------------------------------------------------------
def ref_conv(x, w, b, *, stride=1, activation=None, out_dtype=jnp.bfloat16):
    K = w.shape[0]
    pad = (K - 1) // 2
    out = lax.conv_general_dilated(
        x.astype(jnp.bfloat16), w.astype(jnp.bfloat16),
        window_strides=(stride, stride),
        padding=[(pad, pad), (pad, pad)],
        dimension_numbers=("NHWC", "HWIO", "NHWC"),
        preferred_element_type=jnp.float32,
    ) + b.astype(jnp.float32)
    if activation == "relu":
        out = jnp.maximum(out, 0.0)
    elif activation == "sigmoid":
        out = jax.nn.sigmoid(out)
    return out.astype(out_dtype)


def enet_forward_reference(p, source, fake, mask):
    def conv(name, x, **kw):
        c = p[name]
        return ref_conv(x, c["w"], c["b"], **kw)

    def block(name, x):
        main = ref_conv(x, p[name + "_main"]["w"], p[name + "_main"]["b"],
                        stride=2, activation=None, out_dtype=jnp.float32)
        down = ref_conv(x, p[name + "_down"]["w"], p[name + "_down"]["b"],
                        stride=2, activation=None, out_dtype=jnp.float32)
        return jnp.maximum(main + down, 0.0).astype(jnp.bfloat16)

    def scse(name, x):
        pooled = jnp.mean(x.astype(jnp.float32), axis=(1, 2))
        fc1, fc2 = p[name + "_fc1"], p[name + "_fc2"]
        h = jnp.maximum(pooled @ fc1["w"] + fc1["b"], 0.0)
        chn = jax.nn.sigmoid(h @ fc2["w"] + fc2["b"])
        spa = ref_conv(x, p[name + "_spa"]["w"], jnp.zeros((1,), jnp.float32),
                       activation="sigmoid", out_dtype=jnp.float32)
        xf = x.astype(jnp.float32)
        return (xf * chn[:, None, None, :] + xf * spa).astype(jnp.bfloat16)

    x1 = conv("pnet_c1", source, activation="relu")
    x2 = conv("pnet_c2", source, activation="relu")
    x3 = conv("pnet_c3", source, activation="relu")
    x4 = jnp.concatenate([x1, x2, x3], -1)
    y1 = conv("pnet_c4", x4, activation="relu")
    y2 = conv("pnet_c5", x4, activation="relu")
    y3 = conv("pnet_c6", x4, activation="relu")
    src_fea = jnp.concatenate([y1, y2, y3], -1)

    inputs = jnp.concatenate([fake, src_fea], -1)
    c1 = conv("conv1", inputs, activation="relu")
    c2 = block("conv2", c1)
    c3 = block("conv3", c2)
    c4 = block("conv4", c3)
    c5 = block("conv5", c4)

    u6 = conv("up6", _upsample2(c5), activation="relu")
    c6 = scse("scse6", conv("conv6", jnp.concatenate([c4, u6], -1), activation="relu"))
    u7 = conv("up7", _upsample2(c6), activation="relu")
    c7 = scse("scse7", conv("conv7", jnp.concatenate([c3, u7], -1), activation="relu"))
    u8 = conv("up8", _upsample2(c7), activation="relu")
    c8 = scse("scse8", conv("conv8", jnp.concatenate([c2, u8], -1), activation="relu"))
    u9 = conv("up9", _upsample2(c8), activation="relu")
    c9 = scse("scse9", conv("conv9", jnp.concatenate([c1, u9, inputs], -1),
                            activation="relu"))

    res = conv("residual", c9, activation="sigmoid", out_dtype=jnp.float32)
    m = mask.astype(jnp.float32)
    return res * m + fake.astype(jnp.float32) * (1.0 - m)


# -----------------------------------------------------------------------------
# Parameters
# -----------------------------------------------------------------------------
def _conv_params(key, k, cin, cout, use_bias=True):
    kw_, kb_ = jax.random.split(key)
    fan_in = cin * k * k
    w = jax.random.normal(kw_, (k, k, cin, cout), jnp.float32) * jnp.sqrt(2.0 / fan_in)
    b = (jax.random.normal(kb_, (cout,), jnp.float32) * 0.01
         if use_bias else jnp.zeros((cout,), jnp.float32))
    return {"w": w, "b": b}


def _linear_params(key, cin, cout):
    kw_, _ = jax.random.split(key)
    w = jax.random.normal(kw_, (cin, cout), jnp.float32) * jnp.sqrt(1.0 / cin)
    return {"w": w, "b": jnp.zeros((cout,), jnp.float32)}


def init_enet_params(key):
    keys = iter(jax.random.split(key, 64))
    p = {}
    p["pnet_c1"] = _conv_params(next(keys), 3, 3, 15)
    p["pnet_c2"] = _conv_params(next(keys), 5, 3, 10)
    p["pnet_c3"] = _conv_params(next(keys), 7, 3, 5)
    p["pnet_c4"] = _conv_params(next(keys), 3, 30, 15)
    p["pnet_c5"] = _conv_params(next(keys), 5, 30, 10)
    p["pnet_c6"] = _conv_params(next(keys), 7, 30, 5)
    p["conv1"] = _conv_params(next(keys), 3, 33, 32)
    for name, cin, cout in [("conv2", 32, 32), ("conv3", 32, 64),
                            ("conv4", 64, 128), ("conv5", 128, 256)]:
        p[name + "_main"] = _conv_params(next(keys), 3, cin, cout)
        p[name + "_down"] = _conv_params(next(keys), 1, cin, cout, use_bias=False)
    p["up6"] = _conv_params(next(keys), 3, 256, 128)
    p["conv6"] = _conv_params(next(keys), 3, 256, 128)
    p["up7"] = _conv_params(next(keys), 3, 128, 64)
    p["conv7"] = _conv_params(next(keys), 3, 128, 64)
    p["up8"] = _conv_params(next(keys), 3, 64, 32)
    p["conv8"] = _conv_params(next(keys), 3, 64, 32)
    p["up9"] = _conv_params(next(keys), 3, 32, 32)
    p["conv9"] = _conv_params(next(keys), 3, 97, 32)
    for name, ch in [("scse6", 128), ("scse7", 64), ("scse8", 32), ("scse9", 32)]:
        hidden = ch // 16
        p[name + "_fc1"] = _linear_params(next(keys), ch, hidden)
        p[name + "_fc2"] = _linear_params(next(keys), hidden, ch)
        p[name + "_spa"] = _conv_params(next(keys), 1, ch, 1, use_bias=False)
    p["residual"] = _conv_params(next(keys), 1, 32, 3)
    return p


# -----------------------------------------------------------------------------
# Demo / verification
# -----------------------------------------------------------------------------
if __name__ == "__main__":
    key = jax.random.PRNGKey(0)
    kp, ks, kf, km, k1, k2, k3 = jax.random.split(key, 7)

    N, H, W = 2, 32, 32                     # spatial must be divisible by 16
    params = init_enet_params(kp)

    # Module convention is NCHW; transpose only at the model boundary.
    source = jax.random.normal(ks, (N, 3, H, W), jnp.float32)
    fake = jax.random.normal(kf, (N, 3, H, W), jnp.float32)
    mask = jax.random.uniform(km, (N, 1, H, W), jnp.float32)

    def to_nhwc(t):
        return jnp.transpose(t, (0, 2, 3, 1))

    def to_nchw(t):
        return jnp.transpose(t, (0, 3, 1, 2))

    # --- tight unit check of the Pallas conv kernel (f32 outputs: the only
    #     difference vs the XLA conv is f32 accumulation order) ---------------
    xk = jax.random.normal(k1, (2, 16, 16, 20), jnp.float32)
    wk = jax.random.normal(k2, (3, 3, 20, 40), jnp.float32) * 0.1
    bk = jax.random.normal(k3, (40,), jnp.float32) * 0.1
    got = jax.jit(lambda a, b, c: conv_same(a, b, c, activation="relu",
                                            out_dtype=jnp.float32))(xk, wk, bk)
    got = jax.block_until_ready(got)[..., :40]
    want = ref_conv(xk, wk, bk, activation="relu", out_dtype=jnp.float32)
    unit_err = float(jnp.max(jnp.abs(got - want)))
    assert unit_err < 5e-3, f"conv kernel mismatch vs XLA conv: {unit_err}"

    @jax.jit
    def run_pallas(src, fk, msk):
        return to_nchw(enet_forward_pallas(params, to_nhwc(src), to_nhwc(fk),
                                           to_nhwc(msk)))

    @jax.jit
    def run_reference(src, fk, msk):
        return to_nchw(enet_forward_reference(params, to_nhwc(src), to_nhwc(fk),
                                              to_nhwc(msk)))

    out = jax.block_until_ready(run_pallas(source, fake, mask))
    ref = jax.block_until_ready(run_reference(source, fake, mask))

    assert out.shape == (N, 3, H, W)
    # Both pipelines use bf16 MXU operands and bf16 inter-layer activations, so
    # this compares two bf16 pipelines; the bound covers ~25 layers of
    # accumulated bf16 rounding divergence (not f32 bit fidelity).
    max_err = float(jnp.max(jnp.abs(out - ref)))
    assert max_err < 1e-1, f"mismatch vs reference ENet: max abs err {max_err}"

    print("KERNEL_OK")
</pallas_src>

<mosaic_0001>
module attributes {stable_mosaic.version = 11 : i64} {
  func.func @_conv_kernel_resident(%arg0: i32, %arg1: i32, %arg2: memref<1x18x18x32xbf16, #tpu.memory_space<vmem>>, %arg3: memref<3x3x32x40xbf16, #tpu.memory_space<vmem>>, %arg4: memref<1x40xf32, #tpu.memory_space<vmem>>, %arg5: memref<1x16x16x40xf32, #tpu.memory_space<vmem>>) attributes {dimension_semantics = [#tpu.dimension_semantics<parallel>, #tpu.dimension_semantics<parallel>], iteration_bounds = array<i64: 2, 1>, scalar_prefetch = 0 : i64, scratch_operands = 0 : i64, tpu.core_type = #tpu.core_type<tc>, window_params = [{transform_indices = @transform_0, window_bounds = array<i64: 1, 18, 18, 32>}, {pipeline_mode = #tpu.pipeline_mode<synchronous>, transform_indices = @transform_1, window_bounds = array<i64: 3, 3, 32, 40>}, {pipeline_mode = #tpu.pipeline_mode<synchronous>, transform_indices = @transform_2, window_bounds = array<i64: 1, 40>}, {transform_indices = @transform_3, window_bounds = array<i64: 1, 16, 16, 40>}]} {
    %c16_i32 = arith.constant 16 : i32
    %0 = arith.muli %arg1, %c16_i32 : i32
    %1 = tpu.assume_multiple %0, 16 : i32
    %c0 = arith.constant 0 : index
    %2 = arith.index_cast %1 : i32 to index
    %c0_0 = arith.constant 0 : index
    %c0_1 = arith.constant 0 : index
    %3 = vector.load %arg2[%c0, %2, %c0_0, %c0_1] : memref<1x18x18x32xbf16, #tpu.memory_space<vmem>>, vector<1x18x18x32xbf16>
    %4 = vector.shape_cast %3 : vector<1x18x18x32xbf16> to vector<18x18x32xbf16>
    %c0_2 = arith.constant 0 : index
    %c0_3 = arith.constant 0 : index
    %5 = vector.load %arg4[%c0_2, %c0_3] : memref<1x40xf32, #tpu.memory_space<vmem>>, vector<1x40xf32>
    %6 = vector.shape_cast %5 : vector<1x40xf32> to vector<1x40xf32>
    %7 = vector.broadcast %6 : vector<1x40xf32> to vector<256x40xf32>
    %8 = vector.extract_strided_slice %4 {offsets = [0, 0, 0], sizes = [16, 16, 32], strides = [1, 1, 1]} : vector<18x18x32xbf16> to vector<16x16x32xbf16>
    %9 = vector.shape_cast %8 : vector<16x16x32xbf16> to vector<256x32xbf16>
    %c0_4 = arith.constant 0 : index
    %c0_5 = arith.constant 0 : index
    %c0_6 = arith.constant 0 : index
    %c0_7 = arith.constant 0 : index
    %10 = vector.load %arg3[%c0_4, %c0_5, %c0_6, %c0_7] : memref<3x3x32x40xbf16, #tpu.memory_space<vmem>>, vector<1x1x32x40xbf16>
    %11 = vector.shape_cast %10 : vector<1x1x32x40xbf16> to vector<32x40xbf16>
    %cst = arith.constant dense<0.000000e+00> : vector<256x40xf32>
    %12 = tpu.matmul %9, %11, %cst {dimension_numbers = #tpu.dot_dimension_numbers<[1], [0], [0], [1], [0, 0, 1, 1], [], []>} : vector<256x32xbf16>, vector<32x40xbf16>, vector<256x40xf32> -> vector<256x40xf32>
    %13 = arith.addf %7, %12 : vector<256x40xf32>
    %14 = vector.extract_strided_slice %4 {offsets = [0, 1, 0], sizes = [16, 16, 32], strides = [1, 1, 1]} : vector<18x18x32xbf16> to vector<16x16x32xbf16>
    %15 = vector.shape_cast %14 : vector<16x16x32xbf16> to vector<256x32xbf16>
    %c0_8 = arith.constant 0 : index
    %c1 = arith.constant 1 : index
    %c0_9 = arith.constant 0 : index
    %c0_10 = arith.constant 0 : index
    %16 = vector.load %arg3[%c0_8, %c1, %c0_9, %c0_10] : memref<3x3x32x40xbf16, #tpu.memory_space<vmem>>, vector<1x1x32x40xbf16>
    %17 = vector.shape_cast %16 : vector<1x1x32x40xbf16> to vector<32x40xbf16>
    %cst_11 = arith.constant dense<0.000000e+00> : vector<256x40xf32>
    %18 = tpu.matmul %15, %17, %cst_11 {dimension_numbers = #tpu.dot_dimension_numbers<[1], [0], [0], [1], [0, 0, 1, 1], [], []>} : vector<256x32xbf16>, vector<32x40xbf16>, vector<256x40xf32> -> vector<256x40xf32>
    %19 = arith.addf %13, %18 : vector<256x40xf32>
    %20 = vector.extract_strided_slice %4 {offsets = [0, 2, 0], sizes = [16, 16, 32], strides = [1, 1, 1]} : vector<18x18x32xbf16> to vector<16x16x32xbf16>
    %21 = vector.shape_cast %20 : vector<16x16x32xbf16> to vector<256x32xbf16>
    %c0_12 = arith.constant 0 : index
    %c2 = arith.constant 2 : index
    %c0_13 = arith.constant 0 : index
    %c0_14 = arith.constant 0 : index
    %22 = vector.load %arg3[%c0_12, %c2, %c0_13, %c0_14] : memref<3x3x32x40xbf16, #tpu.memory_space<vmem>>, vector<1x1x32x40xbf16>
    %23 = vector.shape_cast %22 : vector<1x1x32x40xbf16> to vector<32x40xbf16>
    %cst_15 = arith.constant dense<0.000000e+00> : vector<256x40xf32>
    %24 = tpu.matmul %21, %23, %cst_15 {dimension_numbers = #tpu.dot_dimension_numbers<[1], [0], [0], [1], [0, 0, 1, 1], [], []>} : vector<256x32xbf16>, vector<32x40xbf16>, vector<256x40xf32> -> vector<256x40xf32>
    %25 = arith.addf %19, %24 : vector<256x40xf32>
    %26 = vector.extract_strided_slice %4 {offsets = [1, 0, 0], sizes = [16, 16, 32], strides = [1, 1, 1]} : vector<18x18x32xbf16> to vector<16x16x32xbf16>
    %27 = vector.shape_cast %26 : vector<16x16x32xbf16> to vector<256x32xbf16>
    %c1_16 = arith.constant 1 : index
    %c0_17 = arith.constant 0 : index
    %c0_18 = arith.constant 0 : index
    %c0_19 = arith.constant 0 : index
    %28 = vector.load %arg3[%c1_16, %c0_17, %c0_18, %c0_19] : memref<3x3x32x40xbf16, #tpu.memory_space<vmem>>, vector<1x1x32x40xbf16>
    %29 = vector.shape_cast %28 : vector<1x1x32x40xbf16> to vector<32x40xbf16>
    %cst_20 = arith.constant dense<0.000000e+00> : vector<256x40xf32>
    %30 = tpu.matmul %27, %29, %cst_20 {dimension_numbers = #tpu.dot_dimension_numbers<[1], [0], [0], [1], [0, 0, 1, 1], [], []>} : vector<256x32xbf16>, vector<32x40xbf16>, vector<256x40xf32> -> vector<256x40xf32>
    %31 = arith.addf %25, %30 : vector<256x40xf32>
    %32 = vector.extract_strided_slice %4 {offsets = [1, 1, 0], sizes = [16, 16, 32], strides = [1, 1, 1]} : vector<18x18x32xbf16> to vector<16x16x32xbf16>
    %33 = vector.shape_cast %32 : vector<16x16x32xbf16> to vector<256x32xbf16>
    %c1_21 = arith.constant 1 : index
    %c1_22 = arith.constant 1 : index
    %c0_23 = arith.constant 0 : index
    %c0_24 = arith.constant 0 : index
    %34 = vector.load %arg3[%c1_21, %c1_22, %c0_23, %c0_24] : memref<3x3x32x40xbf16, #tpu.memory_space<vmem>>, vector<1x1x32x40xbf16>
    %35 = vector.shape_cast %34 : vector<1x1x32x40xbf16> to vector<32x40xbf16>
    %cst_25 = arith.constant dense<0.000000e+00> : vector<256x40xf32>
    %36 = tpu.matmul %33, %35, %cst_25 {dimension_numbers = #tpu.dot_dimension_numbers<[1], [0], [0], [1], [0, 0, 1, 1], [], []>} : vector<256x32xbf16>, vector<32x40xbf16>, vector<256x40xf32> -> vector<256x40xf32>
    %37 = arith.addf %31, %36 : vector<256x40xf32>
    %38 = vector.extract_strided_slice %4 {offsets = [1, 2, 0], sizes = [16, 16, 32], strides = [1, 1, 1]} : vector<18x18x32xbf16> to vector<16x16x32xbf16>
    %39 = vector.shape_cast %38 : vector<16x16x32xbf16> to vector<256x32xbf16>
    %c1_26 = arith.constant 1 : index
    %c2_27 = arith.constant 2 : index
    %c0_28 = arith.constant 0 : index
    %c0_29 = arith.constant 0 : index
    %40 = vector.load %arg3[%c1_26, %c2_27, %c0_28, %c0_29] : memref<3x3x32x40xbf16, #tpu.memory_space<vmem>>, vector<1x1x32x40xbf16>
    %41 = vector.shape_cast %40 : vector<1x1x32x40xbf16> to vector<32x40xbf16>
    %cst_30 = arith.constant dense<0.000000e+00> : vector<256x40xf32>
    %42 = tpu.matmul %39, %41, %cst_30 {dimension_numbers = #tpu.dot_dimension_numbers<[1], [0], [0], [1], [0, 0, 1, 1], [], []>} : vector<256x32xbf16>, vector<32x40xbf16>, vector<256x40xf32> -> vector<256x40xf32>
    %43 = arith.addf %37, %42 : vector<256x40xf32>
    %44 = vector.extract_strided_slice %4 {offsets = [2, 0, 0], sizes = [16, 16, 32], strides = [1, 1, 1]} : vector<18x18x32xbf16> to vector<16x16x32xbf16>
    %45 = vector.shape_cast %44 : vector<16x16x32xbf16> to vector<256x32xbf16>
    %c2_31 = arith.constant 2 : index
    %c0_32 = arith.constant 0 : index
    %c0_33 = arith.constant 0 : index
    %c0_34 = arith.constant 0 : index
    %46 = vector.load %arg3[%c2_31, %c0_32, %c0_33, %c0_34] : memref<3x3x32x40xbf16, #tpu.memory_space<vmem>>, vector<1x1x32x40xbf16>
    %47 = vector.shape_cast %46 : vector<1x1x32x40xbf16> to vector<32x40xbf16>
    %cst_35 = arith.constant dense<0.000000e+00> : vector<256x40xf32>
    %48 = tpu.matmul %45, %47, %cst_35 {dimension_numbers = #tpu.dot_dimension_numbers<[1], [0], [0], [1], [0, 0, 1, 1], [], []>} : vector<256x32xbf16>, vector<32x40xbf16>, vector<256x40xf32> -> vector<256x40xf32>
    %49 = arith.addf %43, %48 : vector<256x40xf32>
    %50 = vector.extract_strided_slice %4 {offsets = [2, 1, 0], sizes = [16, 16, 32], strides = [1, 1, 1]} : vector<18x18x32xbf16> to vector<16x16x32xbf16>
    %51 = vector.shape_cast %50 : vector<16x16x32xbf16> to vector<256x32xbf16>
    %c2_36 = arith.constant 2 : index
    %c1_37 = arith.constant 1 : index
    %c0_38 = arith.constant 0 : index
    %c0_39 = arith.constant 0 : index
    %52 = vector.load %arg3[%c2_36, %c1_37, %c0_38, %c0_39] : memref<3x3x32x40xbf16, #tpu.memory_space<vmem>>, vector<1x1x32x40xbf16>
    %53 = vector.shape_cast %52 : vector<1x1x32x40xbf16> to vector<32x40xbf16>
    %cst_40 = arith.constant dense<0.000000e+00> : vector<256x40xf32>
    %54 = tpu.matmul %51, %53, %cst_40 {dimension_numbers = #tpu.dot_dimension_numbers<[1], [0], [0], [1], [0, 0, 1, 1], [], []>} : vector<256x32xbf16>, vector<32x40xbf16>, vector<256x40xf32> -> vector<256x40xf32>
    %55 = arith.addf %49, %54 : vector<256x40xf32>
    %56 = vector.extract_strided_slice %4 {offsets = [2, 2, 0], sizes = [16, 16, 32], strides = [1, 1, 1]} : vector<18x18x32xbf16> to vector<16x16x32xbf16>
    %57 = vector.shape_cast %56 : vector<16x16x32xbf16> to vector<256x32xbf16>
    %c2_41 = arith.constant 2 : index
    %c2_42 = arith.constant 2 : index
    %c0_43 = arith.constant 0 : index
    %c0_44 = arith.constant 0 : index
    %58 = vector.load %arg3[%c2_41, %c2_42, %c0_43, %c0_44] : memref<3x3x32x40xbf16, #tpu.memory_space<vmem>>, vector<1x1x32x40xbf16>
    %59 = vector.shape_cast %58 : vector<1x1x32x40xbf16> to vector<32x40xbf16>
    %cst_45 = arith.constant dense<0.000000e+00> : vector<256x40xf32>
    %60 = tpu.matmul %57, %59, %cst_45 {dimension_numbers = #tpu.dot_dimension_numbers<[1], [0], [0], [1], [0, 0, 1, 1], [], []>} : vector<256x32xbf16>, vector<32x40xbf16>, vector<256x40xf32> -> vector<256x40xf32>
    %61 = arith.addf %55, %60 : vector<256x40xf32>
    %cst_46 = arith.constant 0.000000e+00 : f32
    %62 = vector.broadcast %cst_46 : f32 to vector<256x40xf32>
    %63 = arith.maximumf %61, %62 : vector<256x40xf32>
    %64 = vector.shape_cast %63 : vector<256x40xf32> to vector<1x16x16x40xf32>
    %c0_47 = arith.constant 0 : index
    %c0_48 = arith.constant 0 : index
    %c0_49 = arith.constant 0 : index
    %c0_50 = arith.constant 0 : index
    %65 = vector.load %arg5[%c0_47, %c0_48, %c0_49, %c0_50] : memref<1x16x16x40xf32, #tpu.memory_space<vmem>>, vector<1x16x16x40xf32>
    tpu.vector_store %arg5[%c0_47, %c0_48, %c0_49, %c0_50], %64 {strides = array<i32>} : memref<1x16x16x40xf32, #tpu.memory_space<vmem>>, vector<1x16x16x40xf32>,
    return
  }
  func.func @transform_0(%arg0: i32, %arg1: i32) -> (i32, i32, i32, i32) {
    %c0_i32 = arith.constant 0 : i32
    %c0_i32_0 = arith.constant 0 : i32
    %c0_i32_1 = arith.constant 0 : i32
    %c0_i32_2 = arith.constant 0 : i32
    return %arg0, %c0_i32, %c0_i32_0, %c0_i32_1 : i32, i32, i32, i32
  }
  func.func @transform_1(%arg0: i32, %arg1: i32) -> (i32, i32, i32, i32) {
    %c0_i32 = arith.constant 0 : i32
    %c0_i32_0 = arith.constant 0 : i32
    %c0_i32_1 = arith.constant 0 : i32
    %c0_i32_2 = arith.constant 0 : i32
    %c0_i32_3 = arith.constant 0 : i32
    return %c0_i32, %c0_i32_0, %c0_i32_1, %c0_i32_2 : i32, i32, i32, i32
  }
  func.func @transform_2(%arg0: i32, %arg1: i32) -> (i32, i32) {
    %c0_i32 = arith.constant 0 : i32
    %c0_i32_0 = arith.constant 0 : i32
    %c0_i32_1 = arith.constant 0 : i32
    return %c0_i32, %c0_i32_0 : i32, i32
  }
  func.func @transform_3(%arg0: i32, %arg1: i32) -> (i32, i32, i32, i32) {
    %c0_i32 = arith.constant 0 : i32
    %c0_i32_0 = arith.constant 0 : i32
    %c0_i32_1 = arith.constant 0 : i32
    return %arg0, %arg1, %c0_i32, %c0_i32_0 : i32, i32, i32, i32
  }
}

</mosaic_0001>

<llo_original>
// kernel: _lambda_.1
$region0: #{_lambda_.1}
  #allocation0 [shape = 'u32[]', space=smem, size = 0x4, offset = 0x4, fixed_abs, tag = 'smem constant byte address 0x4 - core index']
  #allocation1 [shape = 'u32[144,128]{1,0:T(1,128)}', space=vmem, size = 0x12000, scoped, tag = 'internal scratch']
  %s0 = inlined_call_operand.vmem [shape: bf16[2,18,18,32], index: 0, kind: input, shape index: {}]
  %s1 = inlined_call_operand.vmem [shape: bf16[3,3,32,40], index: 1, kind: input, shape index: {}]
  %s2 = inlined_call_operand.vmem [shape: f32[1,40], index: 2, kind: input, shape index: {}]
  %s3 = inlined_call_operand.hbm [shape: f32[2,16,16,40], index: 3, kind: output, shape index: {}]
  %s4 = sld [smem:[#allocation0]]
  $region45: #{_lambda_.1} parent=0
    _
  %s6 = ssub.s32 1, %s4
  %s7 = scalar_select 0, %s6, %s4
  $region1: #{_lambda_.1} parent=0
    #allocation2 [shape = 'u8[262144]{0}', space=vmem, size = 0x40000, scoped, tag = 'output window, operand 0']
    #allocation3 [shape = 's32[2]{0}', space=sflag, size = 0x8, scoped, tag = 'scoped memory for _lambda_.1']
    %8 = vsyncpa [#allocation3], 0
    %s9 = scalar_lea.sflag [#allocation3], 1
    %10 = vsyncpa %s9, 0
    loop: start=0, step=1, limit=4
    $region2: #{_lambda_.1} parent=1 // loop_pre_header
      _
    $region3: #{_lambda_.1} parent=1 // loop_header
      %s12 = sphi 0, %s16
      %p13 = scmp.ge.s32.totalorder %s12, 4
      %s19 = sphi 0, %s31
      %s20 = sphi 0, %s27
      %s21 = sphi 0, %s19
      %s22 = sphi 0, %s20
      %s23 = sphi 0, %s21
      %s24 = sphi 0, %s22
      %s34 = sphi 0, %s36
      %s37 = sphi 0, %s34
      %s38 = sphi 0, %s37
      %s54 = sphi 0, %s38
      %s58 = sphi 0, %s58
      %s60 = sphi 0, %s58
      %s61 = sphi 0, %s60
      %s75 = sphi 0, %s61
      %s79 = sphi 0, %s79
      %s81 = sphi 0, %s79
      %s82 = sphi 0, %s81
      %s96 = sphi 0, %s82
      %s104 = sphi 0, %s106
      %s107 = sphi 0, %s104
      %s108 = sphi 0, %s107
      %s124 = sphi 0, %s108
    $region4: #{_lambda_.1} parent=1 // loop_header_branch
      %15 = sbr.rel (%p13) target = $region8
    $region5: #{_lambda_.1} parent=1 // loop_body
      %s17 = ssub.s32 %s12, 1
      %s18 = ssub.s32 %s12, 2
      %s25 = sadd.s32 1, %s20
      %p26 = scmp.ge.s32.totalorder %s25, 1
      %s27 = scalar_select %p26, 0, %s25
      %s28 = sadd.s32 1, %s19
      %s29 = scalar_select %p26, %s28, %s19
      %p30 = scmp.ge.s32.totalorder %s29, 2
      %s31 = scalar_select %p30, 0, %s29
      %s32 = ssub.s32 %s19, %s31
      %p33 = scmp.eq.s32.totalorder %s32, 0
      %s35 = sadd.s32 %s34, 1
      %s36 = scalar_select %p33, %s34, %s35
      %p39 = pneg %p33
      %p40 = scmp.eq.s32.totalorder %s12, 1
      %p41 = por %p39, %p40
      %p42 = scmp.ne.s32.totalorder %s34, %s37
      %p43 = scmp.eq.s32.totalorder %s12, 0
      %p44 = por %p42, %p43
      %p45 = scmp.ne.s32.totalorder %s34, %s37
      %p46 = scmp.eq.s32.totalorder %s17, 1
      %p47 = por %p45, %p46
      %p48 = scmp.ne.s32.totalorder %s37, %s38
      %p49 = scmp.eq.s32.totalorder %s17, 0
      %p50 = por %p48, %p49
      %p51 = scmp.ne.s32.totalorder %s37, %s38
      %p52 = scmp.eq.s32.totalorder %s18, 1
      %p53 = por %p51, %p52
      %p55 = scmp.ne.s32.totalorder %s38, %s54
      %p56 = scmp.eq.s32.totalorder %s18, 0
      %p57 = por %p55, %p56
      %s59 = sadd.s32 %s58, 1
      %p62 = scmp.eq.s32.totalorder %s12, 1
      %p63 = scmp.ne.s32.totalorder %s58, %s60
      %p64 = scmp.eq.s32.totalorder %s12, 0
      %p65 = por %p63, %p64
      %p66 = scmp.ne.s32.totalorder %s58, %s60
      %p67 = scmp.eq.s32.totalorder %s17, 1
      %p68 = por %p66, %p67
      %p69 = scmp.ne.s32.totalorder %s60, %s61
      %p70 = scmp.eq.s32.totalorder %s17, 0
      %p71 = por %p69, %p70
      %p72 = scmp.ne.s32.totalorder %s60, %s61
      %p73 = scmp.eq.s32.totalorder %s18, 1
      %p74 = por %p72, %p73
      %p76 = scmp.ne.s32.totalorder %s61, %s75
      %p77 = scmp.eq.s32.totalorder %s18, 0
      %p78 = por %p76, %p77
      %s80 = sadd.s32 %s79, 1
      %p83 = scmp.eq.s32.totalorder %s12, 1
      %p84 = scmp.ne.s32.totalorder %s79, %s81
      %p85 = scmp.eq.s32.totalorder %s12, 0
      %p86 = por %p84, %p85
      %p87 = scmp.ne.s32.totalorder %s79, %s81
      %p88 = scmp.eq.s32.totalorder %s17, 1
      %p89 = por %p87, %p88
      %p90 = scmp.ne.s32.totalorder %s81, %s82
      %p91 = scmp.eq.s32.totalorder %s17, 0
      %p92 = por %p90, %p91
      %p93 = scmp.ne.s32.totalorder %s81, %s82
      %p94 = scmp.eq.s32.totalorder %s18, 1
      %p95 = por %p93, %p94
      %p97 = scmp.ne.s32.totalorder %s82, %s96
      %p98 = scmp.eq.s32.totalorder %s18, 0
      %p99 = por %p97, %p98
      %s100 = ssub.s32 %s19, %s31
      %s101 = ssub.s32 %s20, %s27
      %s102 = sor.u32 %s100, %s101
      %p103 = scmp.eq.s32.totalorder %s102, 0
      %s105 = sadd.s32 %s104, 1
      %s106 = scalar_select %p103, %s104, %s105
      %p109 = pneg %p103
      %p110 = scmp.eq.s32.totalorder %s12, 1
      %p111 = por %p109, %p110
      %p112 = scmp.ne.s32.totalorder %s104, %s107
      %p113 = scmp.eq.s32.totalorder %s12, 0
      %p114 = por %p112, %p113
      %p115 = scmp.ne.s32.totalorder %s104, %s107
      %p116 = scmp.eq.s32.totalorder %s17, 1
      %p117 = por %p115, %p116
      %p118 = scmp.ne.s32.totalorder %s107, %s108
      %p119 = scmp.eq.s32.totalorder %s17, 0
      %p120 = por %p118, %p119
      %p121 = scmp.ne.s32.totalorder %s107, %s108
      %p122 = scmp.eq.s32.totalorder %s18, 1
      %p123 = por %p121, %p122
      %p125 = scmp.ne.s32.totalorder %s108, %s124
      %p126 = scmp.eq.s32.totalorder %s18, 0
      %p127 = por %p125, %p126
      %p128 = scmp.le.s32.totalorder 1, %s12
      %p129 = scmp.lt.s32.totalorder %s12, 3
      %p130 = pnand %p128, %p129
      %p131 = pneg %p130
      // Predicated region
      $region9: #{_lambda_.1} parent=5 // pred_check
        _
      $region10: #{_lambda_.1} parent=5 // pred_check_branch
        %133 = sbr.rel (%p130) target = $region12
      $region11: #{_lambda_.1} parent=5 // pred_region
        %s134 = ssub.s32 %s12, 1
        // Predicated region
        $region13: #{_lambda_.1} parent=11 // pred_check
          %p135 = pneg %p71
        $region14: #{_lambda_.1} parent=11 // pred_check_branch
          %137 = sbr.rel (%p135) target = $region16
        $region15: #{_lambda_.1} parent=11 // pred_region
          _
        $region16: #{_lambda_.1} parent=11 // pred_fallthru
          _
        // Predicated region
        $region17: #{_lambda_.1} parent=11 // pred_check
          %p138 = pneg %p92
        $region18: #{_lambda_.1} parent=11 // pred_check_branch
          %140 = sbr.rel (%p138) target = $region20
        $region19: #{_lambda_.1} parent=11 // pred_region
          _
        $region20: #{_lambda_.1} parent=11 // pred_fallthru
          _
      $region12: #{_lambda_.1} parent=5 // pred_fallthru
        _
      %p141 = scmp.lt.s32.totalorder %s12, 2
      // Predicated region
      $region21: #{_lambda_.1} parent=5 // pred_check
        %p142 = pneg %p141
      $region22: #{_lambda_.1} parent=5 // pred_check_branch
        %144 = sbr.rel (%p142) target = $region24
      $region23: #{_lambda_.1} parent=5 // pred_region
        // Predicated region
        $region25: #{_lambda_.1} parent=23 // pred_check
          %p145 = pneg %p44
        $region26: #{_lambda_.1} parent=23 // pred_check_branch
          %147 = sbr.rel (%p145) target = $region28
        $region27: #{_lambda_.1} parent=23 // pred_region
          %p148 = scmp.lt.s32.totalorder %s19, 1
          %s149 = scalar_select %p148, %s19, 1
          %s150 = smul.addr %s149, 54
          %s151 = smul.addr %s150, 4
          %s152 = scalar_lea.vmem %s0, %s151
        $region28: #{_lambda_.1} parent=23 // pred_fallthru
          _
      $region24: #{_lambda_.1} parent=5 // pred_fallthru
        _
      %p153 = scmp.le.s32.totalorder 1, %s12
      %p154 = scmp.lt.s32.totalorder %s12, 3
      %p155 = pnand %p153, %p154
      %p156 = pneg %p155
      // Predicated region
      $region29: #{_lambda_.1} parent=5 // pred_check
        _
      $region30: #{_lambda_.1} parent=5 // pred_check_branch
        %158 = sbr.rel (%p155) target = $region32
      $region31: #{_lambda_.1} parent=5 // pred_region
        %s159 = ssub.s32 %s12, 1
        %p160 = scmp.lt.s32.totalorder %s21, 1
        %s161 = scalar_select %p160, %s21, 1
        %s162 = smul.addr %s161, 54
        %s163 = smul.addr %s162, 4
        %s164 = scalar_lea.vmem %s0, %s163
        %p165 = pneg %p50
        %p166 = pneg %p47
        %p167 = pneg %p71
        %p168 = pneg %p68
        %p169 = pneg %p92
        %p170 = pneg %p89
        %p171 = pneg %p120
        %p172 = pneg %p117
        %s173 = sand.u32 %s107, 1
        %s174 = scalar_lea.sflag [#allocation3], %s173
        %s175 = sand.u32 %s107, 1
        %s176 = smul.addr %s175, 256
        %s177 = scalar_lea.vmem [#allocation2], %s176
        %p178 = scmp.lt.s32.totalorder %s21, 1
        %s179 = scalar_select %p178, %s21, 1
        %s180 = smul.addr %s179, 54
        %s181 = smul.addr %s180, 4
        %s182 = scalar_lea.vmem %s0, %s181
        %s183 = smul.u32 16, %s22
        %s185 = smul.u32 %s22, 16
        %s186 = smul.u32 %s185, 3
        %s187 = smul.addr %s186, 4
        %s188 = scalar_lea.vmem %s182, %s187
        %v189 = vld [vmem:[%s188] sm:$0xf]
        %v190 = vld [vmem:[%s188 + $0x4] sm:$0xf]
        %v191 = vld [vmem:[%s188 + $0x8] sm:$0x1]
        %v192 = vld [vmem:[%s188 + $0xc] sm:$0xf]
        %v193 = vld [vmem:[%s188 + $0x10] sm:$0xf]
        %v194 = vld [vmem:[%s188 + $0x14] sm:$0x1]
        %v195 = vld [vmem:[%s188 + $0x18] sm:$0xf]
        %v196 = vld [vmem:[%s188 + $0x1c] sm:$0xf]
        %v197 = vld [vmem:[%s188 + $0x20] sm:$0x1]
        %v198 = vld [vmem:[%s188 + $0x24] sm:$0xf]
        %v199 = vld [vmem:[%s188 + $0x28] sm:$0xf]
        %v200 = vld [vmem:[%s188 + $0x2c] sm:$0x1]
        %v201 = vld [vmem:[%s188 + $0x30] sm:$0xf]
        %v202 = vld [vmem:[%s188 + $0x34] sm:$0xf]
        %v203 = vld [vmem:[%s188 + $0x38] sm:$0x1]
        %v204 = vld [vmem:[%s188 + $0x3c] sm:$0xf]
        %v205 = vld [vmem:[%s188 + $0x40] sm:$0xf]
        %v206 = vld [vmem:[%s188 + $0x44] sm:$0x1]
        %v207 = vld [vmem:[%s188 + $0x48] sm:$0xf]
        %v208 = vld [vmem:[%s188 + $0x4c] sm:$0xf]
        %v209 = vld [vmem:[%s188 + $0x50] sm:$0x1]
        %v210 = vld [vmem:[%s188 + $0x54] sm:$0xf]
        %v211 = vld [vmem:[%s188 + $0x58] sm:$0xf]
        %v212 = vld [vmem:[%s188 + $0x5c] sm:$0x1]
        %v213 = vld [vmem:[%s188 + $0x60] sm:$0xf]
        %v214 = vld [vmem:[%s188 + $0x64] sm:$0xf]
        %v215 = vld [vmem:[%s188 + $0x68] sm:$0x1]
        %v216 = vld [vmem:[%s188 + $0x6c] sm:$0xf]
        %v217 = vld [vmem:[%s188 + $0x70] sm:$0xf]
        %v218 = vld [vmem:[%s188 + $0x74] sm:$0x1]
        %v219 = vld [vmem:[%s188 + $0x78] sm:$0xf]
        %v220 = vld [vmem:[%s188 + $0x7c] sm:$0xf]
        %v221 = vld [vmem:[%s188 + $0x80] sm:$0x1]
        %v222 = vld [vmem:[%s188 + $0x84] sm:$0xf]
        %v223 = vld [vmem:[%s188 + $0x88] sm:$0xf]
        %v224 = vld [vmem:[%s188 + $0x8c] sm:$0x1]
        %v225 = vld [vmem:[%s188 + $0x90] sm:$0xf]
        %v226 = vld [vmem:[%s188 + $0x94] sm:$0xf]
        %v227 = vld [vmem:[%s188 + $0x98] sm:$0x1]
        %v228 = vld [vmem:[%s188 + $0x9c] sm:$0xf]
        %v229 = vld [vmem:[%s188 + $0xa0] sm:$0xf]
        %v230 = vld [vmem:[%s188 + $0xa4] sm:$0x1]
        %v231 = vld [vmem:[%s188 + $0xa8] sm:$0xf]
        %v232 = vld [vmem:[%s188 + $0xac] sm:$0xf]
        %v233 = vld [vmem:[%s188 + $0xb0] sm:$0x1]
        %v234 = vld [vmem:[%s188 + $0xb4] sm:$0xf]
        %v235 = vld [vmem:[%s188 + $0xb8] sm:$0xf]
        %v236 = vld [vmem:[%s188 + $0xbc] sm:$0x1]
        %v237 = vld [vmem:[%s188 + $0xc0] sm:$0xf]
        %v238 = vld [vmem:[%s188 + $0xc4] sm:$0xf]
        %v239 = vld [vmem:[%s188 + $0xc8] sm:$0x1]
        %v240 = vld [vmem:[%s188 + $0xcc] sm:$0xf]
        %v241 = vld [vmem:[%s188 + $0xd0] sm:$0xf]
        %v242 = vld [vmem:[%s188 + $0xd4] sm:$0x1]
        %v243 = vld [vmem:[%s2] sm:$0x1]
        %v245 = vlaneseq
        %v246 = vshrl.u32 %v245, 7
        %v247 = vsub.s32 0, %v246
        %v248 = vrot.slane %v243, %v247
        %v250 = vld [vmem:[%s1] sm:$0xf]
        %v251 = vld [vmem:[%s1 + $0x4] sm:$0xf]
        %v252 = vld [vmem:[%s1 + $0x8] sm:$0xf]
        %v253 = vld [vmem:[%s1 + $0xc] sm:$0xf]
        %v286 = vunpack.c.l.b16 %v189
        %v287 = vunpack.c.l.b16 %v190
        %v288 = vunpack.c.l.b16 %v192
        %v289 = vunpack.c.l.b16 %v193
        %v290 = vunpack.c.l.b16 %v195
        %v291 = vunpack.c.l.b16 %v196
        %v292 = vunpack.c.l.b16 %v198
        %v293 = vunpack.c.l.b16 %v199
        %v294 = vunpack.c.l.b16 %v201
        %v295 = vunpack.c.l.b16 %v202
        %v296 = vunpack.c.l.b16 %v204
        %v297 = vunpack.c.l.b16 %v205
        %v298 = vunpack.c.l.b16 %v207
        %v299 = vunpack.c.l.b16 %v208
        %v300 = vunpack.c.l.b16 %v210
        %v301 = vunpack.c.l.b16 %v211
        %v302 = vunpack.c.l.b16 %v213
        %v303 = vunpack.c.l.b16 %v214
        %v304 = vunpack.c.l.b16 %v216
        %v305 = vunpack.c.l.b16 %v217
        %v306 = vunpack.c.l.b16 %v219
        %v307 = vunpack.c.l.b16 %v220
        %v308 = vunpack.c.l.b16 %v222
        %v309 = vunpack.c.l.b16 %v223
        %v310 = vunpack.c.l.b16 %v225
        %v311 = vunpack.c.l.b16 %v226
        %v312 = vunpack.c.l.b16 %v228
        %v313 = vunpack.c.l.b16 %v229
        %v314 = vunpack.c.l.b16 %v231
        %v315 = vunpack.c.l.b16 %v232
        %v316 = vunpack.c.l.b16 %v234
        %v317 = vunpack.c.l.b16 %v235
        %v318 = vpack.c.b16 %v287, %v286
        %v319 = vpack.c.b16 %v289, %v288
        %v320 = vpack.c.b16 %v291, %v290
        %v321 = vpack.c.b16 %v293, %v292
        %v322 = vpack.c.b16 %v295, %v294
        %v323 = vpack.c.b16 %v297, %v296
        %v324 = vpack.c.b16 %v299, %v298
        %v325 = vpack.c.b16 %v301, %v300
        %v326 = vpack.c.b16 %v303, %v302
        %v327 = vpack.c.b16 %v305, %v304
        %v328 = vpack.c.b16 %v307, %v306
        %v329 = vpack.c.b16 %v309, %v308
        %v330 = vpack.c.b16 %v311, %v310
        %v331 = vpack.c.b16 %v313, %v312
        %v332 = vpack.c.b16 %v315, %v314
        %v333 = vpack.c.b16 %v317, %v316
        %v338 = vunpack.c.l.b16 %v250
        %v339 = vunpack.c.l.b16 %v251
        %v340 = vunpack.c.l.b16 %v252
        %v341 = vunpack.c.l.b16 %v253
        %v342 = vpack.c.b16 %v339, %v338
        %v343 = vpack.c.b16 %v341, %v340
        %vm346 = vcmask 261120
        %v348 = vsel %vm346, %v318, 0
        %v351 = vsel %vm346, %v319, 0
        %v354 = vsel %vm346, %v320, 0
        %v357 = vsel %vm346, %v321, 0
        %v360 = vsel %vm346, %v322, 0
        %v363 = vsel %vm346, %v323, 0
        %v366 = vsel %vm346, %v324, 0
        %v369 = vsel %vm346, %v325, 0
        %v372 = vsel %vm346, %v326, 0
        %v375 = vsel %vm346, %v327, 0
        %v378 = vsel %vm346, %v328, 0
        %v381 = vsel %vm346, %v329, 0
        %v384 = vsel %vm346, %v330, 0
        %v387 = vsel %vm346, %v331, 0
        %v390 = vsel %vm346, %v332, 0
        %v393 = vsel %vm346, %v333, 0
        %395 = vmatprep.subr.bf16.mxu0 0
        %396 = vmatpush1.bf16.msra.mxu0 %v342
        %397 = vmatprep.subr.bf16.mxu0 0
        %398 = vmatpush1.bf16.msra.mxu0 %v343
        %399 = vmatprep.subr.bf16.mxu0 0
        %400 = vmatpush1.bf16.msra.mxu0 0
        %401 = vmatprep.subr.bf16.mxu0 0
        %402 = vmatpush1.bf16.msra.mxu0 0
        %403 = vmatprep.subr.bf16.mxu0 0
        %404 = vmatpush1.bf16.msra.mxu0 0
        %405 = vmatprep.subr.bf16.mxu0 0
        %406 = vmatpush1.bf16.msra.mxu0 0
        %407 = vmatprep.subr.bf16.mxu0 0
        %408 = vmatpush1.bf16.msra.mxu0 0
        %409 = vmatprep.subr.bf16.mxu0 0
        %410 = vmatpush1.bf16.msra.mxu0 0
        %411 = vmatprep.subr.bf16.mxu0 0
        %412 = vmatpush1.bf16.msra.mxu0 0
        %413 = vmatprep.subr.bf16.mxu0 0
        %414 = vmatpush1.bf16.msra.mxu0 0
        %415 = vmatprep.subr.bf16.mxu0 0
        %416 = vmatpush1.bf16.msra.mxu0 0
        %417 = vmatprep.subr.bf16.mxu0 0
        %418 = vmatpush1.bf16.msra.mxu0 0
        %419 = vmatprep.subr.bf16.mxu0 0
        %420 = vmatpush1.bf16.msra.mxu0 0
        %421 = vmatprep.subr.bf16.mxu0 0
        %422 = vmatpush1.bf16.msra.mxu0 0
        %423 = vmatprep.subr.bf16.mxu0 0
        %424 = vmatpush1.bf16.msra.mxu0 0
        %425 = vmatprep.subr.bf16.mxu0 0
        %426 = vmatpush1.bf16.msra.mxu0 0
        %427 = vmatprep.mubr.bf16.mxu0 0
        %428 = vmatmul.mubr.bf16.gmra.mrb[0].mxu0 %v348
        %v429 = vpop.f32.mrb[0].mxu0
        %v430 = vadd.f32 0.0, %v429
        %v431 = vpop.f32.mrb[0].mxu0
        %v432 = vpop.f32.mrb[0].mxu0
        %v433 = vadd.f32 0.0, %v432
        %v434 = vpop.f32.mrb[0].mxu0
        %435 = vmatprep.mubr.bf16.mxu0 0
        %436 = vmatmul.mubr.bf16.gmra.mrb[0].mxu0 %v351
        %v437 = vpop.f32.mrb[0].mxu0
        %v438 = vadd.f32 0.0, %v437
        %v439 = vpop.f32.mrb[0].mxu0
        %v440 = vpop.f32.mrb[0].mxu0
        %v441 = vadd.f32 0.0, %v440
        %v442 = vpop.f32.mrb[0].mxu0
        %443 = vmatprep.mubr.bf16.mxu0 0
        %444 = vmatmul.mubr.bf16.gmra.mrb[0].mxu0 %v354
        %v445 = vpop.f32.mrb[0].mxu0
        %v446 = vadd.f32 0.0, %v445
        %v447 = vpop.f32.mrb[0].mxu0
        %v448 = vpop.f32.mrb[0].mxu0
        %v449 = vadd.f32 0.0, %v448
        %v450 = vpop.f32.mrb[0].mxu0
        %451 = vmatprep.mubr.bf16.mxu0 0
        %452 = vmatmul.mubr.bf16.gmra.mrb[0].mxu0 %v357
        %v453 = vpop.f32.mrb[0].mxu0
        %v454 = vadd.f32 0.0, %v453
        %v455 = vpop.f32.mrb[0].mxu0
        %v456 = vpop.f32.mrb[0].mxu0
        %v457 = vadd.f32 0.0, %v456
        %v458 = vpop.f32.mrb[0].mxu0
        %459 = vmatprep.mubr.bf16.mxu0 0
        %460 = vmatmul.mubr.bf16.gmra.mrb[0].mxu0 %v360
        %v461 = vpop.f32.mrb[0].mxu0
        %v462 = vadd.f32 0.0, %v461
        %v463 = vpop.f32.mrb[0].mxu0
        %v464 = vpop.f32.mrb[0].mxu0
        %v465 = vadd.f32 0.0, %v464
        %v466 = vpop.f32.mrb[0].mxu0
        %467 = vmatprep.mubr.bf16.mxu0 0
        %468 = vmatmul.mubr.bf16.gmra.mrb[0].mxu0 %v363
        %v469 = vpop.f32.mrb[0].mxu0
        %v470 = vadd.f32 0.0, %v469
        %v471 = vpop.f32.mrb[0].mxu0
        %v472 = vpop.f32.mrb[0].mxu0
        %v473 = vadd.f32 0.0, %v472
        %v474 = vpop.f32.mrb[0].mxu0
        %475 = vmatprep.mubr.bf16.mxu0 0
        %476 = vmatmul.mubr.bf16.gmra.mrb[0].mxu0 %v366
        %v477 = vpop.f32.mrb[0].mxu0
        %v478 = vadd.f32 0.0, %v477
        %v479 = vpop.f32.mrb[0].mxu0
        %v480 = vpop.f32.mrb[0].mxu0
        %v481 = vadd.f32 0.0, %v480
        %v482 = vpop.f32.mrb[0].mxu0
        %483 = vmatprep.mubr.bf16.mxu0 0
        %484 = vmatmul.mubr.bf16.gmra.mrb[0].mxu0 %v369
        %v485 = vpop.f32.mrb[0].mxu0
        %v486 = vadd.f32 0.0, %v485
        %v487 = vpop.f32.mrb[0].mxu0
        %v488 = vpop.f32.mrb[0].mxu0
        %v489 = vadd.f32 0.0, %v488
        %v490 = vpop.f32.mrb[0].mxu0
        %491 = vmatprep.mubr.bf16.mxu0 0
        %492 = vmatmul.mubr.bf16.gmra.mrb[0].mxu0 %v372
        %v493 = vpop.f32.mrb[0].mxu0
        %v494 = vadd.f32 0.0, %v493
        %v495 = vpop.f32.mrb[0].mxu0
        %v496 = vpop.f32.mrb[0].mxu0
        %v497 = vadd.f32 0.0, %v496
        %v498 = vpop.f32.mrb[0].mxu0
        %499 = vmatprep.mubr.bf16.mxu0 0
        %500 = vmatmul.mubr.bf16.gmra.mrb[0].mxu0 %v375
        %v501 = vpop.f32.mrb[0].mxu0
        %v502 = vadd.f32 0.0, %v501
        %v503 = vpop.f32.mrb[0].mxu0
        %v504 = vpop.f32.mrb[0].mxu0
        %v505 = vadd.f32 0.0, %v504
        %v506 = vpop.f32.mrb[0].mxu0
        %507 = vmatprep.mubr.bf16.mxu0 0
        %508 = vmatmul.mubr.bf16.gmra.mrb[0].mxu0 %v378
        %v509 = vpop.f32.mrb[0].mxu0
        %v510 = vadd.f32 0.0, %v509
        %v511 = vpop.f32.mrb[0].mxu0
        %v512 = vpop.f32.mrb[0].mxu0
        %v513 = vadd.f32 0.0, %v512
        %v514 = vpop.f32.mrb[0].mxu0
        %515 = vmatprep.mubr.bf16.mxu0 0
        %516 = vmatmul.mubr.bf16.gmra.mrb[0].mxu0 %v381
        %v517 = vpop.f32.mrb[0].mxu0
        %v518 = vadd.f32 0.0, %v517
        %v519 = vpop.f32.mrb[0].mxu0
        %v520 = vpop.f32.mrb[0].mxu0
        %v521 = vadd.f32 0.0, %v520
        %v522 = vpop.f32.mrb[0].mxu0
        %523 = vmatprep.mubr.bf16.mxu0 0
        %524 = vmatmul.mubr.bf16.gmra.mrb[0].mxu0 %v384
        %v525 = vpop.f32.mrb[0].mxu0
        %v526 = vadd.f32 0.0, %v525
        %v527 = vpop.f32.mrb[0].mxu0
        %v528 = vpop.f32.mrb[0].mxu0
        %v529 = vadd.f32 0.0, %v528
        %v530 = vpop.f32.mrb[0].mxu0
        %531 = vmatprep.mubr.bf16.mxu0 0
        %532 = vmatmul.mubr.bf16.gmra.mrb[0].mxu0 %v387
        %v533 = vpop.f32.mrb[0].mxu0
        %v534 = vadd.f32 0.0, %v533
        %v535 = vpop.f32.mrb[0].mxu0
        %v536 = vpop.f32.mrb[0].mxu0
        %v537 = vadd.f32 0.0, %v536
        %v538 = vpop.f32.mrb[0].mxu0
        %539 = vmatprep.mubr.bf16.mxu0 0
        %540 = vmatmul.mubr.bf16.gmra.mrb[0].mxu0 %v390
        %v541 = vpop.f32.mrb[0].mxu0
        %v542 = vadd.f32 0.0, %v541
        %v543 = vpop.f32.mrb[0].mxu0
        %v544 = vpop.f32.mrb[0].mxu0
        %v545 = vadd.f32 0.0, %v544
        %v546 = vpop.f32.mrb[0].mxu0
        %547 = vmatprep.mubr.bf16.mxu0 0
        %548 = vmatmul.mubr.bf16.gmra.mrb[0].mxu0 %v393
        %v549 = vpop.f32.mrb[0].mxu0
        %v550 = vadd.f32 0.0, %v549
        %v551 = vpop.f32.mrb[0].mxu0
        %v552 = vpop.f32.mrb[0].mxu0
        %v553 = vadd.f32 0.0, %v552
        %v554 = vpop.f32.mrb[0].mxu0
        %555 = vdwg.mxu0
        %v556 = vadd.f32 %v248, %v430
        %v557 = vadd.f32 %v248, %v433
        %v558 = vadd.f32 %v248, %v438
        %v559 = vadd.f32 %v248, %v441
        %v560 = vadd.f32 %v248, %v446
        %v561 = vadd.f32 %v248, %v449
        %v562 = vadd.f32 %v248, %v454
        %v563 = vadd.f32 %v248, %v457
        %v564 = vadd.f32 %v248, %v462
        %v565 = vadd.f32 %v248, %v465
        %v566 = vadd.f32 %v248, %v470
        %v567 = vadd.f32 %v248, %v473
        %v568 = vadd.f32 %v248, %v478
        %v569 = vadd.f32 %v248, %v481
        %v570 = vadd.f32 %v248, %v486
        %v571 = vadd.f32 %v248, %v489
        %v572 = vadd.f32 %v248, %v494
        %v573 = vadd.f32 %v248, %v497
        %v574 = vadd.f32 %v248, %v502
        %v575 = vadd.f32 %v248, %v505
        %v576 = vadd.f32 %v248, %v510
        %v577 = vadd.f32 %v248, %v513
        %v578 = vadd.f32 %v248, %v518
        %v579 = vadd.f32 %v248, %v521
        %v580 = vadd.f32 %v248, %v526
        %v581 = vadd.f32 %v248, %v529
        %v582 = vadd.f32 %v248, %v534
        %v583 = vadd.f32 %v248, %v537
        %v584 = vadd.f32 %v248, %v542
        %v585 = vadd.f32 %v248, %v545
        %v586 = vadd.f32 %v248, %v550
        %v587 = vadd.f32 %v248, %v553
        %vm588 = vsmask.f32 3328
        %vm589 = vsmask.f32 7440
        %vm590 = vmor %vm588, %vm589
        %v592 = vshrl.u32 %v189, 16
        %v594 = vrot.slane %v592, 4
        %v595 = vshll.u32 %v189, 16
        %v597 = vrot.slane %v595, 5
        %v598 = vor.u32 %v594, %v597
        %v599 = vrot.slane %v598, 4
        %v601 = vshll.u32 %v190, 16
        %v603 = vrot.slane %v601, 5
        %v604 = vsel %vm590, %v599, %v603
        %v605 = vshrl.u32 %v190, 16
        %v607 = vrot.slane %v605, 4
        %v608 = vor.u32 %v607, %v603
        %v609 = vrot.slane %v608, 4
        %v611 = vshll.u32 %v191, 16
        %v613 = vrot.slane %v611, 5
        %v614 = vsel %vm590, %v609, %v613
        %v616 = vshrl.u32 %v192, 16
        %v618 = vrot.slane %v616, 4
        %v619 = vshll.u32 %v192, 16
        %v621 = vrot.slane %v619, 5
        %v622 = vor.u32 %v618, %v621
        %v623 = vrot.slane %v622, 4
        %v625 = vshll.u32 %v193, 16
        %v627 = vrot.slane %v625, 5
        %v628 = vsel %vm590, %v623, %v627
        %v629 = vshrl.u32 %v193, 16
        %v631 = vrot.slane %v629, 4
        %v632 = vor.u32 %v631, %v627
        %v633 = vrot.slane %v632, 4
        %v635 = vshll.u32 %v194, 16
        %v637 = vrot.slane %v635, 5
        %v638 = vsel %vm590, %v633, %v637
        %v640 = vshrl.u32 %v195, 16
        %v642 = vrot.slane %v640, 4
        %v643 = vshll.u32 %v195, 16
        %v645 = vrot.slane %v643, 5
        %v646 = vor.u32 %v642, %v645
        %v647 = vrot.slane %v646, 4
        %v649 = vshll.u32 %v196, 16
        %v651 = vrot.slane %v649, 5
        %v652 = vsel %vm590, %v647, %v651
        %v653 = vshrl.u32 %v196, 16
        %v655 = vrot.slane %v653, 4
        %v656 = vor.u32 %v655, %v651
        %v657 = vrot.slane %v656, 4
        %v659 = vshll.u32 %v197, 16
        %v661 = vrot.slane %v659, 5
        %v662 = vsel %vm590, %v657, %v661
        %v664 = vshrl.u32 %v198, 16
        %v666 = vrot.slane %v664, 4
        %v667 = vshll.u32 %v198, 16
        %v669 = vrot.slane %v667, 5
        %v670 = vor.u32 %v666, %v669
        %v671 = vrot.slane %v670, 4
        %v673 = vshll.u32 %v199, 16
        %v675 = vrot.slane %v673, 5
        %v676 = vsel %vm590, %v671, %v675
        %v677 = vshrl.u32 %v199, 16
        %v679 = vrot.slane %v677, 4
        %v680 = vor.u32 %v679, %v675
        %v681 = vrot.slane %v680, 4
        %v683 = vshll.u32 %v200, 16
        %v685 = vrot.slane %v683, 5
        %v686 = vsel %vm590, %v681, %v685
        %v688 = vshrl.u32 %v201, 16
        %v690 = vrot.slane %v688, 4
        %v691 = vshll.u32 %v201, 16
        %v693 = vrot.slane %v691, 5
        %v694 = vor.u32 %v690, %v693
        %v695 = vrot.slane %v694, 4
        %v697 = vshll.u32 %v202, 16
        %v699 = vrot.slane %v697, 5
        %v700 = vsel %vm590, %v695, %v699
        %v701 = vshrl.u32 %v202, 16
        %v703 = vrot.slane %v701, 4
        %v704 = vor.u32 %v703, %v699
        %v705 = vrot.slane %v704, 4
        %v707 = vshll.u32 %v203, 16
        %v709 = vrot.slane %v707, 5
        %v710 = vsel %vm590, %v705, %v709
        %v712 = vshrl.u32 %v204, 16
        %v714 = vrot.slane %v712, 4
        %v715 = vshll.u32 %v204, 16
        %v717 = vrot.slane %v715, 5
        %v718 = vor.u32 %v714, %v717
        %v719 = vrot.slane %v718, 4
        %v721 = vshll.u32 %v205, 16
        %v723 = vrot.slane %v721, 5
        %v724 = vsel %vm590, %v719, %v723
        %v725 = vshrl.u32 %v205, 16
        %v727 = vrot.slane %v725, 4
        %v728 = vor.u32 %v727, %v723
        %v729 = vrot.slane %v728, 4
        %v731 = vshll.u32 %v206, 16
        %v733 = vrot.slane %v731, 5
        %v734 = vsel %vm590, %v729, %v733
        %v736 = vshrl.u32 %v207, 16
        %v738 = vrot.slane %v736, 4
        %v739 = vshll.u32 %v207, 16
        %v741 = vrot.slane %v739, 5
        %v742 = vor.u32 %v738, %v741
        %v743 = vrot.slane %v742, 4
        %v745 = vshll.u32 %v208, 16
        %v747 = vrot.slane %v745, 5
        %v748 = vsel %vm590, %v743, %v747
        %v749 = vshrl.u32 %v208, 16
        %v751 = vrot.slane %v749, 4
        %v752 = vor.u32 %v751, %v747
        %v753 = vrot.slane %v752, 4
        %v755 = vshll.u32 %v209, 16
        %v757 = vrot.slane %v755, 5
        %v758 = vsel %vm590, %v753, %v757
        %v760 = vshrl.u32 %v210, 16
        %v762 = vrot.slane %v760, 4
        %v763 = vshll.u32 %v210, 16
        %v765 = vrot.slane %v763, 5
        %v766 = vor.u32 %v762, %v765
        %v767 = vrot.slane %v766, 4
        %v769 = vshll.u32 %v211, 16
        %v771 = vrot.slane %v769, 5
        %v772 = vsel %vm590, %v767, %v771
        %v773 = vshrl.u32 %v211, 16
        %v775 = vrot.slane %v773, 4
        %v776 = vor.u32 %v775, %v771
        %v777 = vrot.slane %v776, 4
        %v779 = vshll.u32 %v212, 16
        %v781 = vrot.slane %v779, 5
        %v782 = vsel %vm590, %v777, %v781
        %v784 = vshrl.u32 %v213, 16
        %v786 = vrot.slane %v784, 4
        %v787 = vshll.u32 %v213, 16
        %v789 = vrot.slane %v787, 5
        %v790 = vor.u32 %v786, %v789
        %v791 = vrot.slane %v790, 4
        %v793 = vshll.u32 %v214, 16
        %v795 = vrot.slane %v793, 5
        %v796 = vsel %vm590, %v791, %v795
        %v797 = vshrl.u32 %v214, 16
        %v799 = vrot.slane %v797, 4
        %v800 = vor.u32 %v799, %v795
        %v801 = vrot.slane %v800, 4
        %v803 = vshll.u32 %v215, 16
        %v805 = vrot.slane %v803, 5
        %v806 = vsel %vm590, %v801, %v805
        %v808 = vshrl.u32 %v216, 16
        %v810 = vrot.slane %v808, 4
        %v811 = vshll.u32 %v216, 16
        %v813 = vrot.slane %v811, 5
        %v814 = vor.u32 %v810, %v813
        %v815 = vrot.slane %v814, 4
        %v817 = vshll.u32 %v217, 16
        %v819 = vrot.slane %v817, 5
        %v820 = vsel %vm590, %v815, %v819
        %v821 = vshrl.u32 %v217, 16
        %v823 = vrot.slane %v821, 4
        %v824 = vor.u32 %v823, %v819
        %v825 = vrot.slane %v824, 4
        %v827 = vshll.u32 %v218, 16
        %v829 = vrot.slane %v827, 5
        %v830 = vsel %vm590, %v825, %v829
        %v832 = vshrl.u32 %v219, 16
        %v834 = vrot.slane %v832, 4
        %v835 = vshll.u32 %v219, 16
        %v837 = vrot.slane %v835, 5
        %v838 = vor.u32 %v834, %v837
        %v839 = vrot.slane %v838, 4
        %v841 = vshll.u32 %v220, 16
        %v843 = vrot.slane %v841, 5
        %v844 = vsel %vm590, %v839, %v843
        %v845 = vshrl.u32 %v220, 16
        %v847 = vrot.slane %v845, 4
        %v848 = vor.u32 %v847, %v843
        %v849 = vrot.slane %v848, 4
        %v851 = vshll.u32 %v221, 16
        %v853 = vrot.slane %v851, 5
        %v854 = vsel %vm590, %v849, %v853
        %v856 = vshrl.u32 %v222, 16
        %v858 = vrot.slane %v856, 4
        %v859 = vshll.u32 %v222, 16
        %v861 = vrot.slane %v859, 5
        %v862 = vor.u32 %v858, %v861
        %v863 = vrot.slane %v862, 4
        %v865 = vshll.u32 %v223, 16
        %v867 = vrot.slane %v865, 5
        %v868 = vsel %vm590, %v863, %v867
        %v869 = vshrl.u32 %v223, 16
        %v871 = vrot.slane %v869, 4
        %v872 = vor.u32 %v871, %v867
        %v873 = vrot.slane %v872, 4
        %v875 = vshll.u32 %v224, 16
        %v877 = vrot.slane %v875, 5
        %v878 = vsel %vm590, %v873, %v877
        %v880 = vshrl.u32 %v225, 16
        %v882 = vrot.slane %v880, 4
        %v883 = vshll.u32 %v225, 16
        %v885 = vrot.slane %v883, 5
        %v886 = vor.u32 %v882, %v885
        %v887 = vrot.slane %v886, 4
        %v889 = vshll.u32 %v226, 16
        %v891 = vrot.slane %v889, 5
        %v892 = vsel %vm590, %v887, %v891
        %v893 = vshrl.u32 %v226, 16
        %v895 = vrot.slane %v893, 4
        %v896 = vor.u32 %v895, %v891
        %v897 = vrot.slane %v896, 4
        %v899 = vshll.u32 %v227, 16
        %v901 = vrot.slane %v899, 5
        %v902 = vsel %vm590, %v897, %v901
        %v904 = vshrl.u32 %v228, 16
        %v906 = vrot.slane %v904, 4
        %v907 = vshll.u32 %v228, 16
        %v909 = vrot.slane %v907, 5
        %v910 = vor.u32 %v906, %v909
        %v911 = vrot.slane %v910, 4
        %v913 = vshll.u32 %v229, 16
        %v915 = vrot.slane %v913, 5
        %v916 = vsel %vm590, %v911, %v915
        %v917 = vshrl.u32 %v229, 16
        %v919 = vrot.slane %v917, 4
        %v920 = vor.u32 %v919, %v915
        %v921 = vrot.slane %v920, 4
        %v923 = vshll.u32 %v230, 16
        %v925 = vrot.slane %v923, 5
        %v926 = vsel %vm590, %v921, %v925
        %v928 = vshrl.u32 %v231, 16
        %v930 = vrot.slane %v928, 4
        %v931 = vshll.u32 %v231, 16
        %v933 = vrot.slane %v931, 5
        %v934 = vor.u32 %v930, %v933
        %v935 = vrot.slane %v934, 4
        %v937 = vshll.u32 %v232, 16
        %v939 = vrot.slane %v937, 5
        %v940 = vsel %vm590, %v935, %v939
        %v941 = vshrl.u32 %v232, 16
        %v943 = vrot.slane %v941, 4
        %v944 = vor.u32 %v943, %v939
        %v945 = vrot.slane %v944, 4
        %v947 = vshll.u32 %v233, 16
        %v949 = vrot.slane %v947, 5
        %v950 = vsel %vm590, %v945, %v949
        %v952 = vshrl.u32 %v234, 16
        %v954 = vrot.slane %v952, 4
        %v955 = vshll.u32 %v234, 16
        %v957 = vrot.slane %v955, 5
        %v958 = vor.u32 %v954, %v957
        %v959 = vrot.slane %v958, 4
        %v961 = vshll.u32 %v235, 16
        %v963 = vrot.slane %v961, 5
        %v964 = vsel %vm590, %v959, %v963
        %v965 = vshrl.u32 %v235, 16
        %v967 = vrot.slane %v965, 4
        %v968 = vor.u32 %v967, %v963
        %v969 = vrot.slane %v968, 4
        %v971 = vshll.u32 %v236, 16
        %v973 = vrot.slane %v971, 5
        %v974 = vsel %vm590, %v969, %v973
        %s975 = scalar_lea.vmem %s1, 16
        %v976 = vld [vmem:[%s975] sm:$0xf]
        %v977 = vld [vmem:[%s975 + $0x4] sm:$0xf]
        %v978 = vld [vmem:[%s975 + $0x8] sm:$0xf]
        %v979 = vld [vmem:[%s975 + $0xc] sm:$0xf]
        %v980 = vunpack.c.l.b16 %v604
        %v981 = vunpack.c.l.b16 %v614
        %v982 = vunpack.c.l.b16 %v628
        %v983 = vunpack.c.l.b16 %v638
        %v984 = vunpack.c.l.b16 %v652
        %v985 = vunpack.c.l.b16 %v662
        %v986 = vunpack.c.l.b16 %v676
        %v987 = vunpack.c.l.b16 %v686
        %v988 = vunpack.c.l.b16 %v700
        %v989 = vunpack.c.l.b16 %v710
        %v990 = vunpack.c.l.b16 %v724
        %v991 = vunpack.c.l.b16 %v734
        %v992 = vunpack.c.l.b16 %v748
        %v993 = vunpack.c.l.b16 %v758
        %v994 = vunpack.c.l.b16 %v772
        %v995 = vunpack.c.l.b16 %v782
        %v996 = vunpack.c.l.b16 %v796
        %v997 = vunpack.c.l.b16 %v806
        %v998 = vunpack.c.l.b16 %v820
        %v999 = vunpack.c.l.b16 %v830
        %v1000 = vunpack.c.l.b16 %v844
        %v1001 = vunpack.c.l.b16 %v854
        %v1002 = vunpack.c.l.b16 %v868
        %v1003 = vunpack.c.l.b16 %v878
        %v1004 = vunpack.c.l.b16 %v892
        %v1005 = vunpack.c.l.b16 %v902
        %v1006 = vunpack.c.l.b16 %v916
        %v1007 = vunpack.c.l.b16 %v926
        %v1008 = vunpack.c.l.b16 %v940
        %v1009 = vunpack.c.l.b16 %v950
        %v1010 = vunpack.c.l.b16 %v964
        %v1011 = vunpack.c.l.b16 %v974
        %v1012 = vpack.c.b16 %v981, %v980
        %v1013 = vpack.c.b16 %v983, %v982
        %v1014 = vpack.c.b16 %v985, %v984
        %v1015 = vpack.c.b16 %v987, %v986
        %v1016 = vpack.c.b16 %v989, %v988
        %v1017 = vpack.c.b16 %v991, %v990
        %v1018 = vpack.c.b16 %v993, %v992
        %v1019 = vpack.c.b16 %v995, %v994
        %v1020 = vpack.c.b16 %v997, %v996
        %v1021 = vpack.c.b16 %v999, %v998
        %v1022 = vpack.c.b16 %v1001, %v1000
        %v1023 = vpack.c.b16 %v1003, %v1002
        %v1024 = vpack.c.b16 %v1005, %v1004
        %v1025 = vpack.c.b16 %v1007, %v1006
        %v1026 = vpack.c.b16 %v1009, %v1008
        %v1027 = vpack.c.b16 %v1011, %v1010
        %v1032 = vunpack.c.l.b16 %v976
        %v1033 = vunpack.c.l.b16 %v977
        %v1034 = vunpack.c.l.b16 %v978
        %v1035 = vunpack.c.l.b16 %v979
        %v1036 = vpack.c.b16 %v1033, %v1032
        %v1037 = vpack.c.b16 %v1035, %v1034
        %v1041 = vsel %vm346, %v1012, 0
        %v1044 = vsel %vm346, %v1013, 0
        %v1047 = vsel %vm346, %v1014, 0
        %v1050 = vsel %vm346, %v1015, 0
        %v1053 = vsel %vm346, %v1016, 0
        %v1056 = vsel %vm346, %v1017, 0
        %v1059 = vsel %vm346, %v1018, 0
        %v1062 = vsel %vm346, %v1019, 0
        %v1065 = vsel %vm346, %v1020, 0
        %v1068 = vsel %vm346, %v1021, 0
        %v1071 = vsel %vm346, %v1022, 0
        %v1074 = vsel %vm346, %v1023, 0
        %v1077 = vsel %vm346, %v1024, 0
        %v1080 = vsel %vm346, %v1025, 0
        %v1083 = vsel %vm346, %v1026, 0
        %v1086 = vsel %vm346, %v1027, 0
        %1088 = vmatprep.subr.bf16.mxu0 0
        %1089 = vmatpush1.bf16.msra.mxu0 %v1036
        %1090 = vmatprep.subr.bf16.mxu0 0
        %1091 = vmatpush1.bf16.msra.mxu0 %v1037
        %1092 = vmatprep.subr.bf16.mxu0 0
        %1093 = vmatpush1.bf16.msra.mxu0 0
        %1094 = vmatprep.subr.bf16.mxu0 0
        %1095 = vmatpush1.bf16.msra.mxu0 0
        %1096 = vmatprep.subr.bf16.mxu0 0
        %1097 = vmatpush1.bf16.msra.mxu0 0
        %1098 = vmatprep.subr.bf16.mxu0 0
        %1099 = vmatpush1.bf16.msra.mxu0 0
        %1100 = vmatprep.subr.bf16.mxu0 0
        %1101 = vmatpush1.bf16.msra.mxu0 0
        %1102 = vmatprep.subr.bf16.mxu0 0
        %1103 = vmatpush1.bf16.msra.mxu0 0
        %1104 = vmatprep.subr.bf16.mxu0 0
        %1105 = vmatpush1.bf16.msra.mxu0 0
        %1106 = vmatprep.subr.bf16.mxu0 0
        %1107 = vmatpush1.bf16.msra.mxu0 0
        %1108 = vmatprep.subr.bf16.mxu0 0
        %1109 = vmatpush1.bf16.msra.mxu0 0
        %1110 = vmatprep.subr.bf16.mxu0 0
        %1111 = vmatpush1.bf16.msra.mxu0 0
        %1112 = vmatprep.subr.bf16.mxu0 0
        %1113 = vmatpush1.bf16.msra.mxu0 0
        %1114 = vmatprep.subr.bf16.mxu0 0
        %1115 = vmatpush1.bf16.msra.mxu0 0
        %1116 = vmatprep.subr.bf16.mxu0 0
        %1117 = vmatpush1.bf16.msra.mxu0 0
        %1118 = vmatprep.subr.bf16.mxu0 0
        %1119 = vmatpush1.bf16.msra.mxu0 0
        %1120 = vmatprep.mubr.bf16.mxu0 0
        %1121 = vmatmul.mubr.bf16.gmra.mrb[0].mxu0 %v1041
        %v1122 = vpop.f32.mrb[0].mxu0
        %v1123 = vadd.f32 0.0, %v1122
        %v1124 = vpop.f32.mrb[0].mxu0
        %v1125 = vpop.f32.mrb[0].mxu0
        %v1126 = vadd.f32 0.0, %v1125
        %v1127 = vpop.f32.mrb[0].mxu0
        %1128 = vmatprep.mubr.bf16.mxu0 0
        %1129 = vmatmul.mubr.bf16.gmra.mrb[0].mxu0 %v1044
        %v1130 = vpop.f32.mrb[0].mxu0
        %v1131 = vadd.f32 0.0, %v1130
        %v1132 = vpop.f32.mrb[0].mxu0
        %v1133 = vpop.f32.mrb[0].mxu0
        %v1134 = vadd.f32 0.0, %v1133
        %v1135 = vpop.f32.mrb[0].mxu0
        %1136 = vmatprep.mubr.bf16.mxu0 0
        %1137 = vmatmul.mubr.bf16.gmra.mrb[0].mxu0 %v1047
        %v1138 = vpop.f32.mrb[0].mxu0
        %v1139 = vadd.f32 0.0, %v1138
        %v1140 = vpop.f32.mrb[0].mxu0
        %v1141 = vpop.f32.mrb[0].mxu0
        %v1142 = vadd.f32 0.0, %v1141
        %v1143 = vpop.f32.mrb[0].mxu0
        %1144 = vmatprep.mubr.bf16.mxu0 0
        %1145 = vmatmul.mubr.bf16.gmra.mrb[0].mxu0 %v1050
        %v1146 = vpop.f32.mrb[0].mxu0
        %v1147 = vadd.f32 0.0, %v1146
        %v1148 = vpop.f32.mrb[0].mxu0
        %v1149 = vpop.f32.mrb[0].mxu0
        %v1150 = vadd.f32 0.0, %v1149
        %v1151 = vpop.f32.mrb[0].mxu0
        %1152 = vmatprep.mubr.bf16.mxu0 0
        %1153 = vmatmul.mubr.bf16.gmra.mrb[0].mxu0 %v1053
        %v1154 = vpop.f32.mrb[0].mxu0
        %v1155 = vadd.f32 0.0, %v1154
        %v1156 = vpop.f32.mrb[0].mxu0
        %v1157 = vpop.f32.mrb[0].mxu0
        %v1158 = vadd.f32 0.0, %v1157
        %v1159 = vpop.f32.mrb[0].mxu0
        %1160 = vmatprep.mubr.bf16.mxu0 0
        %1161 = vmatmul.mubr.bf16.gmra.mrb[0].mxu0 %v1056
        %v1162 = vpop.f32.mrb[0].mxu0
        %v1163 = vadd.f32 0.0, %v1162
        %v1164 = vpop.f32.mrb[0].mxu0
        %v1165 = vpop.f32.mrb[0].mxu0
        %v1166 = vadd.f32 0.0, %v1165
        %v1167 = vpop.f32.mrb[0].mxu0
        %1168 = vmatprep.mubr.bf16.mxu0 0
        %1169 = vmatmul.mubr.bf16.gmra.mrb[0].mxu0 %v1059
        %v1170 = vpop.f32.mrb[0].mxu0
        %v1171 = vadd.f32 0.0, %v1170
        %v1172 = vpop.f32.mrb[0].mxu0
        %v1173 = vpop.f32.mrb[0].mxu0
        %v1174 = vadd.f32 0.0, %v1173
        %v1175 = vpop.f32.mrb[0].mxu0
        %1176 = vmatprep.mubr.bf16.mxu0 0
        %1177 = vmatmul.mubr.bf16.gmra.mrb[0].mxu0 %v1062
        %v1178 = vpop.f32.mrb[0].mxu0
        %v1179 = vadd.f32 0.0, %v1178
        %v1180 = vpop.f32.mrb[0].mxu0
        %v1181 = vpop.f32.mrb[0].mxu0
        %v1182 = vadd.f32 0.0, %v1181
        %v1183 = vpop.f32.mrb[0].mxu0
        %1184 = vmatprep.mubr.bf16.mxu0 0
        %1185 = vmatmul.mubr.bf16.gmra.mrb[0].mxu0 %v1065
        %v1186 = vpop.f32.mrb[0].mxu0
        %v1187 = vadd.f32 0.0, %v1186
        %v1188 = vpop.f32.mrb[0].mxu0
        %v1189 = vpop.f32.mrb[0].mxu0
        %v1190 = vadd.f32 0.0, %v1189
        %v1191 = vpop.f32.mrb[0].mxu0
        %1192 = vmatprep.mubr.bf16.mxu0 0
        %1193 = vmatmul.mubr.bf16.gmra.mrb[0].mxu0 %v1068
        %v1194 = vpop.f32.mrb[0].mxu0
        %v1195 = vadd.f32 0.0, %v1194
        %v1196 = vpop.f32.mrb[0].mxu0
        %v1197 = vpop.f32.mrb[0].mxu0
        %v1198 = vadd.f32 0.0, %v1197
        %v1199 = vpop.f32.mrb[0].mxu0
        %1200 = vmatprep.mubr.bf16.mxu0 0
        %1201 = vmatmul.mubr.bf16.gmra.mrb[0].mxu0 %v1071
        %v1202 = vpop.f32.mrb[0].mxu0
        %v1203 = vadd.f32 0.0, %v1202
        %v1204 = vpop.f32.mrb[0].mxu0
        %v1205 = vpop.f32.mrb[0].mxu0
        %v1206 = vadd.f32 0.0, %v1205
        %v1207 = vpop.f32.mrb[0].mxu0
        %1208 = vmatprep.mubr.bf16.mxu0 0
        %1209 = vmatmul.mubr.bf16.gmra.mrb[0].mxu0 %v1074
        %v1210 = vpop.f32.mrb[0].mxu0
        %v1211 = vadd.f32 0.0, %v1210
        %v1212 = vpop.f32.mrb[0].mxu0
        %v1213 = vpop.f32.mrb[0].mxu0
        %v1214 = vadd.f32 0.0, %v1213
        %v1215 = vpop.f32.mrb[0].mxu0
        %1216 = vmatprep.mubr.bf16.mxu0 0
        %1217 = vmatmul.mubr.bf16.gmra.mrb[0].mxu0 %v1077
        %v1218 = vpop.f32.mrb[0].mxu0
        %v1219 = vadd.f32 0.0, %v1218
        %v1220 = vpop.f32.mrb[0].mxu0
        %v1221 = vpop.f32.mrb[0].mxu0
        %v1222 = vadd.f32 0.0, %v1221
        %v1223 = vpop.f32.mrb[0].mxu0
        %1224 = vmatprep.mubr.bf16.mxu0 0
        %1225 = vmatmul.mubr.bf16.gmra.mrb[0].mxu0 %v1080
        %v1226 = vpop.f32.mrb[0].mxu0
        %v1227 = vadd.f32 0.0, %v1226
        %v1228 = vpop.f32.mrb[0].mxu0
        %v1229 = vpop.f32.mrb[0].mxu0
        %v1230 = vadd.f32 0.0, %v1229
        %v1231 = vpop.f32.mrb[0].mxu0
        %1232 = vmatprep.mubr.bf16.mxu0 0
        %1233 = vmatmul.mubr.bf16.gmra.mrb[0].mxu0 %v1083
        %v1234 = vpop.f32.mrb[0].mxu0
        %v1235 = vadd.f32 0.0, %v1234
        %v1236 = vpop.f32.mrb[0].mxu0
        %v1237 = vpop.f32.mrb[0].mxu0
        %v1238 = vadd.f32 0.0, %v1237
        %v1239 = vpop.f32.mrb[0].mxu0
        %1240 = vmatprep.mubr.bf16.mxu0 0
        %1241 = vmatmul.mubr.bf16.gmra.mrb[0].mxu0 %v1086
        %v1242 = vpop.f32.mrb[0].mxu0
        %v1243 = vadd.f32 0.0, %v1242
        %v1244 = vpop.f32.mrb[0].mxu0
        %v1245 = vpop.f32.mrb[0].mxu0
        %v1246 = vadd.f32 0.0, %v1245
        %v1247 = vpop.f32.mrb[0].mxu0
        %1248 = vdwg.mxu0
        %v1249 = vadd.f32 %v556, %v1123
        %v1250 = vadd.f32 %v557, %v1126
        %v1251 = vadd.f32 %v558, %v1131
        %v1252 = vadd.f32 %v559, %v1134
        %v1253 = vadd.f32 %v560, %v1139
        %v1254 = vadd.f32 %v561, %v1142
        %v1255 = vadd.f32 %v562, %v1147
        %v1256 = vadd.f32 %v563, %v1150
        %v1257 = vadd.f32 %v564, %v1155
        %v1258 = vadd.f32 %v565, %v1158
        %v1259 = vadd.f32 %v566, %v1163
        %v1260 = vadd.f32 %v567, %v1166
        %v1261 = vadd.f32 %v568, %v1171
        %v1262 = vadd.f32 %v569, %v1174
        %v1263 = vadd.f32 %v570, %v1179
        %v1264 = vadd.f32 %v571, %v1182
        %v1265 = vadd.f32 %v572, %v1187
        %v1266 = vadd.f32 %v573, %v1190
        %v1267 = vadd.f32 %v574, %v1195
        %v1268 = vadd.f32 %v575, %v1198
        %v1269 = vadd.f32 %v576, %v1203
        %v1270 = vadd.f32 %v577, %v1206
        %v1271 = vadd.f32 %v578, %v1211
        %v1272 = vadd.f32 %v579, %v1214
        %v1273 = vadd.f32 %v580, %v1219
        %v1274 = vadd.f32 %v581, %v1222
        %v1275 = vadd.f32 %v582, %v1227
        %v1276 = vadd.f32 %v583, %v1230
        %v1277 = vadd.f32 %v584, %v1235
        %v1278 = vadd.f32 %v585, %v1238
        %v1279 = vadd.f32 %v586, %v1243
        %v1280 = vadd.f32 %v587, %v1246
        %vm1297 = vcmask 1042432
        %vm1298 = vcmask 1046532
        %vm1299 = vmor %vm1297, %vm1298
        %v1300 = vrot.slane %v189, 5
        %v1301 = vrot.slane %v1300, 4
        %v1302 = vrot.slane %v190, 5
        %v1303 = vsel %vm1299, %v1301, %v1302
        %v1304 = vrot.slane %v1302, 4
        %v1305 = vrot.slane %v191, 5
        %v1306 = vsel %vm1299, %v1304, %v1305
        %v1307 = vrot.slane %v192, 5
        %v1308 = vrot.slane %v1307, 4
        %v1309 = vrot.slane %v193, 5
        %v1310 = vsel %vm1299, %v1308, %v1309
        %v1311 = vrot.slane %v1309, 4
        %v1312 = vrot.slane %v194, 5
        %v1313 = vsel %vm1299, %v1311, %v1312
        %v1314 = vrot.slane %v195, 5
        %v1315 = vrot.slane %v1314, 4
        %v1316 = vrot.slane %v196, 5
        %v1317 = vsel %vm1299, %v1315, %v1316
        %v1318 = vrot.slane %v1316, 4
        %v1319 = vrot.slane %v197, 5
        %v1320 = vsel %vm1299, %v1318, %v1319
        %v1321 = vrot.slane %v198, 5
        %v1322 = vrot.slane %v1321, 4
        %v1323 = vrot.slane %v199, 5
        %v1324 = vsel %vm1299, %v1322, %v1323
        %v1325 = vrot.slane %v1323, 4
        %v1326 = vrot.slane %v200, 5
        %v1327 = vsel %vm1299, %v1325, %v1326
        %v1328 = vrot.slane %v201, 5
        %v1329 = vrot.slane %v1328, 4
        %v1330 = vrot.slane %v202, 5
        %v1331 = vsel %vm1299, %v1329, %v1330
        %v1332 = vrot.slane %v1330, 4
        %v1333 = vrot.slane %v203, 5
        %v1334 = vsel %vm1299, %v1332, %v1333
        %v1335 = vrot.slane %v204, 5
        %v1336 = vrot.slane %v1335, 4
        %v1337 = vrot.slane %v205, 5
        %v1338 = vsel %vm1299, %v1336, %v1337
        %v1339 = vrot.slane %v1337, 4
        %v1340 = vrot.slane %v206, 5
        %v1341 = vsel %vm1299, %v1339, %v1340
        %v1342 = vrot.slane %v207, 5
        %v1343 = vrot.slane %v1342, 4
        %v1344 = vrot.slane %v208, 5
        %v1345 = vsel %vm1299, %v1343, %v1344
        %v1346 = vrot.slane %v1344, 4
        %v1347 = vrot.slane %v209, 5
        %v1348 = vsel %vm1299, %v1346, %v1347
        %v1349 = vrot.slane %v210, 5
        %v1350 = vrot.slane %v1349, 4
        %v1351 = vrot.slane %v211, 5
        %v1352 = vsel %vm1299, %v1350, %v1351
        %v1353 = vrot.slane %v1351, 4
        %v1354 = vrot.slane %v212, 5
        %v1355 = vsel %vm1299, %v1353, %v1354
        %v1356 = vrot.slane %v213, 5
        %v1357 = vrot.slane %v1356, 4
        %v1358 = vrot.slane %v214, 5
        %v1359 = vsel %vm1299, %v1357, %v1358
        %v1360 = vrot.slane %v1358, 4
        %v1361 = vrot.slane %v215, 5
        %v1362 = vsel %vm1299, %v1360, %v1361
        %v1363 = vrot.slane %v216, 5
        %v1364 = vrot.slane %v1363, 4
        %v1365 = vrot.slane %v217, 5
        %v1366 = vsel %vm1299, %v1364, %v1365
        %v1367 = vrot.slane %v1365, 4
        %v1368 = vrot.slane %v218, 5
        %v1369 = vsel %vm1299, %v1367, %v1368
        %v1370 = vrot.slane %v219, 5
        %v1371 = vrot.slane %v1370, 4
        %v1372 = vrot.slane %v220, 5
        %v1373 = vsel %vm1299, %v1371, %v1372
        %v1374 = vrot.slane %v1372, 4
        %v1375 = vrot.slane %v221, 5
        %v1376 = vsel %vm1299, %v1374, %v1375
        %v1377 = vrot.slane %v222, 5
        %v1378 = vrot.slane %v1377, 4
        %v1379 = vrot.slane %v223, 5
        %v1380 = vsel %vm1299, %v1378, %v1379
        %v1381 = vrot.slane %v1379, 4
        %v1382 = vrot.slane %v224, 5
        %v1383 = vsel %vm1299, %v1381, %v1382
        %v1384 = vrot.slane %v225, 5
        %v1385 = vrot.slane %v1384, 4
        %v1386 = vrot.slane %v226, 5
        %v1387 = vsel %vm1299, %v1385, %v1386
        %v1388 = vrot.slane %v1386, 4
        %v1389 = vrot.slane %v227, 5
        %v1390 = vsel %vm1299, %v1388, %v1389
        %v1391 = vrot.slane %v228, 5
        %v1392 = vrot.slane %v1391, 4
        %v1393 = vrot.slane %v229, 5
        %v1394 = vsel %vm1299, %v1392, %v1393
        %v1395 = vrot.slane %v1393, 4
        %v1396 = vrot.slane %v230, 5
        %v1397 = vsel %vm1299, %v1395, %v1396
        %v1398 = vrot.slane %v231, 5
        %v1399 = vrot.slane %v1398, 4
        %v1400 = vrot.slane %v232, 5
        %v1401 = vsel %vm1299, %v1399, %v1400
        %v1402 = vrot.slane %v1400, 4
        %v1403 = vrot.slane %v233, 5
        %v1404 = vsel %vm1299, %v1402, %v1403
        %v1405 = vrot.slane %v234, 5
        %v1406 = vrot.slane %v1405, 4
        %v1407 = vrot.slane %v235, 5
        %v1408 = vsel %vm1299, %v1406, %v1407
        %v1409 = vrot.slane %v1407, 4
        %v1410 = vrot.slane %v236, 5
        %v1411 = vsel %vm1299, %v1409, %v1410
        %s1412 = scalar_lea.vmem %s1, 32
        %v1413 = vld [vmem:[%s1412] sm:$0xf]
        %v1414 = vld [vmem:[%s1412 + $0x4] sm:$0xf]
        %v1415 = vld [vmem:[%s1412 + $0x8] sm:$0xf]
        %v1416 = vld [vmem:[%s1412 + $0xc] sm:$0xf]
        %v1417 = vunpack.c.l.b16 %v1303
        %v1418 = vunpack.c.l.b16 %v1306
        %v1419 = vunpack.c.l.b16 %v1310
        %v1420 = vunpack.c.l.b16 %v1313
        %v1421 = vunpack.c.l.b16 %v1317
        %v1422 = vunpack.c.l.b16 %v1320
        %v1423 = vunpack.c.l.b16 %v1324
        %v1424 = vunpack.c.l.b16 %v1327
        %v1425 = vunpack.c.l.b16 %v1331
        %v1426 = vunpack.c.l.b16 %v1334
        %v1427 = vunpack.c.l.b16 %v1338
        %v1428 = vunpack.c.l.b16 %v1341
        %v1429 = vunpack.c.l.b16 %v1345
        %v1430 = vunpack.c.l.b16 %v1348
        %v1431 = vunpack.c.l.b16 %v1352
        %v1432 = vunpack.c.l.b16 %v1355
        %v1433 = vunpack.c.l.b16 %v1359
        %v1434 = vunpack.c.l.b16 %v1362
        %v1435 = vunpack.c.l.b16 %v1366
        %v1436 = vunpack.c.l.b16 %v1369
        %v1437 = vunpack.c.l.b16 %v1373
        %v1438 = vunpack.c.l.b16 %v1376
        %v1439 = vunpack.c.l.b16 %v1380
        %v1440 = vunpack.c.l.b16 %v1383
        %v1441 = vunpack.c.l.b16 %v1387
        %v1442 = vunpack.c.l.b16 %v1390
        %v1443 = vunpack.c.l.b16 %v1394
        %v1444 = vunpack.c.l.b16 %v1397
        %v1445 = vunpack.c.l.b16 %v1401
        %v1446 = vunpack.c.l.b16 %v1404
        %v1447 = vunpack.c.l.b16 %v1408
        %v1448 = vunpack.c.l.b16 %v1411
        %v1449 = vpack.c.b16 %v1418, %v1417
        %v1450 = vpack.c.b16 %v1420, %v1419
        %v1451 = vpack.c.b16 %v1422, %v1421
        %v1452 = vpack.c.b16 %v1424, %v1423
        %v1453 = vpack.c.b16 %v1426, %v1425
        %v1454 = vpack.c.b16 %v1428, %v1427
        %v1455 = vpack.c.b16 %v1430, %v1429
        %v1456 = vpack.c.b16 %v1432, %v1431
        %v1457 = vpack.c.b16 %v1434, %v1433
        %v1458 = vpack.c.b16 %v1436, %v1435
        %v1459 = vpack.c.b16 %v1438, %v1437
        %v1460 = vpack.c.b16 %v1440, %v1439
        %v1461 = vpack.c.b16 %v1442, %v1441
        %v1462 = vpack.c.b16 %v1444, %v1443
        %v1463 = vpack.c.b16 %v1446, %v1445
        %v1464 = vpack.c.b16 %v1448, %v1447
        %v1469 = vunpack.c.l.b16 %v1413
        %v1470 = vunpack.c.l.b16 %v1414
        %v1471 = vunpack.c.l.b16 %v1415
        %v1472 = vunpack.c.l.b16 %v1416
        %v1473 = vpack.c.b16 %v1470, %v1469
        %v1474 = vpack.c.b16 %v1472, %v1471
        %v1478 = vsel %vm346, %v1449, 0
        %v1481 = vsel %vm346, %v1450, 0
        %v1484 = vsel %vm346, %v1451, 0
        %v1487 = vsel %vm346, %v1452, 0
        %v1490 = vsel %vm346, %v1453, 0
        %v1493 = vsel %vm346, %v1454, 0
        %v1496 = vsel %vm346, %v1455, 0
        %v1499 = vsel %vm346, %v1456, 0
        %v1502 = vsel %vm346, %v1457, 0
        %v1505 = vsel %vm346, %v1458, 0
        %v1508 = vsel %vm346, %v1459, 0
        %v1511 = vsel %vm346, %v1460, 0
        %v1514 = vsel %vm346, %v1461, 0
        %v1517 = vsel %vm346, %v1462, 0
        %v1520 = vsel %vm346, %v1463, 0
        %v1523 = vsel %vm346, %v1464, 0
        %1525 = vmatprep.subr.bf16.mxu0 0
        %1526 = vmatpush1.bf16.msra.mxu0 %v1473
        %1527 = vmatprep.subr.bf16.mxu0 0
        %1528 = vmatpush1.bf16.msra.mxu0 %v1474
        %1529 = vmatprep.subr.bf16.mxu0 0
        %1530 = vmatpush1.bf16.msra.mxu0 0
        %1531 = vmatprep.subr.bf16.mxu0 0
        %1532 = vmatpush1.bf16.msra.mxu0 0
        %1533 = vmatprep.subr.bf16.mxu0 0
        %1534 = vmatpush1.bf16.msra.mxu0 0
        %1535 = vmatprep.subr.bf16.mxu0 0
        %1536 = vmatpush1.bf16.msra.mxu0 0
        %1537 = vmatprep.subr.bf16.mxu0 0
        %1538 = vmatpush1.bf16.msra.mxu0 0
        %1539 = vmatprep.subr.bf16.mxu0 0
        %1540 = vmatpush1.bf16.msra.mxu0 0
        %1541 = vmatprep.subr.bf16.mxu0 0
        %1542 = vmatpush1.bf16.msra.mxu0 0
        %1543 = vmatprep.subr.bf16.mxu0 0
        %1544 = vmatpush1.bf16.msra.mxu0 0
        %1545 = vmatprep.subr.bf16.mxu0 0
        %1546 = vmatpush1.bf16.msra.mxu0 0
        %1547 = vmatprep.subr.bf16.mxu0 0
        %1548 = vmatpush1.bf16.msra.mxu0 0
        %1549 = vmatprep.subr.bf16.mxu0 0
        %1550 = vmatpush1.bf16.msra.mxu0 0
        %1551 = vmatprep.subr.bf16.mxu0 0
        %1552 = vmatpush1.bf16.msra.mxu0 0
        %1553 = vmatprep.subr.bf16.mxu0 0
        %1554 = vmatpush1.bf16.msra.mxu0 0
        %1555 = vmatprep.subr.bf16.mxu0 0
        %1556 = vmatpush1.bf16.msra.mxu0 0
        %1557 = vmatprep.mubr.bf16.mxu0 0
        %1558 = vmatmul.mubr.bf16.gmra.mrb[0].mxu0 %v1478
        %v1559 = vpop.f32.mrb[0].mxu0
        %v1560 = vadd.f32 0.0, %v1559
        %v1561 = vpop.f32.mrb[0].mxu0
        %v1562 = vpop.f32.mrb[0].mxu0
        %v1563 = vadd.f32 0.0, %v1562
        %v1564 = vpop.f32.mrb[0].mxu0
        %1565 = vmatprep.mubr.bf16.mxu0 0
        %1566 = vmatmul.mubr.bf16.gmra.mrb[0].mxu0 %v1481
        %v1567 = vpop.f32.mrb[0].mxu0
        %v1568 = vadd.f32 0.0, %v1567
        %v1569 = vpop.f32.mrb[0].mxu0
        %v1570 = vpop.f32.mrb[0].mxu0
        %v1571 = vadd.f32 0.0, %v1570
        %v1572 = vpop.f32.mrb[0].mxu0
        %1573 = vmatprep.mubr.bf16.mxu0 0
        %1574 = vmatmul.mubr.bf16.gmra.mrb[0].mxu0 %v1484
        %v1575 = vpop.f32.mrb[0].mxu0
        %v1576 = vadd.f32 0.0, %v1575
        %v1577 = vpop.f32.mrb[0].mxu0
        %v1578 = vpop.f32.mrb[0].mxu0
        %v1579 = vadd.f32 0.0, %v1578
        %v1580 = vpop.f32.mrb[0].mxu0
        %1581 = vmatprep.mubr.bf16.mxu0 0
        %1582 = vmatmul.mubr.bf16.gmra.mrb[0].mxu0 %v1487
        %v1583 = vpop.f32.mrb[0].mxu0
        %v1584 = vadd.f32 0.0, %v1583
        %v1585 = vpop.f32.mrb[0].mxu0
        %v1586 = vpop.f32.mrb[0].mxu0
        %v1587 = vadd.f32 0.0, %v1586
        %v1588 = vpop.f32.mrb[0].mxu0
        %1589 = vmatprep.mubr.bf16.mxu0 0
        %1590 = vmatmul.mubr.bf16.gmra.mrb[0].mxu0 %v1490
        %v1591 = vpop.f32.mrb[0].mxu0
        %v1592 = vadd.f32 0.0, %v1591
        %v1593 = vpop.f32.mrb[0].mxu0
        %v1594 = vpop.f32.mrb[0].mxu0
        %v1595 = vadd.f32 0.0, %v1594
        %v1596 = vpop.f32.mrb[0].mxu0
        %1597 = vmatprep.mubr.bf16.mxu0 0
        %1598 = vmatmul.mubr.bf16.gmra.mrb[0].mxu0 %v1493
        %v1599 = vpop.f32.mrb[0].mxu0
        %v1600 = vadd.f32 0.0, %v1599
        %v1601 = vpop.f32.mrb[0].mxu0
        %v1602 = vpop.f32.mrb[0].mxu0
        %v1603 = vadd.f32 0.0, %v1602
        %v1604 = vpop.f32.mrb[0].mxu0
        %1605 = vmatprep.mubr.bf16.mxu0 0
        %1606 = vmatmul.mubr.bf16.gmra.mrb[0].mxu0 %v1496
        %v1607 = vpop.f32.mrb[0].mxu0
        %v1608 = vadd.f32 0.0, %v1607
        %v1609 = vpop.f32.mrb[0].mxu0
        %v1610 = vpop.f32.mrb[0].mxu0
        %v1611 = vadd.f32 0.0, %v1610
        %v1612 = vpop.f32.mrb[0].mxu0
        %1613 = vmatprep.mubr.bf16.mxu0 0
        %1614 = vmatmul.mubr.bf16.gmra.mrb[0].mxu0 %v1499
        %v1615 = vpop.f32.mrb[0].mxu0
        %v1616 = vadd.f32 0.0, %v1615
        %v1617 = vpop.f32.mrb[0].mxu0
        %v1618 = vpop.f32.mrb[0].mxu0
        %v1619 = vadd.f32 0.0, %v1618
        %v1620 = vpop.f32.mrb[0].mxu0
        %1621 = vmatprep.mubr.bf16.mxu0 0
        %1622 = vmatmul.mubr.bf16.gmra.mrb[0].mxu0 %v1502
        %v1623 = vpop.f32.mrb[0].mxu0
        %v1624 = vadd.f32 0.0, %v1623
        %v1625 = vpop.f32.mrb[0].mxu0
        %v1626 = vpop.f32.mrb[0].mxu0
        %v1627 = vadd.f32 0.0, %v1626
        %v1628 = vpop.f32.mrb[0].mxu0
        %1629 = vmatprep.mubr.bf16.mxu0 0
        %1630 = vmatmul.mubr.bf16.gmra.mrb[0].mxu0 %v1505
        %v1631 = vpop.f32.mrb[0].mxu0
        %v1632 = vadd.f32 0.0, %v1631
        %v1633 = vpop.f32.mrb[0].mxu0
        %v1634 = vpop.f32.mrb[0].mxu0
        %v1635 = vadd.f32 0.0, %v1634
        %v1636 = vpop.f32.mrb[0].mxu0
        %1637 = vmatprep.mubr.bf16.mxu0 0
        %1638 = vmatmul.mubr.bf16.gmra.mrb[0].mxu0 %v1508
        %v1639 = vpop.f32.mrb[0].mxu0
        %v1640 = vadd.f32 0.0, %v1639
        %v1641 = vpop.f32.mrb[0].mxu0
        %v1642 = vpop.f32.mrb[0].mxu0
        %v1643 = vadd.f32 0.0, %v1642
        %v1644 = vpop.f32.mrb[0].mxu0
        %1645 = vmatprep.mubr.bf16.mxu0 0
        %1646 = vmatmul.mubr.bf16.gmra.mrb[0].mxu0 %v1511
        %v1647 = vpop.f32.mrb[0].mxu0
        %v1648 = vadd.f32 0.0, %v1647
        %v1649 = vpop.f32.mrb[0].mxu0
        %v1650 = vpop.f32.mrb[0].mxu0
        %v1651 = vadd.f32 0.0, %v1650
        %v1652 = vpop.f32.mrb[0].mxu0
        %1653 = vmatprep.mubr.bf16.mxu0 0
        %1654 = vmatmul.mubr.bf16.gmra.mrb[0].mxu0 %v1514
        %v1655 = vpop.f32.mrb[0].mxu0
        %v1656 = vadd.f32 0.0, %v1655
        %v1657 = vpop.f32.mrb[0].mxu0
        %v1658 = vpop.f32.mrb[0].mxu0
        %v1659 = vadd.f32 0.0, %v1658
        %v1660 = vpop.f32.mrb[0].mxu0
        %1661 = vmatprep.mubr.bf16.mxu0 0
        %1662 = vmatmul.mubr.bf16.gmra.mrb[0].mxu0 %v1517
        %v1663 = vpop.f32.mrb[0].mxu0
        %v1664 = vadd.f32 0.0, %v1663
        %v1665 = vpop.f32.mrb[0].mxu0
        %v1666 = vpop.f32.mrb[0].mxu0
        %v1667 = vadd.f32 0.0, %v1666
        %v1668 = vpop.f32.mrb[0].mxu0
        %1669 = vmatprep.mubr.bf16.mxu0 0
        %1670 = vmatmul.mubr.bf16.gmra.mrb[0].mxu0 %v1520
        %v1671 = vpop.f32.mrb[0].mxu0
        %v1672 = vadd.f32 0.0, %v1671
        %v1673 = vpop.f32.mrb[0].mxu0
        %v1674 = vpop.f32.mrb[0].mxu0
        %v1675 = vadd.f32 0.0, %v1674
        %v1676 = vpop.f32.mrb[0].mxu0
        %1677 = vmatprep.mubr.bf16.mxu0 0
        %1678 = vmatmul.mubr.bf16.gmra.mrb[0].mxu0 %v1523
        %v1679 = vpop.f32.mrb[0].mxu0
        %v1680 = vadd.f32 0.0, %v1679
        %v1681 = vpop.f32.mrb[0].mxu0
        %v1682 = vpop.f32.mrb[0].mxu0
        %v1683 = vadd.f32 0.0, %v1682
        %v1684 = vpop.f32.mrb[0].mxu0
        %1685 = vdwg.mxu0
        %v1686 = vadd.f32 %v1249, %v1560
        %v1687 = vadd.f32 %v1250, %v1563
        %v1688 = vadd.f32 %v1251, %v1568
        %v1689 = vadd.f32 %v1252, %v1571
        %v1690 = vadd.f32 %v1253, %v1576
        %v1691 = vadd.f32 %v1254, %v1579
        %v1692 = vadd.f32 %v1255, %v1584
        %v1693 = vadd.f32 %v1256, %v1587
        %v1694 = vadd.f32 %v1257, %v1592
        %v1695 = vadd.f32 %v1258, %v1595
        %v1696 = vadd.f32 %v1259, %v1600
        %v1697 = vadd.f32 %v1260, %v1603
        %v1698 = vadd.f32 %v1261, %v1608
        %v1699 = vadd.f32 %v1262, %v1611
        %v1700 = vadd.f32 %v1263, %v1616
        %v1701 = vadd.f32 %v1264, %v1619
        %v1702 = vadd.f32 %v1265, %v1624
        %v1703 = vadd.f32 %v1266, %v1627
        %v1704 = vadd.f32 %v1267, %v1632
        %v1705 = vadd.f32 %v1268, %v1635
        %v1706 = vadd.f32 %v1269, %v1640
        %v1707 = vadd.f32 %v1270, %v1643
        %v1708 = vadd.f32 %v1271, %v1648
        %v1709 = vadd.f32 %v1272, %v1651
        %v1710 = vadd.f32 %v1273, %v1656
        %v1711 = vadd.f32 %v1274, %v1659
        %v1712 = vadd.f32 %v1275, %v1664
        %v1713 = vadd.f32 %v1276, %v1667
        %v1714 = vadd.f32 %v1277, %v1672
        %v1715 = vadd.f32 %v1278, %v1675
        %v1716 = vadd.f32 %v1279, %v1680
        %v1717 = vadd.f32 %v1280, %v1683
        %s1718 = scalar_lea.vmem %s1, 48
        %v1719 = vld [vmem:[%s1718] sm:$0xf]
        %v1720 = vld [vmem:[%s1718 + $0x4] sm:$0xf]
        %v1721 = vld [vmem:[%s1718 + $0x8] sm:$0xf]
        %v1722 = vld [vmem:[%s1718 + $0xc] sm:$0xf]
        %v1725 = vunpack.c.l.b16 %v237
        %v1726 = vunpack.c.l.b16 %v238
        %v1727 = vpack.c.b16 %v1726, %v1725
        %v1732 = vunpack.c.l.b16 %v1719
        %v1733 = vunpack.c.l.b16 %v1720
        %v1734 = vunpack.c.l.b16 %v1721
        %v1735 = vunpack.c.l.b16 %v1722
        %v1736 = vpack.c.b16 %v1733, %v1732
        %v1737 = vpack.c.b16 %v1735, %v1734
        %v1741 = vsel %vm346, %v1727, 0
        %1743 = vmatprep.subr.bf16.mxu0 0
        %1744 = vmatpush1.bf16.msra.mxu0 %v1736
        %1745 = vmatprep.subr.bf16.mxu0 0
        %1746 = vmatpush1.bf16.msra.mxu0 %v1737
        %1747 = vmatprep.subr.bf16.mxu0 0
        %1748 = vmatpush1.bf16.msra.mxu0 0
        %1749 = vmatprep.subr.bf16.mxu0 0
        %1750 = vmatpush1.bf16.msra.mxu0 0
        %1751 = vmatprep.subr.bf16.mxu0 0
        %1752 = vmatpush1.bf16.msra.mxu0 0
        %1753 = vmatprep.subr.bf16.mxu0 0
        %1754 = vmatpush1.bf16.msra.mxu0 0
        %1755 = vmatprep.subr.bf16.mxu0 0
        %1756 = vmatpush1.bf16.msra.mxu0 0
        %1757 = vmatprep.subr.bf16.mxu0 0
        %1758 = vmatpush1.bf16.msra.mxu0 0
        %1759 = vmatprep.subr.bf16.mxu0 0
        %1760 = vmatpush1.bf16.msra.mxu0 0
        %1761 = vmatprep.subr.bf16.mxu0 0
        %1762 = vmatpush1.bf16.msra.mxu0 0
        %1763 = vmatprep.subr.bf16.mxu0 0
        %1764 = vmatpush1.bf16.msra.mxu0 0
        %1765 = vmatprep.subr.bf16.mxu0 0
        %1766 = vmatpush1.bf16.msra.mxu0 0
        %1767 = vmatprep.subr.bf16.mxu0 0
        %1768 = vmatpush1.bf16.msra.mxu0 0
        %1769 = vmatprep.subr.bf16.mxu0 0
        %1770 = vmatpush1.bf16.msra.mxu0 0
        %1771 = vmatprep.subr.bf16.mxu0 0
        %1772 = vmatpush1.bf16.msra.mxu0 0
        %1773 = vmatprep.subr.bf16.mxu0 0
        %1774 = vmatpush1.bf16.msra.mxu0 0
        %1775 = vmatprep.mubr.bf16.mxu0 0
        %1776 = vmatmul.mubr.bf16.gmra.mrb[0].mxu0 %v351
        %v1777 = vpop.f32.mrb[0].mxu0
        %v1778 = vadd.f32 0.0, %v1777
        %v1779 = vpop.f32.mrb[0].mxu0
        %v1780 = vpop.f32.mrb[0].mxu0
        %v1781 = vadd.f32 0.0, %v1780
        %v1782 = vpop.f32.mrb[0].mxu0
        %1783 = vmatprep.mubr.bf16.mxu0 0
        %1784 = vmatmul.mubr.bf16.gmra.mrb[0].mxu0 %v354
        %v1785 = vpop.f32.mrb[0].mxu0
        %v1786 = vadd.f32 0.0, %v1785
        %v1787 = vpop.f32.mrb[0].mxu0
        %v1788 = vpop.f32.mrb[0].mxu0
        %v1789 = vadd.f32 0.0, %v1788
        %v1790 = vpop.f32.mrb[0].mxu0
        %1791 = vmatprep.mubr.bf16.mxu0 0
        %1792 = vmatmul.mubr.bf16.gmra.mrb[0].mxu0 %v357
        %v1793 = vpop.f32.mrb[0].mxu0
        %v1794 = vadd.f32 0.0, %v1793
        %v1795 = vpop.f32.mrb[0].mxu0
        %v1796 = vpop.f32.mrb[0].mxu0
        %v1797 = vadd.f32 0.0, %v1796
        %v1798 = vpop.f32.mrb[0].mxu0
        %1799 = vmatprep.mubr.bf16.mxu0 0
        %1800 = vmatmul.mubr.bf16.gmra.mrb[0].mxu0 %v360
        %v1801 = vpop.f32.mrb[0].mxu0
        %v1802 = vadd.f32 0.0, %v1801
        %v1803 = vpop.f32.mrb[0].mxu0
        %v1804 = vpop.f32.mrb[0].mxu0
        %v1805 = vadd.f32 0.0, %v1804
        %v1806 = vpop.f32.mrb[0].mxu0
        %1807 = vmatprep.mubr.bf16.mxu0 0
        %1808 = vmatmul.mubr.bf16.gmra.mrb[0].mxu0 %v363
        %v1809 = vpop.f32.mrb[0].mxu0
        %v1810 = vadd.f32 0.0, %v1809
        %v1811 = vpop.f32.mrb[0].mxu0
        %v1812 = vpop.f32.mrb[0].mxu0
        %v1813 = vadd.f32 0.0, %v1812
        %v1814 = vpop.f32.mrb[0].mxu0
        %1815 = vmatprep.mubr.bf16.mxu0 0
        %1816 = vmatmul.mubr.bf16.gmra.mrb[0].mxu0 %v366
        %v1817 = vpop.f32.mrb[0].mxu0
        %v1818 = vadd.f32 0.0, %v1817
        %v1819 = vpop.f32.mrb[0].mxu0
        %v1820 = vpop.f32.mrb[0].mxu0
        %v1821 = vadd.f32 0.0, %v1820
        %v1822 = vpop.f32.mrb[0].mxu0
        %1823 = vmatprep.mubr.bf16.mxu0 0
        %1824 = vmatmul.mubr.bf16.gmra.mrb[0].mxu0 %v369
        %v1825 = vpop.f32.mrb[0].mxu0
        %v1826 = vadd.f32 0.0, %v1825
        %v1827 = vpop.f32.mrb[0].mxu0
        %v1828 = vpop.f32.mrb[0].mxu0
        %v1829 = vadd.f32 0.0, %v1828
        %v1830 = vpop.f32.mrb[0].mxu0
        %1831 = vmatprep.mubr.bf16.mxu0 0
        %1832 = vmatmul.mubr.bf16.gmra.mrb[0].mxu0 %v372
        %v1833 = vpop.f32.mrb[0].mxu0
        %v1834 = vadd.f32 0.0, %v1833
        %v1835 = vpop.f32.mrb[0].mxu0
        %v1836 = vpop.f32.mrb[0].mxu0
        %v1837 = vadd.f32 0.0, %v1836
        %v1838 = vpop.f32.mrb[0].mxu0
        %1839 = vmatprep.mubr.bf16.mxu0 0
        %1840 = vmatmul.mubr.bf16.gmra.mrb[0].mxu0 %v375
        %v1841 = vpop.f32.mrb[0].mxu0
        %v1842 = vadd.f32 0.0, %v1841
        %v1843 = vpop.f32.mrb[0].mxu0
        %v1844 = vpop.f32.mrb[0].mxu0
        %v1845 = vadd.f32 0.0, %v1844
        %v1846 = vpop.f32.mrb[0].mxu0
        %1847 = vmatprep.mubr.bf16.mxu0 0
        %1848 = vmatmul.mubr.bf16.gmra.mrb[0].mxu0 %v378
        %v1849 = vpop.f32.mrb[0].mxu0
        %v1850 = vadd.f32 0.0, %v1849
        %v1851 = vpop.f32.mrb[0].mxu0
        %v1852 = vpop.f32.mrb[0].mxu0
        %v1853 = vadd.f32 0.0, %v1852
        %v1854 = vpop.f32.mrb[0].mxu0
        %1855 = vmatprep.mubr.bf16.mxu0 0
        %1856 = vmatmul.mubr.bf16.gmra.mrb[0].mxu0 %v381
        %v1857 = vpop.f32.mrb[0].mxu0
        %v1858 = vadd.f32 0.0, %v1857
        %v1859 = vpop.f32.mrb[0].mxu0
        %v1860 = vpop.f32.mrb[0].mxu0
        %v1861 = vadd.f32 0.0, %v1860
        %v1862 = vpop.f32.mrb[0].mxu0
        %1863 = vmatprep.mubr.bf16.mxu0 0
        %1864 = vmatmul.mubr.bf16.gmra.mrb[0].mxu0 %v384
        %v1865 = vpop.f32.mrb[0].mxu0
        %v1866 = vadd.f32 0.0, %v1865
        %v1867 = vpop.f32.mrb[0].mxu0
        %v1868 = vpop.f32.mrb[0].mxu0
        %v1869 = vadd.f32 0.0, %v1868
        %v1870 = vpop.f32.mrb[0].mxu0
        %1871 = vmatprep.mubr.bf16.mxu0 0
        %1872 = vmatmul.mubr.bf16.gmra.mrb[0].mxu0 %v387
        %v1873 = vpop.f32.mrb[0].mxu0
        %v1874 = vadd.f32 0.0, %v1873
        %v1875 = vpop.f32.mrb[0].mxu0
        %v1876 = vpop.f32.mrb[0].mxu0
        %v1877 = vadd.f32 0.0, %v1876
        %v1878 = vpop.f32.mrb[0].mxu0
        %1879 = vmatprep.mubr.bf16.mxu0 0
        %1880 = vmatmul.mubr.bf16.gmra.mrb[0].mxu0 %v390
        %v1881 = vpop.f32.mrb[0].mxu0
        %v1882 = vadd.f32 0.0, %v1881
        %v1883 = vpop.f32.mrb[0].mxu0
        %v1884 = vpop.f32.mrb[0].mxu0
        %v1885 = vadd.f32 0.0, %v1884
        %v1886 = vpop.f32.mrb[0].mxu0
        %1887 = vmatprep.mubr.bf16.mxu0 0
        %1888 = vmatmul.mubr.bf16.gmra.mrb[0].mxu0 %v393
        %v1889 = vpop.f32.mrb[0].mxu0
        %v1890 = vadd.f32 0.0, %v1889
        %v1891 = vpop.f32.mrb[0].mxu0
        %v1892 = vpop.f32.mrb[0].mxu0
        %v1893 = vadd.f32 0.0, %v1892
        %v1894 = vpop.f32.mrb[0].mxu0
        %1895 = vmatprep.mubr.bf16.mxu0 0
        %1896 = vmatmul.mubr.bf16.gmra.mrb[0].mxu0 %v1741
        %v1897 = vpop.f32.mrb[0].mxu0
        %v1898 = vadd.f32 0.0, %v1897
        %v1899 = vpop.f32.mrb[0].mxu0
        %v1900 = vpop.f32.mrb[0].mxu0
        %v1901 = vadd.f32 0.0, %v1900
        %v1902 = vpop.f32.mrb[0].mxu0
        %1903 = vdwg.mxu0
        %v1904 = vadd.f32 %v1686, %v1778
        %v1905 = vadd.f32 %v1687, %v1781
        %v1906 = vadd.f32 %v1688, %v1786
        %v1907 = vadd.f32 %v1689, %v1789
        %v1908 = vadd.f32 %v1690, %v1794
        %v1909 = vadd.f32 %v1691, %v1797
        %v1910 = vadd.f32 %v1692, %v1802
        %v1911 = vadd.f32 %v1693, %v1805
        %v1912 = vadd.f32 %v1694, %v1810
        %v1913 = vadd.f32 %v1695, %v1813
        %v1914 = vadd.f32 %v1696, %v1818
        %v1915 = vadd.f32 %v1697, %v1821
        %v1916 = vadd.f32 %v1698, %v1826
        %v1917 = vadd.f32 %v1699, %v1829
        %v1918 = vadd.f32 %v1700, %v1834
        %v1919 = vadd.f32 %v1701, %v1837
        %v1920 = vadd.f32 %v1702, %v1842
        %v1921 = vadd.f32 %v1703, %v1845
        %v1922 = vadd.f32 %v1704, %v1850
        %v1923 = vadd.f32 %v1705, %v1853
        %v1924 = vadd.f32 %v1706, %v1858
        %v1925 = vadd.f32 %v1707, %v1861
        %v1926 = vadd.f32 %v1708, %v1866
        %v1927 = vadd.f32 %v1709, %v1869
        %v1928 = vadd.f32 %v1710, %v1874
        %v1929 = vadd.f32 %v1711, %v1877
        %v1930 = vadd.f32 %v1712, %v1882
        %v1931 = vadd.f32 %v1713, %v1885
        %v1932 = vadd.f32 %v1714, %v1890
        %v1933 = vadd.f32 %v1715, %v1893
        %v1934 = vadd.f32 %v1716, %v1898
        %v1935 = vadd.f32 %v1717, %v1901
        %v1937 = vshrl.u32 %v237, 16
        %v1939 = vrot.slane %v1937, 4
        %v1940 = vshll.u32 %v237, 16
        %v1942 = vrot.slane %v1940, 5
        %v1943 = vor.u32 %v1939, %v1942
        %v1944 = vrot.slane %v1943, 4
        %v1946 = vshll.u32 %v238, 16
        %v1948 = vrot.slane %v1946, 5
        %v1949 = vsel %vm590, %v1944, %v1948
        %v1950 = vshrl.u32 %v238, 16
        %v1952 = vrot.slane %v1950, 4
        %v1953 = vor.u32 %v1952, %v1948
        %v1954 = vrot.slane %v1953, 4
        %v1956 = vshll.u32 %v239, 16
        %v1958 = vrot.slane %v1956, 5
        %v1959 = vsel %vm590, %v1954, %v1958
        %s1960 = scalar_lea.vmem %s1, 64
        %v1961 = vld [vmem:[%s1960] sm:$0xf]
        %v1962 = vld [vmem:[%s1960 + $0x4] sm:$0xf]
        %v1963 = vld [vmem:[%s1960 + $0x8] sm:$0xf]
        %v1964 = vld [vmem:[%s1960 + $0xc] sm:$0xf]
        %v1965 = vunpack.c.l.b16 %v1949
        %v1966 = vunpack.c.l.b16 %v1959
        %v1967 = vpack.c.b16 %v1966, %v1965
        %v1972 = vunpack.c.l.b16 %v1961
        %v1973 = vunpack.c.l.b16 %v1962
        %v1974 = vunpack.c.l.b16 %v1963
        %v1975 = vunpack.c.l.b16 %v1964
        %v1976 = vpack.c.b16 %v1973, %v1972
        %v1977 = vpack.c.b16 %v1975, %v1974
        %v1981 = vsel %vm346, %v1967, 0
        %1983 = vmatprep.subr.bf16.mxu0 0
        %1984 = vmatpush1.bf16.msra.mxu0 %v1976
        %1985 = vmatprep.subr.bf16.mxu0 0
        %1986 = vmatpush1.bf16.msra.mxu0 %v1977
        %1987 = vmatprep.subr.bf16.mxu0 0
        %1988 = vmatpush1.bf16.msra.mxu0 0
        %1989 = vmatprep.subr.bf16.mxu0 0
        %1990 = vmatpush1.bf16.msra.mxu0 0
        %1991 = vmatprep.subr.bf16.mxu0 0
        %1992 = vmatpush1.bf16.msra.mxu0 0
        %1993 = vmatprep.subr.bf16.mxu0 0
        %1994 = vmatpush1.bf16.msra.mxu0 0
        %1995 = vmatprep.subr.bf16.mxu0 0
        %1996 = vmatpush1.bf16.msra.mxu0 0
        %1997 = vmatprep.subr.bf16.mxu0 0
        %1998 = vmatpush1.bf16.msra.mxu0 0
        %1999 = vmatprep.subr.bf16.mxu0 0
        %2000 = vmatpush1.bf16.msra.mxu0 0
        %2001 = vmatprep.subr.bf16.mxu0 0
        %2002 = vmatpush1.bf16.msra.mxu0 0
        %2003 = vmatprep.subr.bf16.mxu0 0
        %2004 = vmatpush1.bf16.msra.mxu0 0
        %2005 = vmatprep.subr.bf16.mxu0 0
        %2006 = vmatpush1.bf16.msra.mxu0 0
        %2007 = vmatprep.subr.bf16.mxu0 0
        %2008 = vmatpush1.bf16.msra.mxu0 0
        %2009 = vmatprep.subr.bf16.mxu0 0
        %2010 = vmatpush1.bf16.msra.mxu0 0
        %2011 = vmatprep.subr.bf16.mxu0 0
        %2012 = vmatpush1.bf16.msra.mxu0 0
        %2013 = vmatprep.subr.bf16.mxu0 0
        %2014 = vmatpush1.bf16.msra.mxu0 0
        %2015 = vmatprep.mubr.bf16.mxu0 0
        %2016 = vmatmul.mubr.bf16.gmra.mrb[0].mxu0 %v1044
        %v2017 = vpop.f32.mrb[0].mxu0
        %v2018 = vadd.f32 0.0, %v2017
        %v2019 = vpop.f32.mrb[0].mxu0
        %v2020 = vpop.f32.mrb[0].mxu0
        %v2021 = vadd.f32 0.0, %v2020
        %v2022 = vpop.f32.mrb[0].mxu0
        %2023 = vmatprep.mubr.bf16.mxu0 0
        %2024 = vmatmul.mubr.bf16.gmra.mrb[0].mxu0 %v1047
        %v2025 = vpop.f32.mrb[0].mxu0
        %v2026 = vadd.f32 0.0, %v2025
        %v2027 = vpop.f32.mrb[0].mxu0
        %v2028 = vpop.f32.mrb[0].mxu0
        %v2029 = vadd.f32 0.0, %v2028
        %v2030 = vpop.f32.mrb[0].mxu0
        %2031 = vmatprep.mubr.bf16.mxu0 0
        %2032 = vmatmul.mubr.bf16.gmra.mrb[0].mxu0 %v1050
        %v2033 = vpop.f32.mrb[0].mxu0
        %v2034 = vadd.f32 0.0, %v2033
        %v2035 = vpop.f32.mrb[0].mxu0
        %v2036 = vpop.f32.mrb[0].mxu0
        %v2037 = vadd.f32 0.0, %v2036
        %v2038 = vpop.f32.mrb[0].mxu0
        %2039 = vmatprep.mubr.bf16.mxu0 0
        %2040 = vmatmul.mubr.bf16.gmra.mrb[0].mxu0 %v1053
        %v2041 = vpop.f32.mrb[0].mxu0
        %v2042 = vadd.f32 0.0, %v2041
        %v2043 = vpop.f32.mrb[0].mxu0
        %v2044 = vpop.f32.mrb[0].mxu0
        %v2045 = vadd.f32 0.0, %v2044
        %v2046 = vpop.f32.mrb[0].mxu0
        %2047 = vmatprep.mubr.bf16.mxu0 0
        %2048 = vmatmul.mubr.bf16.gmra.mrb[0].mxu0 %v1056
        %v2049 = vpop.f32.mrb[0].mxu0
        %v2050 = vadd.f32 0.0, %v2049
        %v2051 = vpop.f32.mrb[0].mxu0
        %v2052 = vpop.f32.mrb[0].mxu0
        %v2053 = vadd.f32 0.0, %v2052
        %v2054 = vpop.f32.mrb[0].mxu0
        %2055 = vmatprep.mubr.bf16.mxu0 0
        %2056 = vmatmul.mubr.bf16.gmra.mrb[0].mxu0 %v1059
        %v2057 = vpop.f32.mrb[0].mxu0
        %v2058 = vadd.f32 0.0, %v2057
        %v2059 = vpop.f32.mrb[0].mxu0
        %v2060 = vpop.f32.mrb[0].mxu0
        %v2061 = vadd.f32 0.0, %v2060
        %v2062 = vpop.f32.mrb[0].mxu0
        %2063 = vmatprep.mubr.bf16.mxu0 0
        %2064 = vmatmul.mubr.bf16.gmra.mrb[0].mxu0 %v1062
        %v2065 = vpop.f32.mrb[0].mxu0
        %v2066 = vadd.f32 0.0, %v2065
        %v2067 = vpop.f32.mrb[0].mxu0
        %v2068 = vpop.f32.mrb[0].mxu0
        %v2069 = vadd.f32 0.0, %v2068
        %v2070 = vpop.f32.mrb[0].mxu0
        %2071 = vmatprep.mubr.bf16.mxu0 0
        %2072 = vmatmul.mubr.bf16.gmra.mrb[0].mxu0 %v1065
        %v2073 = vpop.f32.mrb[0].mxu0
        %v2074 = vadd.f32 0.0, %v2073
        %v2075 = vpop.f32.mrb[0].mxu0
        %v2076 = vpop.f32.mrb[0].mxu0
        %v2077 = vadd.f32 0.0, %v2076
        %v2078 = vpop.f32.mrb[0].mxu0
        %2079 = vmatprep.mubr.bf16.mxu0 0
        %2080 = vmatmul.mubr.bf16.gmra.mrb[0].mxu0 %v1068
        %v2081 = vpop.f32.mrb[0].mxu0
        %v2082 = vadd.f32 0.0, %v2081
        %v2083 = vpop.f32.mrb[0].mxu0
        %v2084 = vpop.f32.mrb[0].mxu0
        %v2085 = vadd.f32 0.0, %v2084
        %v2086 = vpop.f32.mrb[0].mxu0
        %2087 = vmatprep.mubr.bf16.mxu0 0
        %2088 = vmatmul.mubr.bf16.gmra.mrb[0].mxu0 %v1071
        %v2089 = vpop.f32.mrb[0].mxu0
        %v2090 = vadd.f32 0.0, %v2089
        %v2091 = vpop.f32.mrb[0].mxu0
        %v2092 = vpop.f32.mrb[0].mxu0
        %v2093 = vadd.f32 0.0, %v2092
        %v2094 = vpop.f32.mrb[0].mxu0
        %2095 = vmatprep.mubr.bf16.mxu0 0
        %2096 = vmatmul.mubr.bf16.gmra.mrb[0].mxu0 %v1074
        %v2097 = vpop.f32.mrb[0].mxu0
        %v2098 = vadd.f32 0.0, %v2097
        %v2099 = vpop.f32.mrb[0].mxu0
        %v2100 = vpop.f32.mrb[0].mxu0
        %v2101 = vadd.f32 0.0, %v2100
        %v2102 = vpop.f32.mrb[0].mxu0
        %2103 = vmatprep.mubr.bf16.mxu0 0
        %2104 = vmatmul.mubr.bf16.gmra.mrb[0].mxu0 %v1077
        %v2105 = vpop.f32.mrb[0].mxu0
        %v2106 = vadd.f32 0.0, %v2105
        %v2107 = vpop.f32.mrb[0].mxu0
        %v2108 = vpop.f32.mrb[0].mxu0
        %v2109 = vadd.f32 0.0, %v2108
        %v2110 = vpop.f32.mrb[0].mxu0
        %2111 = vmatprep.mubr.bf16.mxu0 0
        %2112 = vmatmul.mubr.bf16.gmra.mrb[0].mxu0 %v1080
        %v2113 = vpop.f32.mrb[0].mxu0
        %v2114 = vadd.f32 0.0, %v2113
        %v2115 = vpop.f32.mrb[0].mxu0
        %v2116 = vpop.f32.mrb[0].mxu0
        %v2117 = vadd.f32 0.0, %v2116
        %v2118 = vpop.f32.mrb[0].mxu0
        %2119 = vmatprep.mubr.bf16.mxu0 0
        %2120 = vmatmul.mubr.bf16.gmra.mrb[0].mxu0 %v1083
        %v2121 = vpop.f32.mrb[0].mxu0
        %v2122 = vadd.f32 0.0, %v2121
        %v2123 = vpop.f32.mrb[0].mxu0
        %v2124 = vpop.f32.mrb[0].mxu0
        %v2125 = vadd.f32 0.0, %v2124
        %v2126 = vpop.f32.mrb[0].mxu0
        %2127 = vmatprep.mubr.bf16.mxu0 0
        %2128 = vmatmul.mubr.bf16.gmra.mrb[0].mxu0 %v1086
        %v2129 = vpop.f32.mrb[0].mxu0
        %v2130 = vadd.f32 0.0, %v2129
        %v2131 = vpop.f32.mrb[0].mxu0
        %v2132 = vpop.f32.mrb[0].mxu0
        %v2133 = vadd.f32 0.0, %v2132
        %v2134 = vpop.f32.mrb[0].mxu0
        %2135 = vmatprep.mubr.bf16.mxu0 0
        %2136 = vmatmul.mubr.bf16.gmra.mrb[0].mxu0 %v1981
        %v2137 = vpop.f32.mrb[0].mxu0
        %v2138 = vadd.f32 0.0, %v2137
        %v2139 = vpop.f32.mrb[0].mxu0
        %v2140 = vpop.f32.mrb[0].mxu0
        %v2141 = vadd.f32 0.0, %v2140
        %v2142 = vpop.f32.mrb[0].mxu0
        %2143 = vdwg.mxu0
        %v2144 = vadd.f32 %v1904, %v2018
        %v2145 = vadd.f32 %v1905, %v2021
        %v2146 = vadd.f32 %v1906, %v2026
        %v2147 = vadd.f32 %v1907, %v2029
        %v2148 = vadd.f32 %v1908, %v2034
        %v2149 = vadd.f32 %v1909, %v2037
        %v2150 = vadd.f32 %v1910, %v2042
        %v2151 = vadd.f32 %v1911, %v2045
        %v2152 = vadd.f32 %v1912, %v2050
        %v2153 = vadd.f32 %v1913, %v2053
        %v2154 = vadd.f32 %v1914, %v2058
        %v2155 = vadd.f32 %v1915, %v2061
        %v2156 = vadd.f32 %v1916, %v2066
        %v2157 = vadd.f32 %v1917, %v2069
        %v2158 = vadd.f32 %v1918, %v2074
        %v2159 = vadd.f32 %v1919, %v2077
        %v2160 = vadd.f32 %v1920, %v2082
        %v2161 = vadd.f32 %v1921, %v2085
        %v2162 = vadd.f32 %v1922, %v2090
        %v2163 = vadd.f32 %v1923, %v2093
        %v2164 = vadd.f32 %v1924, %v2098
        %v2165 = vadd.f32 %v1925, %v2101
        %v2166 = vadd.f32 %v1926, %v2106
        %v2167 = vadd.f32 %v1927, %v2109
        %v2168 = vadd.f32 %v1928, %v2114
        %v2169 = vadd.f32 %v1929, %v2117
        %v2170 = vadd.f32 %v1930, %v2122
        %v2171 = vadd.f32 %v1931, %v2125
        %v2172 = vadd.f32 %v1932, %v2130
        %v2173 = vadd.f32 %v1933, %v2133
        %v2174 = vadd.f32 %v1934, %v2138
        %v2175 = vadd.f32 %v1935, %v2141
        %v2177 = vrot.slane %v237, 5
        %v2178 = vrot.slane %v2177, 4
        %v2179 = vrot.slane %v238, 5
        %v2180 = vsel %vm1299, %v2178, %v2179
        %v2181 = vrot.slane %v2179, 4
        %v2182 = vrot.slane %v239, 5
        %v2183 = vsel %vm1299, %v2181, %v2182
        %s2184 = scalar_lea.vmem %s1, 80
        %v2185 = vld [vmem:[%s2184] sm:$0xf]
        %v2186 = vld [vmem:[%s2184 + $0x4] sm:$0xf]
        %v2187 = vld [vmem:[%s2184 + $0x8] sm:$0xf]
        %v2188 = vld [vmem:[%s2184 + $0xc] sm:$0xf]
        %v2189 = vunpack.c.l.b16 %v2180
        %v2190 = vunpack.c.l.b16 %v2183
        %v2191 = vpack.c.b16 %v2190, %v2189
        %v2196 = vunpack.c.l.b16 %v2185
        %v2197 = vunpack.c.l.b16 %v2186
        %v2198 = vunpack.c.l.b16 %v2187
        %v2199 = vunpack.c.l.b16 %v2188
        %v2200 = vpack.c.b16 %v2197, %v2196
        %v2201 = vpack.c.b16 %v2199, %v2198
        %v2205 = vsel %vm346, %v2191, 0
        %2207 = vmatprep.subr.bf16.mxu0 0
        %2208 = vmatpush1.bf16.msra.mxu0 %v2200
        %2209 = vmatprep.subr.bf16.mxu0 0
        %2210 = vmatpush1.bf16.msra.mxu0 %v2201
        %2211 = vmatprep.subr.bf16.mxu0 0
        %2212 = vmatpush1.bf16.msra.mxu0 0
        %2213 = vmatprep.subr.bf16.mxu0 0
        %2214 = vmatpush1.bf16.msra.mxu0 0
        %2215 = vmatprep.subr.bf16.mxu0 0
        %2216 = vmatpush1.bf16.msra.mxu0 0
        %2217 = vmatprep.subr.bf16.mxu0 0
        %2218 = vmatpush1.bf16.msra.mxu0 0
        %2219 = vmatprep.subr.bf16.mxu0 0
        %2220 = vmatpush1.bf16.msra.mxu0 0
        %2221 = vmatprep.subr.bf16.mxu0 0
        %2222 = vmatpush1.bf16.msra.mxu0 0
        %2223 = vmatprep.subr.bf16.mxu0 0
        %2224 = vmatpush1.bf16.msra.mxu0 0
        %2225 = vmatprep.subr.bf16.mxu0 0
        %2226 = vmatpush1.bf16.msra.mxu0 0
        %2227 = vmatprep.subr.bf16.mxu0 0
        %2228 = vmatpush1.bf16.msra.mxu0 0
        %2229 = vmatprep.subr.bf16.mxu0 0
        %2230 = vmatpush1.bf16.msra.mxu0 0
        %2231 = vmatprep.subr.bf16.mxu0 0
        %2232 = vmatpush1.bf16.msra.mxu0 0
        %2233 = vmatprep.subr.bf16.mxu0 0
        %2234 = vmatpush1.bf16.msra.mxu0 0
        %2235 = vmatprep.subr.bf16.mxu0 0
        %2236 = vmatpush1.bf16.msra.mxu0 0
        %2237 = vmatprep.subr.bf16.mxu0 0
        %2238 = vmatpush1.bf16.msra.mxu0 0
        %2239 = vmatprep.mubr.bf16.mxu0 0
        %2240 = vmatmul.mubr.bf16.gmra.mrb[0].mxu0 %v1481
        %v2241 = vpop.f32.mrb[0].mxu0
        %v2242 = vadd.f32 0.0, %v2241
        %v2243 = vpop.f32.mrb[0].mxu0
        %v2244 = vpop.f32.mrb[0].mxu0
        %v2245 = vadd.f32 0.0, %v2244
        %v2246 = vpop.f32.mrb[0].mxu0
        %2247 = vmatprep.mubr.bf16.mxu0 0
        %2248 = vmatmul.mubr.bf16.gmra.mrb[0].mxu0 %v1484
        %v2249 = vpop.f32.mrb[0].mxu0
        %v2250 = vadd.f32 0.0, %v2249
        %v2251 = vpop.f32.mrb[0].mxu0
        %v2252 = vpop.f32.mrb[0].mxu0
        %v2253 = vadd.f32 0.0, %v2252
        %v2254 = vpop.f32.mrb[0].mxu0
        %2255 = vmatprep.mubr.bf16.mxu0 0
        %2256 = vmatmul.mubr.bf16.gmra.mrb[0].mxu0 %v1487
        %v2257 = vpop.f32.mrb[0].mxu0
        %v2258 = vadd.f32 0.0, %v2257
        %v2259 = vpop.f32.mrb[0].mxu0
        %v2260 = vpop.f32.mrb[0].mxu0
        %v2261 = vadd.f32 0.0, %v2260
        %v2262 = vpop.f32.mrb[0].mxu0
        %2263 = vmatprep.mubr.bf16.mxu0 0
        %2264 = vmatmul.mubr.bf16.gmra.mrb[0].mxu0 %v1490
        %v2265 = vpop.f32.mrb[0].mxu0
        %v2266 = vadd.f32 0.0, %v2265
        %v2267 = vpop.f32.mrb[0].mxu0
        %v2268 = vpop.f32.mrb[0].mxu0
        %v2269 = vadd.f32 0.0, %v2268
        %v2270 = vpop.f32.mrb[0].mxu0
        %2271 = vmatprep.mubr.bf16.mxu0 0
        %2272 = vmatmul.mubr.bf16.gmra.mrb[0].mxu0 %v1493
        %v2273 = vpop.f32.mrb[0].mxu0
        %v2274 = vadd.f32 0.0, %v2273
        %v2275 = vpop.f32.mrb[0].mxu0
        %v2276 = vpop.f32.mrb[0].mxu0
        %v2277 = vadd.f32 0.0, %v2276
        %v2278 = vpop.f32.mrb[0].mxu0
        %2279 = vmatprep.mubr.bf16.mxu0 0
        %2280 = vmatmul.mubr.bf16.gmra.mrb[0].mxu0 %v1496
        %v2281 = vpop.f32.mrb[0].mxu0
        %v2282 = vadd.f32 0.0, %v2281
        %v2283 = vpop.f32.mrb[0].mxu0
        %v2284 = vpop.f32.mrb[0].mxu0
        %v2285 = vadd.f32 0.0, %v2284
        %v2286 = vpop.f32.mrb[0].mxu0
        %2287 = vmatprep.mubr.bf16.mxu0 0
        %2288 = vmatmul.mubr.bf16.gmra.mrb[0].mxu0 %v1499
        %v2289 = vpop.f32.mrb[0].mxu0
        %v2290 = vadd.f32 0.0, %v2289
        %v2291 = vpop.f32.mrb[0].mxu0
        %v2292 = vpop.f32.mrb[0].mxu0
        %v2293 = vadd.f32 0.0, %v2292
        %v2294 = vpop.f32.mrb[0].mxu0
        %2295 = vmatprep.mubr.bf16.mxu0 0
        %2296 = vmatmul.mubr.bf16.gmra.mrb[0].mxu0 %v1502
        %v2297 = vpop.f32.mrb[0].mxu0
        %v2298 = vadd.f32 0.0, %v2297
        %v2299 = vpop.f32.mrb[0].mxu0
        %v2300 = vpop.f32.mrb[0].mxu0
        %v2301 = vadd.f32 0.0, %v2300
        %v2302 = vpop.f32.mrb[0].mxu0
        %2303 = vmatprep.mubr.bf16.mxu0 0
        %2304 = vmatmul.mubr.bf16.gmra.mrb[0].mxu0 %v1505
        %v2305 = vpop.f32.mrb[0].mxu0
        %v2306 = vadd.f32 0.0, %v2305
        %v2307 = vpop.f32.mrb[0].mxu0
        %v2308 = vpop.f32.mrb[0].mxu0
        %v2309 = vadd.f32 0.0, %v2308
        %v2310 = vpop.f32.mrb[0].mxu0
        %2311 = vmatprep.mubr.bf16.mxu0 0
        %2312 = vmatmul.mubr.bf16.gmra.mrb[0].mxu0 %v1508
        %v2313 = vpop.f32.mrb[0].mxu0
        %v2314 = vadd.f32 0.0, %v2313
        %v2315 = vpop.f32.mrb[0].mxu0
        %v2316 = vpop.f32.mrb[0].mxu0
        %v2317 = vadd.f32 0.0, %v2316
        %v2318 = vpop.f32.mrb[0].mxu0
        %2319 = vmatprep.mubr.bf16.mxu0 0
        %2320 = vmatmul.mubr.bf16.gmra.mrb[0].mxu0 %v1511
        %v2321 = vpop.f32.mrb[0].mxu0
        %v2322 = vadd.f32 0.0, %v2321
        %v2323 = vpop.f32.mrb[0].mxu0
        %v2324 = vpop.f32.mrb[0].mxu0
        %v2325 = vadd.f32 0.0, %v2324
        %v2326 = vpop.f32.mrb[0].mxu0
        %2327 = vmatprep.mubr.bf16.mxu0 0
        %2328 = vmatmul.mubr.bf16.gmra.mrb[0].mxu0 %v1514
        %v2329 = vpop.f32.mrb[0].mxu0
        %v2330 = vadd.f32 0.0, %v2329
        %v2331 = vpop.f32.mrb[0].mxu0
        %v2332 = vpop.f32.mrb[0].mxu0
        %v2333 = vadd.f32 0.0, %v2332
        %v2334 = vpop.f32.mrb[0].mxu0
        %2335 = vmatprep.mubr.bf16.mxu0 0
        %2336 = vmatmul.mubr.bf16.gmra.mrb[0].mxu0 %v1517
        %v2337 = vpop.f32.mrb[0].mxu0
        %v2338 = vadd.f32 0.0, %v2337
        %v2339 = vpop.f32.mrb[0].mxu0
        %v2340 = vpop.f32.mrb[0].mxu0
        %v2341 = vadd.f32 0.0, %v2340
        %v2342 = vpop.f32.mrb[0].mxu0
        %2343 = vmatprep.mubr.bf16.mxu0 0
        %2344 = vmatmul.mubr.bf16.gmra.mrb[0].mxu0 %v1520
        %v2345 = vpop.f32.mrb[0].mxu0
        %v2346 = vadd.f32 0.0, %v2345
        %v2347 = vpop.f32.mrb[0].mxu0
        %v2348 = vpop.f32.mrb[0].mxu0
        %v2349 = vadd.f32 0.0, %v2348
        %v2350 = vpop.f32.mrb[0].mxu0
        %2351 = vmatprep.mubr.bf16.mxu0 0
        %2352 = vmatmul.mubr.bf16.gmra.mrb[0].mxu0 %v1523
        %v2353 = vpop.f32.mrb[0].mxu0
        %v2354 = vadd.f32 0.0, %v2353
        %v2355 = vpop.f32.mrb[0].mxu0
        %v2356 = vpop.f32.mrb[0].mxu0
        %v2357 = vadd.f32 0.0, %v2356
        %v2358 = vpop.f32.mrb[0].mxu0
        %2359 = vmatprep.mubr.bf16.mxu0 0
        %2360 = vmatmul.mubr.bf16.gmra.mrb[0].mxu0 %v2205
        %v2361 = vpop.f32.mrb[0].mxu0
        %v2362 = vadd.f32 0.0, %v2361
        %v2363 = vpop.f32.mrb[0].mxu0
        %v2364 = vpop.f32.mrb[0].mxu0
        %v2365 = vadd.f32 0.0, %v2364
        %v2366 = vpop.f32.mrb[0].mxu0
        %2367 = vdwg.mxu0
        %v2368 = vadd.f32 %v2144, %v2242
        %v2369 = vadd.f32 %v2145, %v2245
        %v2370 = vadd.f32 %v2146, %v2250
        %v2371 = vadd.f32 %v2147, %v2253
        %v2372 = vadd.f32 %v2148, %v2258
        %v2373 = vadd.f32 %v2149, %v2261
        %v2374 = vadd.f32 %v2150, %v2266
        %v2375 = vadd.f32 %v2151, %v2269
        %v2376 = vadd.f32 %v2152, %v2274
        %v2377 = vadd.f32 %v2153, %v2277
        %v2378 = vadd.f32 %v2154, %v2282
        %v2379 = vadd.f32 %v2155, %v2285
        %v2380 = vadd.f32 %v2156, %v2290
        %v2381 = vadd.f32 %v2157, %v2293
        %v2382 = vadd.f32 %v2158, %v2298
        %v2383 = vadd.f32 %v2159, %v2301
        %v2384 = vadd.f32 %v2160, %v2306
        %v2385 = vadd.f32 %v2161, %v2309
        %v2386 = vadd.f32 %v2162, %v2314
        %v2387 = vadd.f32 %v2163, %v2317
        %v2388 = vadd.f32 %v2164, %v2322
        %v2389 = vadd.f32 %v2165, %v2325
        %v2390 = vadd.f32 %v2166, %v2330
        %v2391 = vadd.f32 %v2167, %v2333
        %v2392 = vadd.f32 %v2168, %v2338
        %v2393 = vadd.f32 %v2169, %v2341
        %v2394 = vadd.f32 %v2170, %v2346
        %v2395 = vadd.f32 %v2171, %v2349
        %v2396 = vadd.f32 %v2172, %v2354
        %v2397 = vadd.f32 %v2173, %v2357
        %v2398 = vadd.f32 %v2174, %v2362
        %v2399 = vadd.f32 %v2175, %v2365
        %s2400 = scalar_lea.vmem %s1, 96
        %v2401 = vld [vmem:[%s2400] sm:$0xf]
        %v2402 = vld [vmem:[%s2400 + $0x4] sm:$0xf]
        %v2403 = vld [vmem:[%s2400 + $0x8] sm:$0xf]
        %v2404 = vld [vmem:[%s2400 + $0xc] sm:$0xf]
        %v2407 = vunpack.c.l.b16 %v240
        %v2408 = vunpack.c.l.b16 %v241
        %v2409 = vpack.c.b16 %v2408, %v2407
        %v2414 = vunpack.c.l.b16 %v2401
        %v2415 = vunpack.c.l.b16 %v2402
        %v2416 = vunpack.c.l.b16 %v2403
        %v2417 = vunpack.c.l.b16 %v2404
        %v2418 = vpack.c.b16 %v2415, %v2414
        %v2419 = vpack.c.b16 %v2417, %v2416
        %v2423 = vsel %vm346, %v2409, 0
        %2425 = vmatprep.subr.bf16.mxu0 0
        %2426 = vmatpush1.bf16.msra.mxu0 %v2418
        %2427 = vmatprep.subr.bf16.mxu0 0
        %2428 = vmatpush1.bf16.msra.mxu0 %v2419
        %2429 = vmatprep.subr.bf16.mxu0 0
        %2430 = vmatpush1.bf16.msra.mxu0 0
        %2431 = vmatprep.subr.bf16.mxu0 0
        %2432 = vmatpush1.bf16.msra.mxu0 0
        %2433 = vmatprep.subr.bf16.mxu0 0
        %2434 = vmatpush1.bf16.msra.mxu0 0
        %2435 = vmatprep.subr.bf16.mxu0 0
        %2436 = vmatpush1.bf16.msra.mxu0 0
        %2437 = vmatprep.subr.bf16.mxu0 0
        %2438 = vmatpush1.bf16.msra.mxu0 0
        %2439 = vmatprep.subr.bf16.mxu0 0
        %2440 = vmatpush1.bf16.msra.mxu0 0
        %2441 = vmatprep.subr.bf16.mxu0 0
        %2442 = vmatpush1.bf16.msra.mxu0 0
        %2443 = vmatprep.subr.bf16.mxu0 0
        %2444 = vmatpush1.bf16.msra.mxu0 0
        %2445 = vmatprep.subr.bf16.mxu0 0
        %2446 = vmatpush1.bf16.msra.mxu0 0
        %2447 = vmatprep.subr.bf16.mxu0 0
        %2448 = vmatpush1.bf16.msra.mxu0 0
        %2449 = vmatprep.subr.bf16.mxu0 0
        %2450 = vmatpush1.bf16.msra.mxu0 0
        %2451 = vmatprep.subr.bf16.mxu0 0
        %2452 = vmatpush1.bf16.msra.mxu0 0
        %2453 = vmatprep.subr.bf16.mxu0 0
        %2454 = vmatpush1.bf16.msra.mxu0 0
        %2455 = vmatprep.subr.bf16.mxu0 0
        %2456 = vmatpush1.bf16.msra.mxu0 0
        %2457 = vmatprep.mubr.bf16.mxu0 0
        %2458 = vmatmul.mubr.bf16.gmra.mrb[0].mxu0 %v354
        %v2459 = vpop.f32.mrb[0].mxu0
        %v2460 = vadd.f32 0.0, %v2459
        %v2461 = vpop.f32.mrb[0].mxu0
        %v2462 = vpop.f32.mrb[0].mxu0
        %v2463 = vadd.f32 0.0, %v2462
        %v2464 = vpop.f32.mrb[0].mxu0
        %2465 = vmatprep.mubr.bf16.mxu0 0
        %2466 = vmatmul.mubr.bf16.gmra.mrb[0].mxu0 %v357
        %v2467 = vpop.f32.mrb[0].mxu0
        %v2468 = vadd.f32 0.0, %v2467
        %v2469 = vpop.f32.mrb[0].mxu0
        %v2470 = vpop.f32.mrb[0].mxu0
        %v2471 = vadd.f32 0.0, %v2470
        %v2472 = vpop.f32.mrb[0].mxu0
        %2473 = vmatprep.mubr.bf16.mxu0 0
        %2474 = vmatmul.mubr.bf16.gmra.mrb[0].mxu0 %v360
        %v2475 = vpop.f32.mrb[0].mxu0
        %v2476 = vadd.f32 0.0, %v2475
        %v2477 = vpop.f32.mrb[0].mxu0
        %v2478 = vpop.f32.mrb[0].mxu0
        %v2479 = vadd.f32 0.0, %v2478
        %v2480 = vpop.f32.mrb[0].mxu0
        %2481 = vmatprep.mubr.bf16.mxu0 0
        %2482 = vmatmul.mubr.bf16.gmra.mrb[0].mxu0 %v363
        %v2483 = vpop.f32.mrb[0].mxu0
        %v2484 = vadd.f32 0.0, %v2483
        %v2485 = vpop.f32.mrb[0].mxu0
        %v2486 = vpop.f32.mrb[0].mxu0
        %v2487 = vadd.f32 0.0, %v2486
        %v2488 = vpop.f32.mrb[0].mxu0
        %2489 = vmatprep.mubr.bf16.mxu0 0
        %2490 = vmatmul.mubr.bf16.gmra.mrb[0].mxu0 %v366
        %v2491 = vpop.f32.mrb[0].mxu0
        %v2492 = vadd.f32 0.0, %v2491
        %v2493 = vpop.f32.mrb[0].mxu0
        %v2494 = vpop.f32.mrb[0].mxu0
        %v2495 = vadd.f32 0.0, %v2494
        %v2496 = vpop.f32.mrb[0].mxu0
        %2497 = vmatprep.mubr.bf16.mxu0 0
        %2498 = vmatmul.mubr.bf16.gmra.mrb[0].mxu0 %v369
        %v2499 = vpop.f32.mrb[0].mxu0
        %v2500 = vadd.f32 0.0, %v2499
        %v2501 = vpop.f32.mrb[0].mxu0
        %v2502 = vpop.f32.mrb[0].mxu0
        %v2503 = vadd.f32 0.0, %v2502
        %v2504 = vpop.f32.mrb[0].mxu0
        %2505 = vmatprep.mubr.bf16.mxu0 0
        %2506 = vmatmul.mubr.bf16.gmra.mrb[0].mxu0 %v372
        %v2507 = vpop.f32.mrb[0].mxu0
        %v2508 = vadd.f32 0.0, %v2507
        %v2509 = vpop.f32.mrb[0].mxu0
        %v2510 = vpop.f32.mrb[0].mxu0
        %v2511 = vadd.f32 0.0, %v2510
        %v2512 = vpop.f32.mrb[0].mxu0
        %2513 = vmatprep.mubr.bf16.mxu0 0
        %2514 = vmatmul.mubr.bf16.gmra.mrb[0].mxu0 %v375
        %v2515 = vpop.f32.mrb[0].mxu0
        %v2516 = vadd.f32 0.0, %v2515
        %v2517 = vpop.f32.mrb[0].mxu0
        %v2518 = vpop.f32.mrb[0].mxu0
        %v2519 = vadd.f32 0.0, %v2518
        %v2520 = vpop.f32.mrb[0].mxu0
        %2521 = vmatprep.mubr.bf16.mxu0 0
        %2522 = vmatmul.mubr.bf16.gmra.mrb[0].mxu0 %v378
        %v2523 = vpop.f32.mrb[0].mxu0
        %v2524 = vadd.f32 0.0, %v2523
        %v2525 = vpop.f32.mrb[0].mxu0
        %v2526 = vpop.f32.mrb[0].mxu0
        %v2527 = vadd.f32 0.0, %v2526
        %v2528 = vpop.f32.mrb[0].mxu0
        %2529 = vmatprep.mubr.bf16.mxu0 0
        %2530 = vmatmul.mubr.bf16.gmra.mrb[0].mxu0 %v381
        %v2531 = vpop.f32.mrb[0].mxu0
        %v2532 = vadd.f32 0.0, %v2531
        %v2533 = vpop.f32.mrb[0].mxu0
        %v2534 = vpop.f32.mrb[0].mxu0
        %v2535 = vadd.f32 0.0, %v2534
        %v2536 = vpop.f32.mrb[0].mxu0
        %2537 = vmatprep.mubr.bf16.mxu0 0
        %2538 = vmatmul.mubr.bf16.gmra.mrb[0].mxu0 %v384
        %v2539 = vpop.f32.mrb[0].mxu0
        %v2540 = vadd.f32 0.0, %v2539
        %v2541 = vpop.f32.mrb[0].mxu0
        %v2542 = vpop.f32.mrb[0].mxu0
        %v2543 = vadd.f32 0.0, %v2542
        %v2544 = vpop.f32.mrb[0].mxu0
        %2545 = vmatprep.mubr.bf16.mxu0 0
        %2546 = vmatmul.mubr.bf16.gmra.mrb[0].mxu0 %v387
        %v2547 = vpop.f32.mrb[0].mxu0
        %v2548 = vadd.f32 0.0, %v2547
        %v2549 = vpop.f32.mrb[0].mxu0
        %v2550 = vpop.f32.mrb[0].mxu0
        %v2551 = vadd.f32 0.0, %v2550
        %v2552 = vpop.f32.mrb[0].mxu0
        %2553 = vmatprep.mubr.bf16.mxu0 0
        %2554 = vmatmul.mubr.bf16.gmra.mrb[0].mxu0 %v390
        %v2555 = vpop.f32.mrb[0].mxu0
        %v2556 = vadd.f32 0.0, %v2555
        %v2557 = vpop.f32.mrb[0].mxu0
        %v2558 = vpop.f32.mrb[0].mxu0
        %v2559 = vadd.f32 0.0, %v2558
        %v2560 = vpop.f32.mrb[0].mxu0
        %2561 = vmatprep.mubr.bf16.mxu0 0
        %2562 = vmatmul.mubr.bf16.gmra.mrb[0].mxu0 %v393
        %v2563 = vpop.f32.mrb[0].mxu0
        %v2564 = vadd.f32 0.0, %v2563
        %v2565 = vpop.f32.mrb[0].mxu0
        %v2566 = vpop.f32.mrb[0].mxu0
        %v2567 = vadd.f32 0.0, %v2566
        %v2568 = vpop.f32.mrb[0].mxu0
        %2569 = vmatprep.mubr.bf16.mxu0 0
        %2570 = vmatmul.mubr.bf16.gmra.mrb[0].mxu0 %v1741
        %v2571 = vpop.f32.mrb[0].mxu0
        %v2572 = vadd.f32 0.0, %v2571
        %v2573 = vpop.f32.mrb[0].mxu0
        %v2574 = vpop.f32.mrb[0].mxu0
        %v2575 = vadd.f32 0.0, %v2574
        %v2576 = vpop.f32.mrb[0].mxu0
        %2577 = vmatprep.mubr.bf16.mxu0 0
        %2578 = vmatmul.mubr.bf16.gmra.mrb[0].mxu0 %v2423
        %v2579 = vpop.f32.mrb[0].mxu0
        %v2580 = vadd.f32 0.0, %v2579
        %v2581 = vpop.f32.mrb[0].mxu0
        %v2582 = vpop.f32.mrb[0].mxu0
        %v2583 = vadd.f32 0.0, %v2582
        %v2584 = vpop.f32.mrb[0].mxu0
        %2585 = vdwg.mxu0
        %v2586 = vadd.f32 %v2368, %v2460
        %v2587 = vadd.f32 %v2369, %v2463
        %v2588 = vadd.f32 %v2370, %v2468
        %v2589 = vadd.f32 %v2371, %v2471
        %v2590 = vadd.f32 %v2372, %v2476
        %v2591 = vadd.f32 %v2373, %v2479
        %v2592 = vadd.f32 %v2374, %v2484
        %v2593 = vadd.f32 %v2375, %v2487
        %v2594 = vadd.f32 %v2376, %v2492
        %v2595 = vadd.f32 %v2377, %v2495
        %v2596 = vadd.f32 %v2378, %v2500
        %v2597 = vadd.f32 %v2379, %v2503
        %v2598 = vadd.f32 %v2380, %v2508
        %v2599 = vadd.f32 %v2381, %v2511
        %v2600 = vadd.f32 %v2382, %v2516
        %v2601 = vadd.f32 %v2383, %v2519
        %v2602 = vadd.f32 %v2384, %v2524
        %v2603 = vadd.f32 %v2385, %v2527
        %v2604 = vadd.f32 %v2386, %v2532
        %v2605 = vadd.f32 %v2387, %v2535
        %v2606 = vadd.f32 %v2388, %v2540
        %v2607 = vadd.f32 %v2389, %v2543
        %v2608 = vadd.f32 %v2390, %v2548
        %v2609 = vadd.f32 %v2391, %v2551
        %v2610 = vadd.f32 %v2392, %v2556
        %v2611 = vadd.f32 %v2393, %v2559
        %v2612 = vadd.f32 %v2394, %v2564
        %v2613 = vadd.f32 %v2395, %v2567
        %v2614 = vadd.f32 %v2396, %v2572
        %v2615 = vadd.f32 %v2397, %v2575
        %v2616 = vadd.f32 %v2398, %v2580
        %v2617 = vadd.f32 %v2399, %v2583
        %v2619 = vshrl.u32 %v240, 16
        %v2621 = vrot.slane %v2619, 4
        %v2622 = vshll.u32 %v240, 16
        %v2624 = vrot.slane %v2622, 5
        %v2625 = vor.u32 %v2621, %v2624
        %v2626 = vrot.slane %v2625, 4
        %v2628 = vshll.u32 %v241, 16
        %v2630 = vrot.slane %v2628, 5
        %v2631 = vsel %vm590, %v2626, %v2630
        %v2632 = vshrl.u32 %v241, 16
        %v2634 = vrot.slane %v2632, 4
        %v2635 = vor.u32 %v2634, %v2630
        %v2636 = vrot.slane %v2635, 4
        %v2638 = vshll.u32 %v242, 16
        %v2640 = vrot.slane %v2638, 5
        %v2641 = vsel %vm590, %v2636, %v2640
        %s2642 = scalar_lea.vmem %s1, 112
        %v2643 = vld [vmem:[%s2642] sm:$0xf]
        %v2644 = vld [vmem:[%s2642 + $0x4] sm:$0xf]
        %v2645 = vld [vmem:[%s2642 + $0x8] sm:$0xf]
        %v2646 = vld [vmem:[%s2642 + $0xc] sm:$0xf]
        %v2647 = vunpack.c.l.b16 %v2631
        %v2648 = vunpack.c.l.b16 %v2641
        %v2649 = vpack.c.b16 %v2648, %v2647
        %v2654 = vunpack.c.l.b16 %v2643
        %v2655 = vunpack.c.l.b16 %v2644
        %v2656 = vunpack.c.l.b16 %v2645
        %v2657 = vunpack.c.l.b16 %v2646
        %v2658 = vpack.c.b16 %v2655, %v2654
        %v2659 = vpack.c.b16 %v2657, %v2656
        %v2663 = vsel %vm346, %v2649, 0
        %2665 = vmatprep.subr.bf16.mxu0 0
        %2666 = vmatpush1.bf16.msra.mxu0 %v2658
        %2667 = vmatprep.subr.bf16.mxu0 0
        %2668 = vmatpush1.bf16.msra.mxu0 %v2659
        %2669 = vmatprep.subr.bf16.mxu0 0
        %2670 = vmatpush1.bf16.msra.mxu0 0
        %2671 = vmatprep.subr.bf16.mxu0 0
        %2672 = vmatpush1.bf16.msra.mxu0 0
        %2673 = vmatprep.subr.bf16.mxu0 0
        %2674 = vmatpush1.bf16.msra.mxu0 0
        %2675 = vmatprep.subr.bf16.mxu0 0
        %2676 = vmatpush1.bf16.msra.mxu0 0
        %2677 = vmatprep.subr.bf16.mxu0 0
        %2678 = vmatpush1.bf16.msra.mxu0 0
        %2679 = vmatprep.subr.bf16.mxu0 0
        %2680 = vmatpush1.bf16.msra.mxu0 0
        %2681 = vmatprep.subr.bf16.mxu0 0
        %2682 = vmatpush1.bf16.msra.mxu0 0
        %2683 = vmatprep.subr.bf16.mxu0 0
        %2684 = vmatpush1.bf16.msra.mxu0 0
        %2685 = vmatprep.subr.bf16.mxu0 0
        %2686 = vmatpush1.bf16.msra.mxu0 0
        %2687 = vmatprep.subr.bf16.mxu0 0
        %2688 = vmatpush1.bf16.msra.mxu0 0
        %2689 = vmatprep.subr.bf16.mxu0 0
        %2690 = vmatpush1.bf16.msra.mxu0 0
        %2691 = vmatprep.subr.bf16.mxu0 0
        %2692 = vmatpush1.bf16.msra.mxu0 0
        %2693 = vmatprep.subr.bf16.mxu0 0
        %2694 = vmatpush1.bf16.msra.mxu0 0
        %2695 = vmatprep.subr.bf16.mxu0 0
        %2696 = vmatpush1.bf16.msra.mxu0 0
        %2697 = vmatprep.mubr.bf16.mxu0 0
        %2698 = vmatmul.mubr.bf16.gmra.mrb[0].mxu0 %v1047
        %v2699 = vpop.f32.mrb[0].mxu0
        %v2700 = vadd.f32 0.0, %v2699
        %v2701 = vpop.f32.mrb[0].mxu0
        %v2702 = vpop.f32.mrb[0].mxu0
        %v2703 = vadd.f32 0.0, %v2702
        %v2704 = vpop.f32.mrb[0].mxu0
        %2705 = vmatprep.mubr.bf16.mxu0 0
        %2706 = vmatmul.mubr.bf16.gmra.mrb[0].mxu0 %v1050
        %v2707 = vpop.f32.mrb[0].mxu0
        %v2708 = vadd.f32 0.0, %v2707
        %v2709 = vpop.f32.mrb[0].mxu0
        %v2710 = vpop.f32.mrb[0].mxu0
        %v2711 = vadd.f32 0.0, %v2710
        %v2712 = vpop.f32.mrb[0].mxu0
        %2713 = vmatprep.mubr.bf16.mxu0 0
        %2714 = vmatmul.mubr.bf16.gmra.mrb[0].mxu0 %v1053
        %v2715 = vpop.f32.mrb[0].mxu0
        %v2716 = vadd.f32 0.0, %v2715
        %v2717 = vpop.f32.mrb[0].mxu0
        %v2718 = vpop.f32.mrb[0].mxu0
        %v2719 = vadd.f32 0.0, %v2718
        %v2720 = vpop.f32.mrb[0].mxu0
        %2721 = vmatprep.mubr.bf16.mxu0 0
        %2722 = vmatmul.mubr.bf16.gmra.mrb[0].mxu0 %v1056
        %v2723 = vpop.f32.mrb[0].mxu0
        %v2724 = vadd.f32 0.0, %v2723
        %v2725 = vpop.f32.mrb[0].mxu0
        %v2726 = vpop.f32.mrb[0].mxu0
        %v2727 = vadd.f32 0.0, %v2726
        %v2728 = vpop.f32.mrb[0].mxu0
        %2729 = vmatprep.mubr.bf16.mxu0 0
        %2730 = vmatmul.mubr.bf16.gmra.mrb[0].mxu0 %v1059
        %v2731 = vpop.f32.mrb[0].mxu0
        %v2732 = vadd.f32 0.0, %v2731
        %v2733 = vpop.f32.mrb[0].mxu0
        %v2734 = vpop.f32.mrb[0].mxu0
        %v2735 = vadd.f32 0.0, %v2734
        %v2736 = vpop.f32.mrb[0].mxu0
        %2737 = vmatprep.mubr.bf16.mxu0 0
        %2738 = vmatmul.mubr.bf16.gmra.mrb[0].mxu0 %v1062
        %v2739 = vpop.f32.mrb[0].mxu0
        %v2740 = vadd.f32 0.0, %v2739
        %v2741 = vpop.f32.mrb[0].mxu0
        %v2742 = vpop.f32.mrb[0].mxu0
        %v2743 = vadd.f32 0.0, %v2742
        %v2744 = vpop.f32.mrb[0].mxu0
        %2745 = vmatprep.mubr.bf16.mxu0 0
        %2746 = vmatmul.mubr.bf16.gmra.mrb[0].mxu0 %v1065
        %v2747 = vpop.f32.mrb[0].mxu0
        %v2748 = vadd.f32 0.0, %v2747
        %v2749 = vpop.f32.mrb[0].mxu0
        %v2750 = vpop.f32.mrb[0].mxu0
        %v2751 = vadd.f32 0.0, %v2750
        %v2752 = vpop.f32.mrb[0].mxu0
        %2753 = vmatprep.mubr.bf16.mxu0 0
        %2754 = vmatmul.mubr.bf16.gmra.mrb[0].mxu0 %v1068
        %v2755 = vpop.f32.mrb[0].mxu0
        %v2756 = vadd.f32 0.0, %v2755
        %v2757 = vpop.f32.mrb[0].mxu0
        %v2758 = vpop.f32.mrb[0].mxu0
        %v2759 = vadd.f32 0.0, %v2758
        %v2760 = vpop.f32.mrb[0].mxu0
        %2761 = vmatprep.mubr.bf16.mxu0 0
        %2762 = vmatmul.mubr.bf16.gmra.mrb[0].mxu0 %v1071
        %v2763 = vpop.f32.mrb[0].mxu0
        %v2764 = vadd.f32 0.0, %v2763
        %v2765 = vpop.f32.mrb[0].mxu0
        %v2766 = vpop.f32.mrb[0].mxu0
        %v2767 = vadd.f32 0.0, %v2766
        %v2768 = vpop.f32.mrb[0].mxu0
        %2769 = vmatprep.mubr.bf16.mxu0 0
        %2770 = vmatmul.mubr.bf16.gmra.mrb[0].mxu0 %v1074
        %v2771 = vpop.f32.mrb[0].mxu0
        %v2772 = vadd.f32 0.0, %v2771
        %v2773 = vpop.f32.mrb[0].mxu0
        %v2774 = vpop.f32.mrb[0].mxu0
        %v2775 = vadd.f32 0.0, %v2774
        %v2776 = vpop.f32.mrb[0].mxu0
        %2777 = vmatprep.mubr.bf16.mxu0 0
        %2778 = vmatmul.mubr.bf16.gmra.mrb[0].mxu0 %v1077
        %v2779 = vpop.f32.mrb[0].mxu0
        %v2780 = vadd.f32 0.0, %v2779
        %v2781 = vpop.f32.mrb[0].mxu0
        %v2782 = vpop.f32.mrb[0].mxu0
        %v2783 = vadd.f32 0.0, %v2782
        %v2784 = vpop.f32.mrb[0].mxu0
        %2785 = vmatprep.mubr.bf16.mxu0 0
        %2786 = vmatmul.mubr.bf16.gmra.mrb[0].mxu0 %v1080
        %v2787 = vpop.f32.mrb[0].mxu0
        %v2788 = vadd.f32 0.0, %v2787
        %v2789 = vpop.f32.mrb[0].mxu0
        %v2790 = vpop.f32.mrb[0].mxu0
        %v2791 = vadd.f32 0.0, %v2790
        %v2792 = vpop.f32.mrb[0].mxu0
        %2793 = vmatprep.mubr.bf16.mxu0 0
        %2794 = vmatmul.mubr.bf16.gmra.mrb[0].mxu0 %v1083
        %v2795 = vpop.f32.mrb[0].mxu0
        %v2796 = vadd.f32 0.0, %v2795
        %v2797 = vpop.f32.mrb[0].mxu0
        %v2798 = vpop.f32.mrb[0].mxu0
        %v2799 = vadd.f32 0.0, %v2798
        %v2800 = vpop.f32.mrb[0].mxu0
        %2801 = vmatprep.mubr.bf16.mxu0 0
        %2802 = vmatmul.mubr.bf16.gmra.mrb[0].mxu0 %v1086
        %v2803 = vpop.f32.mrb[0].mxu0
        %v2804 = vadd.f32 0.0, %v2803
        %v2805 = vpop.f32.mrb[0].mxu0
        %v2806 = vpop.f32.mrb[0].mxu0
        %v2807 = vadd.f32 0.0, %v2806
        %v2808 = vpop.f32.mrb[0].mxu0
        %2809 = vmatprep.mubr.bf16.mxu0 0
        %2810 = vmatmul.mubr.bf16.gmra.mrb[0].mxu0 %v1981
        %v2811 = vpop.f32.mrb[0].mxu0
        %v2812 = vadd.f32 0.0, %v2811
        %v2813 = vpop.f32.mrb[0].mxu0
        %v2814 = vpop.f32.mrb[0].mxu0
        %v2815 = vadd.f32 0.0, %v2814
        %v2816 = vpop.f32.mrb[0].mxu0
        %2817 = vmatprep.mubr.bf16.mxu0 0
        %2818 = vmatmul.mubr.bf16.gmra.mrb[0].mxu0 %v2663
        %v2819 = vpop.f32.mrb[0].mxu0
        %v2820 = vadd.f32 0.0, %v2819
        %v2821 = vpop.f32.mrb[0].mxu0
        %v2822 = vpop.f32.mrb[0].mxu0
        %v2823 = vadd.f32 0.0, %v2822
        %v2824 = vpop.f32.mrb[0].mxu0
        %2825 = vdwg.mxu0
        %v2826 = vadd.f32 %v2586, %v2700
        %v2827 = vadd.f32 %v2587, %v2703
        %v2828 = vadd.f32 %v2588, %v2708
        %v2829 = vadd.f32 %v2589, %v2711
        %v2830 = vadd.f32 %v2590, %v2716
        %v2831 = vadd.f32 %v2591, %v2719
        %v2832 = vadd.f32 %v2592, %v2724
        %v2833 = vadd.f32 %v2593, %v2727
        %v2834 = vadd.f32 %v2594, %v2732
        %v2835 = vadd.f32 %v2595, %v2735
        %v2836 = vadd.f32 %v2596, %v2740
        %v2837 = vadd.f32 %v2597, %v2743
        %v2838 = vadd.f32 %v2598, %v2748
        %v2839 = vadd.f32 %v2599, %v2751
        %v2840 = vadd.f32 %v2600, %v2756
        %v2841 = vadd.f32 %v2601, %v2759
        %v2842 = vadd.f32 %v2602, %v2764
        %v2843 = vadd.f32 %v2603, %v2767
        %v2844 = vadd.f32 %v2604, %v2772
        %v2845 = vadd.f32 %v2605, %v2775
        %v2846 = vadd.f32 %v2606, %v2780
        %v2847 = vadd.f32 %v2607, %v2783
        %v2848 = vadd.f32 %v2608, %v2788
        %v2849 = vadd.f32 %v2609, %v2791
        %v2850 = vadd.f32 %v2610, %v2796
        %v2851 = vadd.f32 %v2611, %v2799
        %v2852 = vadd.f32 %v2612, %v2804
        %v2853 = vadd.f32 %v2613, %v2807
        %v2854 = vadd.f32 %v2614, %v2812
        %v2855 = vadd.f32 %v2615, %v2815
        %v2856 = vadd.f32 %v2616, %v2820
        %v2857 = vadd.f32 %v2617, %v2823
        %v2859 = vrot.slane %v240, 5
        %v2860 = vrot.slane %v2859, 4
        %v2861 = vrot.slane %v241, 5
        %v2862 = vsel %vm1299, %v2860, %v2861
        %v2863 = vrot.slane %v2861, 4
        %v2864 = vrot.slane %v242, 5
        %v2865 = vsel %vm1299, %v2863, %v2864
        %s2866 = scalar_lea.vmem %s1, 128
        %v2867 = vld [vmem:[%s2866] sm:$0xf]
        %v2868 = vld [vmem:[%s2866 + $0x4] sm:$0xf]
        %v2869 = vld [vmem:[%s2866 + $0x8] sm:$0xf]
        %v2870 = vld [vmem:[%s2866 + $0xc] sm:$0xf]
        %v2871 = vunpack.c.l.b16 %v2862
        %v2872 = vunpack.c.l.b16 %v2865
        %v2873 = vpack.c.b16 %v2872, %v2871
        %v2878 = vunpack.c.l.b16 %v2867
        %v2879 = vunpack.c.l.b16 %v2868
        %v2880 = vunpack.c.l.b16 %v2869
        %v2881 = vunpack.c.l.b16 %v2870
        %v2882 = vpack.c.b16 %v2879, %v2878
        %v2883 = vpack.c.b16 %v2881, %v2880
        %v2887 = vsel %vm346, %v2873, 0
        %2889 = vmatprep.subr.bf16.mxu0 0
        %2890 = vmatpush1.bf16.msra.mxu0 %v2882
        %2891 = vmatprep.subr.bf16.mxu0 0
        %2892 = vmatpush1.bf16.msra.mxu0 %v2883
        %2893 = vmatprep.subr.bf16.mxu0 0
        %2894 = vmatpush1.bf16.msra.mxu0 0
        %2895 = vmatprep.subr.bf16.mxu0 0
        %2896 = vmatpush1.bf16.msra.mxu0 0
        %2897 = vmatprep.subr.bf16.mxu0 0
        %2898 = vmatpush1.bf16.msra.mxu0 0
        %2899 = vmatprep.subr.bf16.mxu0 0
        %2900 = vmatpush1.bf16.msra.mxu0 0
        %2901 = vmatprep.subr.bf16.mxu0 0
        %2902 = vmatpush1.bf16.msra.mxu0 0
        %2903 = vmatprep.subr.bf16.mxu0 0
        %2904 = vmatpush1.bf16.msra.mxu0 0
        %2905 = vmatprep.subr.bf16.mxu0 0
        %2906 = vmatpush1.bf16.msra.mxu0 0
        %2907 = vmatprep.subr.bf16.mxu0 0
        %2908 = vmatpush1.bf16.msra.mxu0 0
        %2909 = vmatprep.subr.bf16.mxu0 0
        %2910 = vmatpush1.bf16.msra.mxu0 0
        %2911 = vmatprep.subr.bf16.mxu0 0
        %2912 = vmatpush1.bf16.msra.mxu0 0
        %2913 = vmatprep.subr.bf16.mxu0 0
        %2914 = vmatpush1.bf16.msra.mxu0 0
        %2915 = vmatprep.subr.bf16.mxu0 0
        %2916 = vmatpush1.bf16.msra.mxu0 0
        %2917 = vmatprep.subr.bf16.mxu0 0
        %2918 = vmatpush1.bf16.msra.mxu0 0
        %2919 = vmatprep.subr.bf16.mxu0 0
        %2920 = vmatpush1.bf16.msra.mxu0 0
        %2921 = vmatprep.mubr.bf16.mxu0 0
        %2922 = vmatmul.mubr.bf16.gmra.mrb[0].mxu0 %v1484
        %v2923 = vpop.f32.mrb[0].mxu0
        %v2924 = vadd.f32 0.0, %v2923
        %v2925 = vpop.f32.mrb[0].mxu0
        %v2926 = vpop.f32.mrb[0].mxu0
        %v2927 = vadd.f32 0.0, %v2926
        %v2928 = vpop.f32.mrb[0].mxu0
        %2929 = vmatprep.mubr.bf16.mxu0 0
        %2930 = vmatmul.mubr.bf16.gmra.mrb[0].mxu0 %v1487
        %v2931 = vpop.f32.mrb[0].mxu0
        %v2932 = vadd.f32 0.0, %v2931
        %v2933 = vpop.f32.mrb[0].mxu0
        %v2934 = vpop.f32.mrb[0].mxu0
        %v2935 = vadd.f32 0.0, %v2934
        %v2936 = vpop.f32.mrb[0].mxu0
        %2937 = vmatprep.mubr.bf16.mxu0 0
        %2938 = vmatmul.mubr.bf16.gmra.mrb[0].mxu0 %v1490
        %v2939 = vpop.f32.mrb[0].mxu0
        %v2940 = vadd.f32 0.0, %v2939
        %v2941 = vpop.f32.mrb[0].mxu0
        %v2942 = vpop.f32.mrb[0].mxu0
        %v2943 = vadd.f32 0.0, %v2942
        %v2944 = vpop.f32.mrb[0].mxu0
        %2945 = vmatprep.mubr.bf16.mxu0 0
        %2946 = vmatmul.mubr.bf16.gmra.mrb[0].mxu0 %v1493
        %v2947 = vpop.f32.mrb[0].mxu0
        %v2948 = vadd.f32 0.0, %v2947
        %v2949 = vpop.f32.mrb[0].mxu0
        %v2950 = vpop.f32.mrb[0].mxu0
        %v2951 = vadd.f32 0.0, %v2950
        %v2952 = vpop.f32.mrb[0].mxu0
        %2953 = vmatprep.mubr.bf16.mxu0 0
        %2954 = vmatmul.mubr.bf16.gmra.mrb[0].mxu0 %v1496
        %v2955 = vpop.f32.mrb[0].mxu0
        %v2956 = vadd.f32 0.0, %v2955
        %v2957 = vpop.f32.mrb[0].mxu0
        %v2958 = vpop.f32.mrb[0].mxu0
        %v2959 = vadd.f32 0.0, %v2958
        %v2960 = vpop.f32.mrb[0].mxu0
        %2961 = vmatprep.mubr.bf16.mxu0 0
        %2962 = vmatmul.mubr.bf16.gmra.mrb[0].mxu0 %v1499
        %v2963 = vpop.f32.mrb[0].mxu0
        %v2964 = vadd.f32 0.0, %v2963
        %v2965 = vpop.f32.mrb[0].mxu0
        %v2966 = vpop.f32.mrb[0].mxu0
        %v2967 = vadd.f32 0.0, %v2966
        %v2968 = vpop.f32.mrb[0].mxu0
        %2969 = vmatprep.mubr.bf16.mxu0 0
        %2970 = vmatmul.mubr.bf16.gmra.mrb[0].mxu0 %v1502
        %v2971 = vpop.f32.mrb[0].mxu0
        %v2972 = vadd.f32 0.0, %v2971
        %v2973 = vpop.f32.mrb[0].mxu0
        %v2974 = vpop.f32.mrb[0].mxu0
        %v2975 = vadd.f32 0.0, %v2974
        %v2976 = vpop.f32.mrb[0].mxu0
        %2977 = vmatprep.mubr.bf16.mxu0 0
        %2978 = vmatmul.mubr.bf16.gmra.mrb[0].mxu0 %v1505
        %v2979 = vpop.f32.mrb[0].mxu0
        %v2980 = vadd.f32 0.0, %v2979
        %v2981 = vpop.f32.mrb[0].mxu0
        %v2982 = vpop.f32.mrb[0].mxu0
        %v2983 = vadd.f32 0.0, %v2982
        %v2984 = vpop.f32.mrb[0].mxu0
        %2985 = vmatprep.mubr.bf16.mxu0 0
        %2986 = vmatmul.mubr.bf16.gmra.mrb[0].mxu0 %v1508
        %v2987 = vpop.f32.mrb[0].mxu0
        %v2988 = vadd.f32 0.0, %v2987
        %v2989 = vpop.f32.mrb[0].mxu0
        %v2990 = vpop.f32.mrb[0].mxu0
        %v2991 = vadd.f32 0.0, %v2990
        %v2992 = vpop.f32.mrb[0].mxu0
        %2993 = vmatprep.mubr.bf16.mxu0 0
        %2994 = vmatmul.mubr.bf16.gmra.mrb[0].mxu0 %v1511
        %v2995 = vpop.f32.mrb[0].mxu0
        %v2996 = vadd.f32 0.0, %v2995
        %v2997 = vpop.f32.mrb[0].mxu0
        %v2998 = vpop.f32.mrb[0].mxu0
        %v2999 = vadd.f32 0.0, %v2998
        %v3000 = vpop.f32.mrb[0].mxu0
        %3001 = vmatprep.mubr.bf16.mxu0 0
        %3002 = vmatmul.mubr.bf16.gmra.mrb[0].mxu0 %v1514
        %v3003 = vpop.f32.mrb[0].mxu0
        %v3004 = vadd.f32 0.0, %v3003
        %v3005 = vpop.f32.mrb[0].mxu0
        %v3006 = vpop.f32.mrb[0].mxu0
        %v3007 = vadd.f32 0.0, %v3006
        %v3008 = vpop.f32.mrb[0].mxu0
        %3009 = vmatprep.mubr.bf16.mxu0 0
        %3010 = vmatmul.mubr.bf16.gmra.mrb[0].mxu0 %v1517
        %v3011 = vpop.f32.mrb[0].mxu0
        %v3012 = vadd.f32 0.0, %v3011
        %v3013 = vpop.f32.mrb[0].mxu0
        %v3014 = vpop.f32.mrb[0].mxu0
        %v3015 = vadd.f32 0.0, %v3014
        %v3016 = vpop.f32.mrb[0].mxu0
        %3017 = vmatprep.mubr.bf16.mxu0 0
        %3018 = vmatmul.mubr.bf16.gmra.mrb[0].mxu0 %v1520
        %v3019 = vpop.f32.mrb[0].mxu0
        %v3020 = vadd.f32 0.0, %v3019
        %v3021 = vpop.f32.mrb[0].mxu0
        %v3022 = vpop.f32.mrb[0].mxu0
        %v3023 = vadd.f32 0.0, %v3022
        %v3024 = vpop.f32.mrb[0].mxu0
        %3025 = vmatprep.mubr.bf16.mxu0 0
        %3026 = vmatmul.mubr.bf16.gmra.mrb[0].mxu0 %v1523
        %v3027 = vpop.f32.mrb[0].mxu0
        %v3028 = vadd.f32 0.0, %v3027
        %v3029 = vpop.f32.mrb[0].mxu0
        %v3030 = vpop.f32.mrb[0].mxu0
        %v3031 = vadd.f32 0.0, %v3030
        %v3032 = vpop.f32.mrb[0].mxu0
        %3033 = vmatprep.mubr.bf16.mxu0 0
        %3034 = vmatmul.mubr.bf16.gmra.mrb[0].mxu0 %v2205
        %v3035 = vpop.f32.mrb[0].mxu0
        %v3036 = vadd.f32 0.0, %v3035
        %v3037 = vpop.f32.mrb[0].mxu0
        %v3038 = vpop.f32.mrb[0].mxu0
        %v3039 = vadd.f32 0.0, %v3038
        %v3040 = vpop.f32.mrb[0].mxu0
        %3041 = vmatprep.mubr.bf16.mxu0 0
        %3042 = vmatmul.mubr.bf16.gmra.mrb[0].mxu0 %v2887
        %v3043 = vpop.f32.mrb[0].mxu0
        %v3044 = vadd.f32 0.0, %v3043
        %v3045 = vpop.f32.mrb[0].mxu0
        %v3046 = vpop.f32.mrb[0].mxu0
        %v3047 = vadd.f32 0.0, %v3046
        %v3048 = vpop.f32.mrb[0].mxu0
        %3049 = vdwg.mxu0
        %v3050 = vadd.f32 %v2826, %v2924
        %v3051 = vadd.f32 %v2827, %v2927
        %v3052 = vadd.f32 %v2828, %v2932
        %v3053 = vadd.f32 %v2829, %v2935
        %v3054 = vadd.f32 %v2830, %v2940
        %v3055 = vadd.f32 %v2831, %v2943
        %v3056 = vadd.f32 %v2832, %v2948
        %v3057 = vadd.f32 %v2833, %v2951
        %v3058 = vadd.f32 %v2834, %v2956
        %v3059 = vadd.f32 %v2835, %v2959
        %v3060 = vadd.f32 %v2836, %v2964
        %v3061 = vadd.f32 %v2837, %v2967
        %v3062 = vadd.f32 %v2838, %v2972
        %v3063 = vadd.f32 %v2839, %v2975
        %v3064 = vadd.f32 %v2840, %v2980
        %v3065 = vadd.f32 %v2841, %v2983
        %v3066 = vadd.f32 %v2842, %v2988
        %v3067 = vadd.f32 %v2843, %v2991
        %v3068 = vadd.f32 %v2844, %v2996
        %v3069 = vadd.f32 %v2845, %v2999
        %v3070 = vadd.f32 %v2846, %v3004
        %v3071 = vadd.f32 %v2847, %v3007
        %v3072 = vadd.f32 %v2848, %v3012
        %v3073 = vadd.f32 %v2849, %v3015
        %v3074 = vadd.f32 %v2850, %v3020
        %v3075 = vadd.f32 %v2851, %v3023
        %v3076 = vadd.f32 %v2852, %v3028
        %v3077 = vadd.f32 %v2853, %v3031
        %v3078 = vadd.f32 %v2854, %v3036
        %v3079 = vadd.f32 %v2855, %v3039
        %v3080 = vadd.f32 %v2856, %v3044
        %v3081 = vadd.f32 %v2857, %v3047
        %v3082 = vmax.f32 %v3050, 0.0
        %v3083 = vmax.f32 %v3051, 0.0
        %v3084 = vmax.f32 %v3052, 0.0
        %v3085 = vmax.f32 %v3053, 0.0
        %v3086 = vmax.f32 %v3054, 0.0
        %v3087 = vmax.f32 %v3055, 0.0
        %v3088 = vmax.f32 %v3056, 0.0
        %v3089 = vmax.f32 %v3057, 0.0
        %v3090 = vmax.f32 %v3058, 0.0
        %v3091 = vmax.f32 %v3059, 0.0
        %v3092 = vmax.f32 %v3060, 0.0
        %v3093 = vmax.f32 %v3061, 0.0
        %v3094 = vmax.f32 %v3062, 0.0
        %v3095 = vmax.f32 %v3063, 0.0
        %v3096 = vmax.f32 %v3064, 0.0
        %v3097 = vmax.f32 %v3065, 0.0
        %v3098 = vmax.f32 %v3066, 0.0
        %v3099 = vmax.f32 %v3067, 0.0
        %v3100 = vmax.f32 %v3068, 0.0
        %v3101 = vmax.f32 %v3069, 0.0
        %v3102 = vmax.f32 %v3070, 0.0
        %v3103 = vmax.f32 %v3071, 0.0
        %v3104 = vmax.f32 %v3072, 0.0
        %v3105 = vmax.f32 %v3073, 0.0
        %v3106 = vmax.f32 %v3074, 0.0
        %v3107 = vmax.f32 %v3075, 0.0
        %v3108 = vmax.f32 %v3076, 0.0
        %v3109 = vmax.f32 %v3077, 0.0
        %v3110 = vmax.f32 %v3078, 0.0
        %v3111 = vmax.f32 %v3079, 0.0
        %v3112 = vmax.f32 %v3080, 0.0
        %v3113 = vmax.f32 %v3081, 0.0
        %vm3114 = vcmask 326656
        %3115 = vst.msk [vmem:[%s177] sm:$0xff] %vm3114, %v3082
        %3116 = vst.msk [vmem:[%s177 + $0x8] sm:$0xff] %vm3114, %v3083
        %3117 = vst.msk [vmem:[%s177 + $0x10] sm:$0xff] %vm3114, %v3084
        %3118 = vst.msk [vmem:[%s177 + $0x18] sm:$0xff] %vm3114, %v3085
        %3119 = vst.msk [vmem:[%s177 + $0x20] sm:$0xff] %vm3114, %v3086
        %3120 = vst.msk [vmem:[%s177 + $0x28] sm:$0xff] %vm3114, %v3087
        %3121 = vst.msk [vmem:[%s177 + $0x30] sm:$0xff] %vm3114, %v3088
        %3122 = vst.msk [vmem:[%s177 + $0x38] sm:$0xff] %vm3114, %v3089
        %3123 = vst.msk [vmem:[%s177 + $0x40] sm:$0xff] %vm3114, %v3090
        %3124 = vst.msk [vmem:[%s177 + $0x48] sm:$0xff] %vm3114, %v3091
        %3125 = vst.msk [vmem:[%s177 + $0x50] sm:$0xff] %vm3114, %v3092
        %3126 = vst.msk [vmem:[%s177 + $0x58] sm:$0xff] %vm3114, %v3093
        %3127 = vst.msk [vmem:[%s177 + $0x60] sm:$0xff] %vm3114, %v3094
        %3128 = vst.msk [vmem:[%s177 + $0x68] sm:$0xff] %vm3114, %v3095
        %3129 = vst.msk [vmem:[%s177 + $0x70] sm:$0xff] %vm3114, %v3096
        %3130 = vst.msk [vmem:[%s177 + $0x78] sm:$0xff] %vm3114, %v3097
        %3131 = vst.msk [vmem:[%s177 + $0x80] sm:$0xff] %vm3114, %v3098
        %3132 = vst.msk [vmem:[%s177 + $0x88] sm:$0xff] %vm3114, %v3099
        %3133 = vst.msk [vmem:[%s177 + $0x90] sm:$0xff] %vm3114, %v3100
        %3134 = vst.msk [vmem:[%s177 + $0x98] sm:$0xff] %vm3114, %v3101
        %3135 = vst.msk [vmem:[%s177 + $0xa0] sm:$0xff] %vm3114, %v3102
        %3136 = vst.msk [vmem:[%s177 + $0xa8] sm:$0xff] %vm3114, %v3103
        %3137 = vst.msk [vmem:[%s177 + $0xb0] sm:$0xff] %vm3114, %v3104
        %3138 = vst.msk [vmem:[%s177 + $0xb8] sm:$0xff] %vm3114, %v3105
        %3139 = vst.msk [vmem:[%s177 + $0xc0] sm:$0xff] %vm3114, %v3106
        %3140 = vst.msk [vmem:[%s177 + $0xc8] sm:$0xff] %vm3114, %v3107
        %3141 = vst.msk [vmem:[%s177 + $0xd0] sm:$0xff] %vm3114, %v3108
        %3142 = vst.msk [vmem:[%s177 + $0xd8] sm:$0xff] %vm3114, %v3109
        %3143 = vst.msk [vmem:[%s177 + $0xe0] sm:$0xff] %vm3114, %v3110
        %3144 = vst.msk [vmem:[%s177 + $0xe8] sm:$0xff] %vm3114, %v3111
        %3145 = vst.msk [vmem:[%s177 + $0xf0] sm:$0xff] %vm3114, %v3112
        %3146 = vst.msk [vmem:[%s177 + $0xf8] sm:$0xff] %vm3114, %v3113
        %s3147 = sand.u32 %s107, 1
        %s3148 = scalar_lea.sflag [#allocation3], %s3147
        %s3149 = sand.u32 %s107, 1
        %s3150 = smul.addr %s3149, 256
        %s3151 = scalar_lea.vmem [#allocation2], %s3150
        // Predicated region
        $region33: #{_lambda_.1} parent=31 // pred_check
          %p3152 = pneg %p117
        $region34: #{_lambda_.1} parent=31 // pred_check_branch
          %3154 = sbr.rel (%p3152) target = $region36
        $region35: #{_lambda_.1} parent=31 // pred_region
          %s3155 = smul.u32 16, %s22
          %s3157 = ssub.s32 4096, 4096
          %3158 = vsyncadd %s3148, %s3157
          %s3159 = smul.addr %s3155, 2
          %s3160 = smul.addr %s21, 32
          %s3161 = sadd.s32 %s3159, %s3160
          %s3162 = smul.addr %s3161, 128
          %s3163 = scalar_lea.hbm %s3, %s3162
          %s3164 = sshll.u32 %s3151, 4
          %s3165 = int_to_ptr.vmem [resolvable:$true] %s3164
          %3170 = dma.vmem_to_hbm [thread:$0]  %s3165, 4096, %s3163, %s3148, 128, 128, 8
        $region36: #{_lambda_.1} parent=31 // pred_fallthru
          _
      $region32: #{_lambda_.1} parent=5 // pred_fallthru
        _
      %p3171 = scmp.le.s32.totalorder 2, %s12
      // Predicated region
      $region37: #{_lambda_.1} parent=5 // pred_check
        %p3172 = pneg %p3171
      $region38: #{_lambda_.1} parent=5 // pred_check_branch
        %3174 = sbr.rel (%p3172) target = $region40
      $region39: #{_lambda_.1} parent=5 // pred_region
        %s3175 = ssub.s32 %s12, 2
        // Predicated region
        $region41: #{_lambda_.1} parent=39 // pred_check
          %p3176 = pneg %p123
        $region42: #{_lambda_.1} parent=39 // pred_check_branch
          %3178 = sbr.rel (%p3176) target = $region44
        $region43: #{_lambda_.1} parent=39 // pred_region
          %s3179 = sand.u32 %s108, 1
          %s3180 = scalar_lea.sflag [#allocation3], %s3179
          %s3181 = sand.u32 %s108, 1
          %s3182 = smul.addr %s3181, 256
          %s3183 = scalar_lea.vmem [#allocation2], %s3182
          %3184 = dma.done %s3180, 4096
        $region44: #{_lambda_.1} parent=39 // pred_fallthru
          _
      $region40: #{_lambda_.1} parent=5 // pred_fallthru
        _
    $region6: #{_lambda_.1} parent=1 // loop_footer
      %s16 = sadd.s32 1, %s12
    $region7: #{_lambda_.1} parent=1 // loop_footer_branch
      %11 = sbr.rel target = $region3
    $region8: #{_lambda_.1} parent=1 // loop_exit
      _
    %3185 = vsyncpa [#allocation3], 1
    %s3186 = scalar_lea.sflag [#allocation3], 1
    %3187 = vsyncpa %s3186, 1

</llo_original>
